<compile_context>
chip_gen: v7x
topology: tpu7x:2x2x1
jax: 0.10.0
libtpu: 0.0.40
codegen_flags: <defaults>
</compile_context>

<pallas_src>
import numpy as np
import jax
import jax.numpy as jnp
from jax import lax
from jax.experimental import pallas as pl
from jax.experimental.pallas import tpu as pltpu

# geometry
H1 = W1 = 16
H2 = W2 = 8
HW1 = H1 * W1            # 256
HW2 = H2 * W2            # 64
BASE = 128               # lane offset of the image interior inside padded buffers
PAD_W = 512              # padded buffer lane width (>= BASE + HW1 + W1 + 1 = 401)


# ----------------------------------------------------------------------------
# In-kernel layer helpers (operate on VMEM refs)
# ----------------------------------------------------------------------------
def _conv3x3(src, dst, w_ref, b_ref, patch, ww, *, Cin, Cout, H, W, act):
    """3x3 stride-1 'same' conv as one im2col matmul.

    src   : (16, PAD_W) padded flat activation buffer; rows [0,Cin), interior at
            lanes [BASE, BASE+H*W); everything else is zero.
    dst   : (16, PAD_W) destination buffer (zeroed + interior written) or None.
    w_ref : (Cout, 9*Cin) im2col weights (tap-major, channel-minor columns).
    b_ref : (Cout, 1) bias.
    patch : (144, 256) VMEM scratch for the patch matrix.
    ww    : (1, H*W) int32 lane-position modulo W (column coordinate).
    """
    HW = H * W
    t = 0
    for dh in (-1, 0, 1):
        for dw in (-1, 0, 1):
            start = BASE + dh * W + dw
            col = src[pl.ds(0, Cin), pl.ds(start, HW)]
            # Vertical out-of-range taps read the zero pad; only the horizontal
            # row-wrap needs masking.
            if dw == -1:
                col = jnp.where(ww >= 1, col, 0.0)
            elif dw == 1:
                col = jnp.where(ww <= W - 2, col, 0.0)
            patch[pl.ds(t * Cin, Cin), pl.ds(0, HW)] = col
            t += 1

    acc = jnp.dot(w_ref[...], patch[pl.ds(0, 9 * Cin), pl.ds(0, HW)],
                  preferred_element_type=jnp.float32)            # (Cout, HW)
    acc = acc + b_ref[...]
    if act == "relu":
        acc = jnp.maximum(acc, 0.0)
    elif act == "sigmoid":
        acc = 1.0 / (1.0 + jnp.exp(-acc))                        # exp on EUP

    if dst is None:
        return acc
    dst[...] = jnp.zeros(dst.shape, dst.dtype)
    dst[pl.ds(0, Cout), pl.ds(BASE, HW)] = acc                   # aligned interior store
    return None


def _down2x2(src, dst, w_ref, b_ref, s_ref, patch):
    """Conv2d(16,16,k=2,s=2): 16x16 -> 8x8 via gather matmuls + one weight matmul."""
    x = src[pl.ds(0, 16), pl.ds(BASE, HW1)]                      # (16, 256)
    for t in range(4):
        patch[pl.ds(t * 16, 16), pl.ds(0, HW2)] = jnp.dot(
            x, s_ref[t], preferred_element_type=jnp.float32)     # (16, 64)
    acc = jnp.dot(w_ref[...], patch[pl.ds(0, 64), pl.ds(0, HW2)],
                  preferred_element_type=jnp.float32)            # (16, 64)
    acc = jnp.maximum(acc + b_ref[...], 0.0)
    dst[...] = jnp.zeros(dst.shape, dst.dtype)
    dst[pl.ds(0, 16), pl.ds(BASE, HW2)] = acc


def _up2x2(src, dst, w_ref, b_ref, u_ref, patch):
    """ConvTranspose2d(16,16,k=2,s=2): 8x8 -> 16x16 via scatter matmuls + one matmul."""
    x = src[pl.ds(0, 16), pl.ds(BASE, HW2)]                      # (16, 64)
    for t in range(4):
        patch[pl.ds(t * 16, 16), pl.ds(0, HW1)] = jnp.dot(
            x, u_ref[t], preferred_element_type=jnp.float32)     # (16, 256)
    acc = jnp.dot(w_ref[...], patch[pl.ds(0, 64), pl.ds(0, HW1)],
                  preferred_element_type=jnp.float32)            # (16, 256)
    acc = jnp.maximum(acc + b_ref[...], 0.0)
    dst[...] = jnp.zeros(dst.shape, dst.dtype)
    dst[pl.ds(0, 16), pl.ds(BASE, HW1)] = acc


# ----------------------------------------------------------------------------
# Fused autoencoder kernel (one batch element per grid step)
# ----------------------------------------------------------------------------
def _ae_kernel(x_ref,
               w1, w2, w3, w4, w5, w6, w7, w8,
               b1, b2, b3, b4, b5, b6, b7, b8,
               s_ref, u_ref,
               o_ref,
               buf_a, buf_b, patch):
    # hoisted lane-coordinate iotas (one per geometry)
    ww16 = lax.broadcasted_iota(jnp.int32, (1, HW1), 1) % W1
    ww8 = lax.broadcasted_iota(jnp.int32, (1, HW2), 1) % W2

    # stage the (1, 256) input image into padded flat buffer A
    buf_a[...] = jnp.zeros(buf_a.shape, buf_a.dtype)
    buf_a[pl.ds(0, 1), pl.ds(BASE, HW1)] = x_ref[0]

    # ---- encoder ----
    _conv3x3(buf_a, buf_b, w1, b1, patch, ww16, Cin=1, Cout=16, H=H1, W=W1, act="relu")
    _conv3x3(buf_b, buf_a, w2, b2, patch, ww16, Cin=16, Cout=16, H=H1, W=W1, act="relu")
    _down2x2(buf_a, buf_b, w3, b3, s_ref, patch)                                 # + ReLU
    _conv3x3(buf_b, buf_a, w4, b4, patch, ww8, Cin=16, Cout=4, H=H2, W=W2, act="none")

    # ---- decoder ----
    _conv3x3(buf_a, buf_b, w5, b5, patch, ww8, Cin=4, Cout=16, H=H2, W=W2, act="relu")
    _up2x2(buf_b, buf_a, w6, b6, u_ref, patch)                                   # + ReLU
    _conv3x3(buf_a, buf_b, w7, b7, patch, ww16, Cin=16, Cout=16, H=H1, W=W1, act="relu")
    out = _conv3x3(buf_b, None, w8, b8, patch, ww16,
                   Cin=16, Cout=1, H=H1, W=W1, act="sigmoid")                    # (1, 256)

    o_ref[0] = out                                                               # lane-dense store


# ----------------------------------------------------------------------------
# Host-side weight / constant preparation
# ----------------------------------------------------------------------------
def _gather_scatter_mats():
    """0/1 matrices mapping 16x16 flat lanes <-> 8x8 flat lanes, one per 2x2 tap."""
    S = np.zeros((4, HW1, HW2), np.float32)        # gather: (256 -> 64)
    for kh in range(2):
        for kw in range(2):
            t = kh * 2 + kw
            for j in range(HW2):
                oh, ow = j // W2, j % W2
                p = (2 * oh + kh) * W1 + (2 * ow + kw)
                S[t, p, j] = 1.0
    U = np.ascontiguousarray(np.transpose(S, (0, 2, 1)))          # scatter: (64 -> 256)
    return jnp.asarray(S), jnp.asarray(U)


def _prep_weights(params):
    def im2col_w(w):   # PyTorch (Cout, Cin, 3, 3) -> (Cout, 9*Cin), tap-major, ch-minor
        co, ci = w.shape[0], w.shape[1]
        return jnp.transpose(w, (0, 2, 3, 1)).reshape(co, 9 * ci)

    w1 = im2col_w(params["e1_w"])                                       # (16, 9)
    w2 = im2col_w(params["e2_w"])                                       # (16, 144)
    w3 = jnp.transpose(params["e3_w"], (0, 2, 3, 1)).reshape(16, 64)    # k2 s2 conv
    w4 = im2col_w(params["e4_w"])                                       # (4, 144)
    w5 = im2col_w(params["d1_w"])                                       # (16, 36)
    # ConvTranspose2d weight (Cin, Cout, kh, kw) -> (Cout, tap*Cin + ic)
    w6 = jnp.transpose(params["d2_w"], (1, 2, 3, 0)).reshape(16, 64)
    w7 = im2col_w(params["d3_w"])                                       # (16, 144)
    w8 = im2col_w(params["d4_w"])                                       # (1, 144)
    ws = [w.astype(jnp.float32) for w in (w1, w2, w3, w4, w5, w6, w7, w8)]
    bs = [params[k].reshape(-1, 1).astype(jnp.float32)
          for k in ("e1_b", "e2_b", "e3_b", "e4_b", "d1_b", "d2_b", "d3_b", "d4_b")]
    return ws, bs


def _full_spec(arr):
    nd = arr.ndim
    return pl.BlockSpec(arr.shape, lambda b, _nd=nd: (0,) * _nd)


def forward(x_nchw, params):
    """x_nchw: (B, 1, 16, 16) -> (B, 1, 16, 16), matching Small_Model_Fully_Conv."""
    B = x_nchw.shape[0]
    x_flat = x_nchw.astype(jnp.float32).reshape(B, 1, HW1)
    ws, bs = _prep_weights(params)
    S, U = _gather_scatter_mats()
    consts = [*ws, *bs, S, U]

    in_specs = [pl.BlockSpec((1, 1, HW1), lambda b: (b, 0, 0))]
    in_specs += [_full_spec(a) for a in consts]

    out_flat = pl.pallas_call(
        _ae_kernel,
        out_shape=jax.ShapeDtypeStruct((B, 1, HW1), jnp.float32),
        grid=(B,),
        in_specs=in_specs,
        out_specs=pl.BlockSpec((1, 1, HW1), lambda b: (b, 0, 0)),
        scratch_shapes=[
            pltpu.VMEM((16, PAD_W), jnp.float32),    # ping activation buffer
            pltpu.VMEM((16, PAD_W), jnp.float32),    # pong activation buffer
            pltpu.VMEM((144, HW1), jnp.float32),     # im2col patch matrix
        ],
        compiler_params=pltpu.CompilerParams(
            dimension_semantics=("parallel",)),
    )(x_flat, *consts)
    return out_flat.reshape(B, 1, H1, W1)


# ----------------------------------------------------------------------------
# Deterministic PyTorch-shaped parameters
# ----------------------------------------------------------------------------
_PT_SHAPES = {
    "e1_w": (16, 1, 3, 3),  "e1_b": (16,),
    "e2_w": (16, 16, 3, 3), "e2_b": (16,),
    "e3_w": (16, 16, 2, 2), "e3_b": (16,),   # Conv2d k=2 s=2
    "e4_w": (4, 16, 3, 3),  "e4_b": (4,),
    "d1_w": (16, 4, 3, 3),  "d1_b": (16,),
    "d2_w": (16, 16, 2, 2), "d2_b": (16,),   # ConvTranspose2d: (Cin, Cout, kh, kw)
    "d3_w": (16, 16, 3, 3), "d3_b": (16,),
    "d4_w": (1, 16, 3, 3),  "d4_b": (1,),
}


def _init_params(key):
    params = {}
    names = sorted(_PT_SHAPES)
    keys = jax.random.split(key, len(names))
    for k, name in zip(keys, names):
        shape = _PT_SHAPES[name]
        fan = float(np.prod(shape[1:])) if len(shape) > 1 else float(shape[0])
        bound = 1.0 / np.sqrt(fan)
        params[name] = jax.random.uniform(k, shape, jnp.float32, -bound, bound)
    return params


# ----------------------------------------------------------------------------
# Pure-JAX reference (high-precision) for correctness check
# ----------------------------------------------------------------------------
def _ref_forward(x, params):
    hp = lax.Precision.HIGHEST

    def conv3(x, w, b):
        y = lax.conv_general_dilated(
            x, w, window_strides=(1, 1), padding=((1, 1), (1, 1)),
            dimension_numbers=("NCHW", "OIHW", "NCHW"), precision=hp)
        return y + b.reshape(1, -1, 1, 1)

    relu = lambda v: jnp.maximum(v, 0.0)
    B = x.shape[0]

    x = relu(conv3(x, params["e1_w"], params["e1_b"]))
    x = relu(conv3(x, params["e2_w"], params["e2_b"]))
    y = lax.conv_general_dilated(
        x, params["e3_w"], window_strides=(2, 2), padding="VALID",
        dimension_numbers=("NCHW", "OIHW", "NCHW"), precision=hp)
    x = relu(y + params["e3_b"].reshape(1, -1, 1, 1))
    x = conv3(x, params["e4_w"], params["e4_b"])
    x = relu(conv3(x, params["d1_w"], params["d1_b"]))
    # ConvTranspose2d(16, 16, k=2, s=2, p=0)
    y = jnp.einsum("bihw,iokl->bohkwl", x, params["d2_w"], precision=hp)
    x = relu(y.reshape(B, 16, 16, 16) + params["d2_b"].reshape(1, -1, 1, 1))
    x = relu(conv3(x, params["d3_w"], params["d3_b"]))
    x = conv3(x, params["d4_w"], params["d4_b"])
    return 1.0 / (1.0 + jnp.exp(-x))


if __name__ == "__main__":
    key = jax.random.PRNGKey(0)
    k_x, k_p = jax.random.split(key)

    x = jax.random.uniform(k_x, (2, 1, 16, 16), dtype=jnp.float32)
    params = _init_params(k_p)

    out = jax.block_until_ready(jax.jit(forward)(x, params))
    ref = jax.block_until_ready(_ref_forward(x, params))

    assert out.shape == (2, 1, 16, 16)
    # Tolerance covers possible reduced-precision (bf16-pass) MXU f32 matmuls inside the
    # kernel vs the HIGHEST-precision XLA reference; structural bugs would be >> 1e-2.
    np.testing.assert_allclose(np.asarray(out), np.asarray(ref), rtol=1e-2, atol=1e-2)
    print("KERNEL_OK")
</pallas_src>

<mosaic_0001>
module attributes {stable_mosaic.version = 11 : i64} {
  func.func @_ae_kernel(%arg0: i32, %arg1: memref<1x1x256xf32, #tpu.memory_space<vmem>>, %arg2: memref<16x9xf32, #tpu.memory_space<vmem>>, %arg3: memref<16x144xf32, #tpu.memory_space<vmem>>, %arg4: memref<16x64xf32, #tpu.memory_space<vmem>>, %arg5: memref<4x144xf32, #tpu.memory_space<vmem>>, %arg6: memref<16x36xf32, #tpu.memory_space<vmem>>, %arg7: memref<16x64xf32, #tpu.memory_space<vmem>>, %arg8: memref<16x144xf32, #tpu.memory_space<vmem>>, %arg9: memref<1x144xf32, #tpu.memory_space<vmem>>, %arg10: memref<16x1xf32, #tpu.memory_space<vmem>>, %arg11: memref<16x1xf32, #tpu.memory_space<vmem>>, %arg12: memref<16x1xf32, #tpu.memory_space<vmem>>, %arg13: memref<4x1xf32, #tpu.memory_space<vmem>>, %arg14: memref<16x1xf32, #tpu.memory_space<vmem>>, %arg15: memref<16x1xf32, #tpu.memory_space<vmem>>, %arg16: memref<16x1xf32, #tpu.memory_space<vmem>>, %arg17: memref<1x1xf32, #tpu.memory_space<vmem>>, %arg18: memref<4x256x64xf32, #tpu.memory_space<vmem>>, %arg19: memref<4x64x256xf32, #tpu.memory_space<vmem>>, %arg20: memref<1x1x256xf32, #tpu.memory_space<vmem>>, %arg21: memref<16x512xf32, #tpu.memory_space<vmem>>, %arg22: memref<16x512xf32, #tpu.memory_space<vmem>>, %arg23: memref<144x256xf32, #tpu.memory_space<vmem>>) attributes {dimension_semantics = [#tpu.dimension_semantics<parallel>], iteration_bounds = array<i64: 2>, scalar_prefetch = 0 : i64, scratch_operands = 3 : i64, tpu.core_type = #tpu.core_type<tc>, window_params = [{transform_indices = @transform_0, window_bounds = array<i64: 1, 1, 256>}, {pipeline_mode = #tpu.pipeline_mode<synchronous>, transform_indices = @transform_1, window_bounds = array<i64: 16, 9>}, {pipeline_mode = #tpu.pipeline_mode<synchronous>, transform_indices = @transform_2, window_bounds = array<i64: 16, 144>}, {pipeline_mode = #tpu.pipeline_mode<synchronous>, transform_indices = @transform_3, window_bounds = array<i64: 16, 64>}, {pipeline_mode = #tpu.pipeline_mode<synchronous>, transform_indices = @transform_4, window_bounds = array<i64: 4, 144>}, {pipeline_mode = #tpu.pipeline_mode<synchronous>, transform_indices = @transform_5, window_bounds = array<i64: 16, 36>}, {pipeline_mode = #tpu.pipeline_mode<synchronous>, transform_indices = @transform_6, window_bounds = array<i64: 16, 64>}, {pipeline_mode = #tpu.pipeline_mode<synchronous>, transform_indices = @transform_7, window_bounds = array<i64: 16, 144>}, {pipeline_mode = #tpu.pipeline_mode<synchronous>, transform_indices = @transform_8, window_bounds = array<i64: 1, 144>}, {pipeline_mode = #tpu.pipeline_mode<synchronous>, transform_indices = @transform_9, window_bounds = array<i64: 16, 1>}, {pipeline_mode = #tpu.pipeline_mode<synchronous>, transform_indices = @transform_10, window_bounds = array<i64: 16, 1>}, {pipeline_mode = #tpu.pipeline_mode<synchronous>, transform_indices = @transform_11, window_bounds = array<i64: 16, 1>}, {pipeline_mode = #tpu.pipeline_mode<synchronous>, transform_indices = @transform_12, window_bounds = array<i64: 4, 1>}, {pipeline_mode = #tpu.pipeline_mode<synchronous>, transform_indices = @transform_13, window_bounds = array<i64: 16, 1>}, {pipeline_mode = #tpu.pipeline_mode<synchronous>, transform_indices = @transform_14, window_bounds = array<i64: 16, 1>}, {pipeline_mode = #tpu.pipeline_mode<synchronous>, transform_indices = @transform_15, window_bounds = array<i64: 16, 1>}, {pipeline_mode = #tpu.pipeline_mode<synchronous>, transform_indices = @transform_16, window_bounds = array<i64: 1, 1>}, {pipeline_mode = #tpu.pipeline_mode<synchronous>, transform_indices = @transform_17, window_bounds = array<i64: 4, 256, 64>}, {pipeline_mode = #tpu.pipeline_mode<synchronous>, transform_indices = @transform_18, window_bounds = array<i64: 4, 64, 256>}, {transform_indices = @transform_19, window_bounds = array<i64: 1, 1, 256>}]} {
    %0 = tpu.iota {dimensions = array<i32: 1>} : vector<1x256xi32>
    %c16_i32 = arith.constant 16 : i32
    %c0_i32 = arith.constant 0 : i32
    %1 = arith.cmpi eq, %c16_i32, %c0_i32 : i32
    %c1_i32 = arith.constant 1 : i32
    %2 = arith.select %1, %c1_i32, %c16_i32 : i32
    %3 = vector.broadcast %2 : i32 to vector<1x256xi32>
    %4 = arith.remsi %0, %3 : vector<1x256xi32>
    %c0_i32_0 = arith.constant 0 : i32
    %5 = vector.broadcast %c0_i32_0 : i32 to vector<1x256xi32>
    %6 = arith.cmpi ne, %4, %5 : vector<1x256xi32>
    %c0_i32_1 = arith.constant 0 : i32
    %7 = vector.broadcast %c0_i32_1 : i32 to vector<1x256xi32>
    %8 = arith.cmpi slt, %4, %7 : vector<1x256xi32>
    %c0_i32_2 = arith.constant 0 : i32
    %9 = arith.cmpi slt, %2, %c0_i32_2 : i32
    %10 = vector.broadcast %9 : i1 to vector<1x256xi1>
    %11 = vector.broadcast %10 : vector<1x256xi1> to vector<1x256xi1>
    %12 = arith.xori %8, %11 : vector<1x256xi1>
    %13 = arith.andi %12, %6 : vector<1x256xi1>
    %14 = vector.broadcast %2 : i32 to vector<1x256xi32>
    %15 = arith.addi %4, %14 : vector<1x256xi32>
    %16 = arith.select %13, %15, %4 : vector<1x256xi1>, vector<1x256xi32>
    %17 = tpu.iota {dimensions = array<i32: 1>} : vector<1x64xi32>
    %c8_i32 = arith.constant 8 : i32
    %c0_i32_3 = arith.constant 0 : i32
    %18 = arith.cmpi eq, %c8_i32, %c0_i32_3 : i32
    %c1_i32_4 = arith.constant 1 : i32
    %19 = arith.select %18, %c1_i32_4, %c8_i32 : i32
    %20 = vector.broadcast %19 : i32 to vector<1x64xi32>
    %21 = arith.remsi %17, %20 : vector<1x64xi32>
    %c0_i32_5 = arith.constant 0 : i32
    %22 = vector.broadcast %c0_i32_5 : i32 to vector<1x64xi32>
    %23 = arith.cmpi ne, %21, %22 : vector<1x64xi32>
    %c0_i32_6 = arith.constant 0 : i32
    %24 = vector.broadcast %c0_i32_6 : i32 to vector<1x64xi32>
    %25 = arith.cmpi slt, %21, %24 : vector<1x64xi32>
    %c0_i32_7 = arith.constant 0 : i32
    %26 = arith.cmpi slt, %19, %c0_i32_7 : i32
    %27 = vector.broadcast %26 : i1 to vector<1x64xi1>
    %28 = vector.broadcast %27 : vector<1x64xi1> to vector<1x64xi1>
    %29 = arith.xori %25, %28 : vector<1x64xi1>
    %30 = arith.andi %29, %23 : vector<1x64xi1>
    %31 = vector.broadcast %19 : i32 to vector<1x64xi32>
    %32 = arith.addi %21, %31 : vector<1x64xi32>
    %33 = arith.select %30, %32, %21 : vector<1x64xi1>, vector<1x64xi32>
    %cst = arith.constant 0.000000e+00 : f32
    %34 = vector.broadcast %cst : f32 to vector<16x512xf32>
    %c0 = arith.constant 0 : index
    %c0_8 = arith.constant 0 : index
    %35 = vector.load %arg21[%c0, %c0_8] : memref<16x512xf32, #tpu.memory_space<vmem>>, vector<16x512xf32>
    tpu.vector_store %arg21[%c0, %c0_8], %34 {strides = array<i32>} : memref<16x512xf32, #tpu.memory_space<vmem>>, vector<16x512xf32>,
    %c0_9 = arith.constant 0 : index
    %c0_10 = arith.constant 0 : index
    %c0_11 = arith.constant 0 : index
    %36 = vector.load %arg1[%c0_9, %c0_10, %c0_11] : memref<1x1x256xf32, #tpu.memory_space<vmem>>, vector<1x1x256xf32>
    %37 = vector.shape_cast %36 : vector<1x1x256xf32> to vector<1x256xf32>
    %c0_12 = arith.constant 0 : index
    %c128 = arith.constant 128 : index
    %38 = vector.load %arg21[%c0_12, %c128] : memref<16x512xf32, #tpu.memory_space<vmem>>, vector<1x256xf32>
    tpu.vector_store %arg21[%c0_12, %c128], %37 {strides = array<i32>} : memref<16x512xf32, #tpu.memory_space<vmem>>, vector<1x256xf32>,
    %c0_13 = arith.constant 0 : index
    %c111 = arith.constant 111 : index
    %39 = vector.load %arg21[%c0_13, %c111] : memref<16x512xf32, #tpu.memory_space<vmem>>, vector<1x256xf32>
    %c1_i32_14 = arith.constant 1 : i32
    %40 = vector.broadcast %c1_i32_14 : i32 to vector<1x256xi32>
    %41 = arith.cmpi sge, %16, %40 : vector<1x256xi32>
    %cst_15 = arith.constant 0.000000e+00 : f32
    %42 = vector.broadcast %cst_15 : f32 to vector<1x256xf32>
    %43 = arith.select %41, %39, %42 : vector<1x256xi1>, vector<1x256xf32>
    %c0_16 = arith.constant 0 : index
    %c0_17 = arith.constant 0 : index
    %44 = vector.load %arg23[%c0_16, %c0_17] : memref<144x256xf32, #tpu.memory_space<vmem>>, vector<1x256xf32>
    tpu.vector_store %arg23[%c0_16, %c0_17], %43 {strides = array<i32>} : memref<144x256xf32, #tpu.memory_space<vmem>>, vector<1x256xf32>,
    %c0_18 = arith.constant 0 : index
    %c112 = arith.constant 112 : index
    %45 = vector.load %arg21[%c0_18, %c112] : memref<16x512xf32, #tpu.memory_space<vmem>>, vector<1x256xf32>
    %c1 = arith.constant 1 : index
    %c0_19 = arith.constant 0 : index
    %46 = vector.load %arg23[%c1, %c0_19] : memref<144x256xf32, #tpu.memory_space<vmem>>, vector<1x256xf32>
    tpu.vector_store %arg23[%c1, %c0_19], %45 {strides = array<i32>} : memref<144x256xf32, #tpu.memory_space<vmem>>, vector<1x256xf32>,
    %c0_20 = arith.constant 0 : index
    %c113 = arith.constant 113 : index
    %47 = vector.load %arg21[%c0_20, %c113] : memref<16x512xf32, #tpu.memory_space<vmem>>, vector<1x256xf32>
    %c14_i32 = arith.constant 14 : i32
    %48 = vector.broadcast %c14_i32 : i32 to vector<1x256xi32>
    %49 = arith.cmpi sle, %16, %48 : vector<1x256xi32>
    %cst_21 = arith.constant 0.000000e+00 : f32
    %50 = vector.broadcast %cst_21 : f32 to vector<1x256xf32>
    %51 = arith.select %49, %47, %50 : vector<1x256xi1>, vector<1x256xf32>
    %c2 = arith.constant 2 : index
    %c0_22 = arith.constant 0 : index
    %52 = vector.load %arg23[%c2, %c0_22] : memref<144x256xf32, #tpu.memory_space<vmem>>, vector<1x256xf32>
    tpu.vector_store %arg23[%c2, %c0_22], %51 {strides = array<i32>} : memref<144x256xf32, #tpu.memory_space<vmem>>, vector<1x256xf32>,
    %c0_23 = arith.constant 0 : index
    %c127 = arith.constant 127 : index
    %53 = vector.load %arg21[%c0_23, %c127] : memref<16x512xf32, #tpu.memory_space<vmem>>, vector<1x256xf32>
    %c1_i32_24 = arith.constant 1 : i32
    %54 = vector.broadcast %c1_i32_24 : i32 to vector<1x256xi32>
    %55 = arith.cmpi sge, %16, %54 : vector<1x256xi32>
    %cst_25 = arith.constant 0.000000e+00 : f32
    %56 = vector.broadcast %cst_25 : f32 to vector<1x256xf32>
    %57 = arith.select %55, %53, %56 : vector<1x256xi1>, vector<1x256xf32>
    %c3 = arith.constant 3 : index
    %c0_26 = arith.constant 0 : index
    %58 = vector.load %arg23[%c3, %c0_26] : memref<144x256xf32, #tpu.memory_space<vmem>>, vector<1x256xf32>
    tpu.vector_store %arg23[%c3, %c0_26], %57 {strides = array<i32>} : memref<144x256xf32, #tpu.memory_space<vmem>>, vector<1x256xf32>,
    %c0_27 = arith.constant 0 : index
    %c128_28 = arith.constant 128 : index
    %59 = vector.load %arg21[%c0_27, %c128_28] : memref<16x512xf32, #tpu.memory_space<vmem>>, vector<1x256xf32>
    %c4 = arith.constant 4 : index
    %c0_29 = arith.constant 0 : index
    %60 = vector.load %arg23[%c4, %c0_29] : memref<144x256xf32, #tpu.memory_space<vmem>>, vector<1x256xf32>
    tpu.vector_store %arg23[%c4, %c0_29], %59 {strides = array<i32>} : memref<144x256xf32, #tpu.memory_space<vmem>>, vector<1x256xf32>,
    %c0_30 = arith.constant 0 : index
    %c129 = arith.constant 129 : index
    %61 = vector.load %arg21[%c0_30, %c129] : memref<16x512xf32, #tpu.memory_space<vmem>>, vector<1x256xf32>
    %c14_i32_31 = arith.constant 14 : i32
    %62 = vector.broadcast %c14_i32_31 : i32 to vector<1x256xi32>
    %63 = arith.cmpi sle, %16, %62 : vector<1x256xi32>
    %cst_32 = arith.constant 0.000000e+00 : f32
    %64 = vector.broadcast %cst_32 : f32 to vector<1x256xf32>
    %65 = arith.select %63, %61, %64 : vector<1x256xi1>, vector<1x256xf32>
    %c5 = arith.constant 5 : index
    %c0_33 = arith.constant 0 : index
    %66 = vector.load %arg23[%c5, %c0_33] : memref<144x256xf32, #tpu.memory_space<vmem>>, vector<1x256xf32>
    tpu.vector_store %arg23[%c5, %c0_33], %65 {strides = array<i32>} : memref<144x256xf32, #tpu.memory_space<vmem>>, vector<1x256xf32>,
    %c0_34 = arith.constant 0 : index
    %c143 = arith.constant 143 : index
    %67 = vector.load %arg21[%c0_34, %c143] : memref<16x512xf32, #tpu.memory_space<vmem>>, vector<1x256xf32>
    %c1_i32_35 = arith.constant 1 : i32
    %68 = vector.broadcast %c1_i32_35 : i32 to vector<1x256xi32>
    %69 = arith.cmpi sge, %16, %68 : vector<1x256xi32>
    %cst_36 = arith.constant 0.000000e+00 : f32
    %70 = vector.broadcast %cst_36 : f32 to vector<1x256xf32>
    %71 = arith.select %69, %67, %70 : vector<1x256xi1>, vector<1x256xf32>
    %c6 = arith.constant 6 : index
    %c0_37 = arith.constant 0 : index
    %72 = vector.load %arg23[%c6, %c0_37] : memref<144x256xf32, #tpu.memory_space<vmem>>, vector<1x256xf32>
    tpu.vector_store %arg23[%c6, %c0_37], %71 {strides = array<i32>} : memref<144x256xf32, #tpu.memory_space<vmem>>, vector<1x256xf32>,
    %c0_38 = arith.constant 0 : index
    %c144 = arith.constant 144 : index
    %73 = vector.load %arg21[%c0_38, %c144] : memref<16x512xf32, #tpu.memory_space<vmem>>, vector<1x256xf32>
    %c7 = arith.constant 7 : index
    %c0_39 = arith.constant 0 : index
    %74 = vector.load %arg23[%c7, %c0_39] : memref<144x256xf32, #tpu.memory_space<vmem>>, vector<1x256xf32>
    tpu.vector_store %arg23[%c7, %c0_39], %73 {strides = array<i32>} : memref<144x256xf32, #tpu.memory_space<vmem>>, vector<1x256xf32>,
    %c0_40 = arith.constant 0 : index
    %c145 = arith.constant 145 : index
    %75 = vector.load %arg21[%c0_40, %c145] : memref<16x512xf32, #tpu.memory_space<vmem>>, vector<1x256xf32>
    %c14_i32_41 = arith.constant 14 : i32
    %76 = vector.broadcast %c14_i32_41 : i32 to vector<1x256xi32>
    %77 = arith.cmpi sle, %16, %76 : vector<1x256xi32>
    %cst_42 = arith.constant 0.000000e+00 : f32
    %78 = vector.broadcast %cst_42 : f32 to vector<1x256xf32>
    %79 = arith.select %77, %75, %78 : vector<1x256xi1>, vector<1x256xf32>
    %c8 = arith.constant 8 : index
    %c0_43 = arith.constant 0 : index
    %80 = vector.load %arg23[%c8, %c0_43] : memref<144x256xf32, #tpu.memory_space<vmem>>, vector<1x256xf32>
    tpu.vector_store %arg23[%c8, %c0_43], %79 {strides = array<i32>} : memref<144x256xf32, #tpu.memory_space<vmem>>, vector<1x256xf32>,
    %c0_44 = arith.constant 0 : index
    %c0_45 = arith.constant 0 : index
    %81 = vector.load %arg2[%c0_44, %c0_45] : memref<16x9xf32, #tpu.memory_space<vmem>>, vector<16x9xf32>
    %c0_46 = arith.constant 0 : index
    %c0_47 = arith.constant 0 : index
    %82 = vector.load %arg23[%c0_46, %c0_47] : memref<144x256xf32, #tpu.memory_space<vmem>>, vector<9x256xf32>
    %cst_48 = arith.constant dense<0.000000e+00> : vector<16x256xf32>
    %83 = tpu.matmul %81, %82, %cst_48 {dimension_numbers = #tpu.dot_dimension_numbers<[1], [0], [0], [1], [0, 0, 1, 1], [], []>} : vector<16x9xf32>, vector<9x256xf32>, vector<16x256xf32> -> vector<16x256xf32>
    %c0_49 = arith.constant 0 : index
    %c0_50 = arith.constant 0 : index
    %84 = vector.load %arg10[%c0_49, %c0_50] : memref<16x1xf32, #tpu.memory_space<vmem>>, vector<16x1xf32>
    %85 = vector.broadcast %84 : vector<16x1xf32> to vector<16x256xf32>
    %86 = arith.addf %83, %85 : vector<16x256xf32>
    %cst_51 = arith.constant 0.000000e+00 : f32
    %87 = vector.broadcast %cst_51 : f32 to vector<16x256xf32>
    %88 = arith.maximumf %86, %87 : vector<16x256xf32>
    %cst_52 = arith.constant 0.000000e+00 : f32
    %89 = vector.broadcast %cst_52 : f32 to vector<16x512xf32>
    %c0_53 = arith.constant 0 : index
    %c0_54 = arith.constant 0 : index
    %90 = vector.load %arg22[%c0_53, %c0_54] : memref<16x512xf32, #tpu.memory_space<vmem>>, vector<16x512xf32>
    tpu.vector_store %arg22[%c0_53, %c0_54], %89 {strides = array<i32>} : memref<16x512xf32, #tpu.memory_space<vmem>>, vector<16x512xf32>,
    %c0_55 = arith.constant 0 : index
    %c128_56 = arith.constant 128 : index
    %91 = vector.load %arg22[%c0_55, %c128_56] : memref<16x512xf32, #tpu.memory_space<vmem>>, vector<16x256xf32>
    tpu.vector_store %arg22[%c0_55, %c128_56], %88 {strides = array<i32>} : memref<16x512xf32, #tpu.memory_space<vmem>>, vector<16x256xf32>,
    %c0_57 = arith.constant 0 : index
    %c111_58 = arith.constant 111 : index
    %92 = vector.load %arg22[%c0_57, %c111_58] : memref<16x512xf32, #tpu.memory_space<vmem>>, vector<16x256xf32>
    %c1_i32_59 = arith.constant 1 : i32
    %93 = vector.broadcast %c1_i32_59 : i32 to vector<1x256xi32>
    %94 = arith.cmpi sge, %16, %93 : vector<1x256xi32>
    %cst_60 = arith.constant 0.000000e+00 : f32
    %95 = vector.shape_cast %94 : vector<1x256xi1> to vector<1x256xi1>
    %96 = vector.broadcast %95 : vector<1x256xi1> to vector<16x256xi1>
    %97 = vector.broadcast %cst_60 : f32 to vector<16x256xf32>
    %98 = arith.select %96, %92, %97 : vector<16x256xi1>, vector<16x256xf32>
    %c0_61 = arith.constant 0 : index
    %c0_62 = arith.constant 0 : index
    %99 = vector.load %arg23[%c0_61, %c0_62] : memref<144x256xf32, #tpu.memory_space<vmem>>, vector<16x256xf32>
    tpu.vector_store %arg23[%c0_61, %c0_62], %98 {strides = array<i32>} : memref<144x256xf32, #tpu.memory_space<vmem>>, vector<16x256xf32>,
    %c0_63 = arith.constant 0 : index
    %c112_64 = arith.constant 112 : index
    %100 = vector.load %arg22[%c0_63, %c112_64] : memref<16x512xf32, #tpu.memory_space<vmem>>, vector<16x256xf32>
    %c16 = arith.constant 16 : index
    %c0_65 = arith.constant 0 : index
    %101 = vector.load %arg23[%c16, %c0_65] : memref<144x256xf32, #tpu.memory_space<vmem>>, vector<16x256xf32>
    tpu.vector_store %arg23[%c16, %c0_65], %100 {strides = array<i32>} : memref<144x256xf32, #tpu.memory_space<vmem>>, vector<16x256xf32>,
    %c0_66 = arith.constant 0 : index
    %c113_67 = arith.constant 113 : index
    %102 = vector.load %arg22[%c0_66, %c113_67] : memref<16x512xf32, #tpu.memory_space<vmem>>, vector<16x256xf32>
    %c14_i32_68 = arith.constant 14 : i32
    %103 = vector.broadcast %c14_i32_68 : i32 to vector<1x256xi32>
    %104 = arith.cmpi sle, %16, %103 : vector<1x256xi32>
    %cst_69 = arith.constant 0.000000e+00 : f32
    %105 = vector.shape_cast %104 : vector<1x256xi1> to vector<1x256xi1>
    %106 = vector.broadcast %105 : vector<1x256xi1> to vector<16x256xi1>
    %107 = vector.broadcast %cst_69 : f32 to vector<16x256xf32>
    %108 = arith.select %106, %102, %107 : vector<16x256xi1>, vector<16x256xf32>
    %c32 = arith.constant 32 : index
    %c0_70 = arith.constant 0 : index
    %109 = vector.load %arg23[%c32, %c0_70] : memref<144x256xf32, #tpu.memory_space<vmem>>, vector<16x256xf32>
    tpu.vector_store %arg23[%c32, %c0_70], %108 {strides = array<i32>} : memref<144x256xf32, #tpu.memory_space<vmem>>, vector<16x256xf32>,
    %c0_71 = arith.constant 0 : index
    %c127_72 = arith.constant 127 : index
    %110 = vector.load %arg22[%c0_71, %c127_72] : memref<16x512xf32, #tpu.memory_space<vmem>>, vector<16x256xf32>
    %c1_i32_73 = arith.constant 1 : i32
    %111 = vector.broadcast %c1_i32_73 : i32 to vector<1x256xi32>
    %112 = arith.cmpi sge, %16, %111 : vector<1x256xi32>
    %cst_74 = arith.constant 0.000000e+00 : f32
    %113 = vector.shape_cast %112 : vector<1x256xi1> to vector<1x256xi1>
    %114 = vector.broadcast %113 : vector<1x256xi1> to vector<16x256xi1>
    %115 = vector.broadcast %cst_74 : f32 to vector<16x256xf32>
    %116 = arith.select %114, %110, %115 : vector<16x256xi1>, vector<16x256xf32>
    %c48 = arith.constant 48 : index
    %c0_75 = arith.constant 0 : index
    %117 = vector.load %arg23[%c48, %c0_75] : memref<144x256xf32, #tpu.memory_space<vmem>>, vector<16x256xf32>
    tpu.vector_store %arg23[%c48, %c0_75], %116 {strides = array<i32>} : memref<144x256xf32, #tpu.memory_space<vmem>>, vector<16x256xf32>,
    %c0_76 = arith.constant 0 : index
    %c128_77 = arith.constant 128 : index
    %118 = vector.load %arg22[%c0_76, %c128_77] : memref<16x512xf32, #tpu.memory_space<vmem>>, vector<16x256xf32>
    %c64 = arith.constant 64 : index
    %c0_78 = arith.constant 0 : index
    %119 = vector.load %arg23[%c64, %c0_78] : memref<144x256xf32, #tpu.memory_space<vmem>>, vector<16x256xf32>
    tpu.vector_store %arg23[%c64, %c0_78], %118 {strides = array<i32>} : memref<144x256xf32, #tpu.memory_space<vmem>>, vector<16x256xf32>,
    %c0_79 = arith.constant 0 : index
    %c129_80 = arith.constant 129 : index
    %120 = vector.load %arg22[%c0_79, %c129_80] : memref<16x512xf32, #tpu.memory_space<vmem>>, vector<16x256xf32>
    %c14_i32_81 = arith.constant 14 : i32
    %121 = vector.broadcast %c14_i32_81 : i32 to vector<1x256xi32>
    %122 = arith.cmpi sle, %16, %121 : vector<1x256xi32>
    %cst_82 = arith.constant 0.000000e+00 : f32
    %123 = vector.shape_cast %122 : vector<1x256xi1> to vector<1x256xi1>
    %124 = vector.broadcast %123 : vector<1x256xi1> to vector<16x256xi1>
    %125 = vector.broadcast %cst_82 : f32 to vector<16x256xf32>
    %126 = arith.select %124, %120, %125 : vector<16x256xi1>, vector<16x256xf32>
    %c80 = arith.constant 80 : index
    %c0_83 = arith.constant 0 : index
    %127 = vector.load %arg23[%c80, %c0_83] : memref<144x256xf32, #tpu.memory_space<vmem>>, vector<16x256xf32>
    tpu.vector_store %arg23[%c80, %c0_83], %126 {strides = array<i32>} : memref<144x256xf32, #tpu.memory_space<vmem>>, vector<16x256xf32>,
    %c0_84 = arith.constant 0 : index
    %c143_85 = arith.constant 143 : index
    %128 = vector.load %arg22[%c0_84, %c143_85] : memref<16x512xf32, #tpu.memory_space<vmem>>, vector<16x256xf32>
    %c1_i32_86 = arith.constant 1 : i32
    %129 = vector.broadcast %c1_i32_86 : i32 to vector<1x256xi32>
    %130 = arith.cmpi sge, %16, %129 : vector<1x256xi32>
    %cst_87 = arith.constant 0.000000e+00 : f32
    %131 = vector.shape_cast %130 : vector<1x256xi1> to vector<1x256xi1>
    %132 = vector.broadcast %131 : vector<1x256xi1> to vector<16x256xi1>
    %133 = vector.broadcast %cst_87 : f32 to vector<16x256xf32>
    %134 = arith.select %132, %128, %133 : vector<16x256xi1>, vector<16x256xf32>
    %c96 = arith.constant 96 : index
    %c0_88 = arith.constant 0 : index
    %135 = vector.load %arg23[%c96, %c0_88] : memref<144x256xf32, #tpu.memory_space<vmem>>, vector<16x256xf32>
    tpu.vector_store %arg23[%c96, %c0_88], %134 {strides = array<i32>} : memref<144x256xf32, #tpu.memory_space<vmem>>, vector<16x256xf32>,
    %c0_89 = arith.constant 0 : index
    %c144_90 = arith.constant 144 : index
    %136 = vector.load %arg22[%c0_89, %c144_90] : memref<16x512xf32, #tpu.memory_space<vmem>>, vector<16x256xf32>
    %c112_91 = arith.constant 112 : index
    %c0_92 = arith.constant 0 : index
    %137 = vector.load %arg23[%c112_91, %c0_92] : memref<144x256xf32, #tpu.memory_space<vmem>>, vector<16x256xf32>
    tpu.vector_store %arg23[%c112_91, %c0_92], %136 {strides = array<i32>} : memref<144x256xf32, #tpu.memory_space<vmem>>, vector<16x256xf32>,
    %c0_93 = arith.constant 0 : index
    %c145_94 = arith.constant 145 : index
    %138 = vector.load %arg22[%c0_93, %c145_94] : memref<16x512xf32, #tpu.memory_space<vmem>>, vector<16x256xf32>
    %c14_i32_95 = arith.constant 14 : i32
    %139 = vector.broadcast %c14_i32_95 : i32 to vector<1x256xi32>
    %140 = arith.cmpi sle, %16, %139 : vector<1x256xi32>
    %cst_96 = arith.constant 0.000000e+00 : f32
    %141 = vector.shape_cast %140 : vector<1x256xi1> to vector<1x256xi1>
    %142 = vector.broadcast %141 : vector<1x256xi1> to vector<16x256xi1>
    %143 = vector.broadcast %cst_96 : f32 to vector<16x256xf32>
    %144 = arith.select %142, %138, %143 : vector<16x256xi1>, vector<16x256xf32>
    %c128_97 = arith.constant 128 : index
    %c0_98 = arith.constant 0 : index
    %145 = vector.load %arg23[%c128_97, %c0_98] : memref<144x256xf32, #tpu.memory_space<vmem>>, vector<16x256xf32>
    tpu.vector_store %arg23[%c128_97, %c0_98], %144 {strides = array<i32>} : memref<144x256xf32, #tpu.memory_space<vmem>>, vector<16x256xf32>,
    %c0_99 = arith.constant 0 : index
    %c0_100 = arith.constant 0 : index
    %146 = vector.load %arg3[%c0_99, %c0_100] : memref<16x144xf32, #tpu.memory_space<vmem>>, vector<16x144xf32>
    %c0_101 = arith.constant 0 : index
    %c0_102 = arith.constant 0 : index
    %147 = vector.load %arg23[%c0_101, %c0_102] : memref<144x256xf32, #tpu.memory_space<vmem>>, vector<144x256xf32>
    %cst_103 = arith.constant dense<0.000000e+00> : vector<16x256xf32>
    %148 = tpu.matmul %146, %147, %cst_103 {dimension_numbers = #tpu.dot_dimension_numbers<[1], [0], [0], [1], [0, 0, 1, 1], [], []>} : vector<16x144xf32>, vector<144x256xf32>, vector<16x256xf32> -> vector<16x256xf32>
    %c0_104 = arith.constant 0 : index
    %c0_105 = arith.constant 0 : index
    %149 = vector.load %arg11[%c0_104, %c0_105] : memref<16x1xf32, #tpu.memory_space<vmem>>, vector<16x1xf32>
    %150 = vector.broadcast %149 : vector<16x1xf32> to vector<16x256xf32>
    %151 = arith.addf %148, %150 : vector<16x256xf32>
    %cst_106 = arith.constant 0.000000e+00 : f32
    %152 = vector.broadcast %cst_106 : f32 to vector<16x256xf32>
    %153 = arith.maximumf %151, %152 : vector<16x256xf32>
    %cst_107 = arith.constant 0.000000e+00 : f32
    %154 = vector.broadcast %cst_107 : f32 to vector<16x512xf32>
    %c0_108 = arith.constant 0 : index
    %c0_109 = arith.constant 0 : index
    %155 = vector.load %arg21[%c0_108, %c0_109] : memref<16x512xf32, #tpu.memory_space<vmem>>, vector<16x512xf32>
    tpu.vector_store %arg21[%c0_108, %c0_109], %154 {strides = array<i32>} : memref<16x512xf32, #tpu.memory_space<vmem>>, vector<16x512xf32>,
    %c0_110 = arith.constant 0 : index
    %c128_111 = arith.constant 128 : index
    %156 = vector.load %arg21[%c0_110, %c128_111] : memref<16x512xf32, #tpu.memory_space<vmem>>, vector<16x256xf32>
    tpu.vector_store %arg21[%c0_110, %c128_111], %153 {strides = array<i32>} : memref<16x512xf32, #tpu.memory_space<vmem>>, vector<16x256xf32>,
    %c0_112 = arith.constant 0 : index
    %c128_113 = arith.constant 128 : index
    %157 = vector.load %arg21[%c0_112, %c128_113] : memref<16x512xf32, #tpu.memory_space<vmem>>, vector<16x256xf32>
    %c0_114 = arith.constant 0 : index
    %c0_115 = arith.constant 0 : index
    %c0_116 = arith.constant 0 : index
    %158 = vector.load %arg18[%c0_114, %c0_115, %c0_116] : memref<4x256x64xf32, #tpu.memory_space<vmem>>, vector<1x256x64xf32>
    %159 = vector.shape_cast %158 : vector<1x256x64xf32> to vector<256x64xf32>
    %cst_117 = arith.constant dense<0.000000e+00> : vector<16x64xf32>
    %160 = tpu.matmul %157, %159, %cst_117 {dimension_numbers = #tpu.dot_dimension_numbers<[1], [0], [0], [1], [0, 0, 1, 1], [], []>} : vector<16x256xf32>, vector<256x64xf32>, vector<16x64xf32> -> vector<16x64xf32>
    %c0_118 = arith.constant 0 : index
    %c0_119 = arith.constant 0 : index
    %161 = vector.load %arg23[%c0_118, %c0_119] : memref<144x256xf32, #tpu.memory_space<vmem>>, vector<16x64xf32>
    tpu.vector_store %arg23[%c0_118, %c0_119], %160 {strides = array<i32>} : memref<144x256xf32, #tpu.memory_space<vmem>>, vector<16x64xf32>,
    %c1_120 = arith.constant 1 : index
    %c0_121 = arith.constant 0 : index
    %c0_122 = arith.constant 0 : index
    %162 = vector.load %arg18[%c1_120, %c0_121, %c0_122] : memref<4x256x64xf32, #tpu.memory_space<vmem>>, vector<1x256x64xf32>
    %163 = vector.shape_cast %162 : vector<1x256x64xf32> to vector<256x64xf32>
    %cst_123 = arith.constant dense<0.000000e+00> : vector<16x64xf32>
    %164 = tpu.matmul %157, %163, %cst_123 {dimension_numbers = #tpu.dot_dimension_numbers<[1], [0], [0], [1], [0, 0, 1, 1], [], []>} : vector<16x256xf32>, vector<256x64xf32>, vector<16x64xf32> -> vector<16x64xf32>
    %c16_124 = arith.constant 16 : index
    %c0_125 = arith.constant 0 : index
    %165 = vector.load %arg23[%c16_124, %c0_125] : memref<144x256xf32, #tpu.memory_space<vmem>>, vector<16x64xf32>
    tpu.vector_store %arg23[%c16_124, %c0_125], %164 {strides = array<i32>} : memref<144x256xf32, #tpu.memory_space<vmem>>, vector<16x64xf32>,
    %c2_126 = arith.constant 2 : index
    %c0_127 = arith.constant 0 : index
    %c0_128 = arith.constant 0 : index
    %166 = vector.load %arg18[%c2_126, %c0_127, %c0_128] : memref<4x256x64xf32, #tpu.memory_space<vmem>>, vector<1x256x64xf32>
    %167 = vector.shape_cast %166 : vector<1x256x64xf32> to vector<256x64xf32>
    %cst_129 = arith.constant dense<0.000000e+00> : vector<16x64xf32>
    %168 = tpu.matmul %157, %167, %cst_129 {dimension_numbers = #tpu.dot_dimension_numbers<[1], [0], [0], [1], [0, 0, 1, 1], [], []>} : vector<16x256xf32>, vector<256x64xf32>, vector<16x64xf32> -> vector<16x64xf32>
    %c32_130 = arith.constant 32 : index
    %c0_131 = arith.constant 0 : index
    %169 = vector.load %arg23[%c32_130, %c0_131] : memref<144x256xf32, #tpu.memory_space<vmem>>, vector<16x64xf32>
    tpu.vector_store %arg23[%c32_130, %c0_131], %168 {strides = array<i32>} : memref<144x256xf32, #tpu.memory_space<vmem>>, vector<16x64xf32>,
    %c3_132 = arith.constant 3 : index
    %c0_133 = arith.constant 0 : index
    %c0_134 = arith.constant 0 : index
    %170 = vector.load %arg18[%c3_132, %c0_133, %c0_134] : memref<4x256x64xf32, #tpu.memory_space<vmem>>, vector<1x256x64xf32>
    %171 = vector.shape_cast %170 : vector<1x256x64xf32> to vector<256x64xf32>
    %cst_135 = arith.constant dense<0.000000e+00> : vector<16x64xf32>
    %172 = tpu.matmul %157, %171, %cst_135 {dimension_numbers = #tpu.dot_dimension_numbers<[1], [0], [0], [1], [0, 0, 1, 1], [], []>} : vector<16x256xf32>, vector<256x64xf32>, vector<16x64xf32> -> vector<16x64xf32>
    %c48_136 = arith.constant 48 : index
    %c0_137 = arith.constant 0 : index
    %173 = vector.load %arg23[%c48_136, %c0_137] : memref<144x256xf32, #tpu.memory_space<vmem>>, vector<16x64xf32>
    tpu.vector_store %arg23[%c48_136, %c0_137], %172 {strides = array<i32>} : memref<144x256xf32, #tpu.memory_space<vmem>>, vector<16x64xf32>,
    %c0_138 = arith.constant 0 : index
    %c0_139 = arith.constant 0 : index
    %174 = vector.load %arg4[%c0_138, %c0_139] : memref<16x64xf32, #tpu.memory_space<vmem>>, vector<16x64xf32>
    %c0_140 = arith.constant 0 : index
    %c0_141 = arith.constant 0 : index
    %175 = vector.load %arg23[%c0_140, %c0_141] : memref<144x256xf32, #tpu.memory_space<vmem>>, vector<64x64xf32>
    %cst_142 = arith.constant dense<0.000000e+00> : vector<16x64xf32>
    %176 = tpu.matmul %174, %175, %cst_142 {dimension_numbers = #tpu.dot_dimension_numbers<[1], [0], [0], [1], [0, 0, 1, 1], [], []>} : vector<16x64xf32>, vector<64x64xf32>, vector<16x64xf32> -> vector<16x64xf32>
    %c0_143 = arith.constant 0 : index
    %c0_144 = arith.constant 0 : index
    %177 = vector.load %arg12[%c0_143, %c0_144] : memref<16x1xf32, #tpu.memory_space<vmem>>, vector<16x1xf32>
    %178 = vector.broadcast %177 : vector<16x1xf32> to vector<16x64xf32>
    %179 = arith.addf %176, %178 : vector<16x64xf32>
    %cst_145 = arith.constant 0.000000e+00 : f32
    %180 = vector.broadcast %cst_145 : f32 to vector<16x64xf32>
    %181 = arith.maximumf %179, %180 : vector<16x64xf32>
    %cst_146 = arith.constant 0.000000e+00 : f32
    %182 = vector.broadcast %cst_146 : f32 to vector<16x512xf32>
    %c0_147 = arith.constant 0 : index
    %c0_148 = arith.constant 0 : index
    %183 = vector.load %arg22[%c0_147, %c0_148] : memref<16x512xf32, #tpu.memory_space<vmem>>, vector<16x512xf32>
    tpu.vector_store %arg22[%c0_147, %c0_148], %182 {strides = array<i32>} : memref<16x512xf32, #tpu.memory_space<vmem>>, vector<16x512xf32>,
    %c0_149 = arith.constant 0 : index
    %c128_150 = arith.constant 128 : index
    %184 = vector.load %arg22[%c0_149, %c128_150] : memref<16x512xf32, #tpu.memory_space<vmem>>, vector<16x64xf32>
    tpu.vector_store %arg22[%c0_149, %c128_150], %181 {strides = array<i32>} : memref<16x512xf32, #tpu.memory_space<vmem>>, vector<16x64xf32>,
    %c0_151 = arith.constant 0 : index
    %c119 = arith.constant 119 : index
    %185 = vector.load %arg22[%c0_151, %c119] : memref<16x512xf32, #tpu.memory_space<vmem>>, vector<16x64xf32>
    %c1_i32_152 = arith.constant 1 : i32
    %186 = vector.broadcast %c1_i32_152 : i32 to vector<1x64xi32>
    %187 = arith.cmpi sge, %33, %186 : vector<1x64xi32>
    %cst_153 = arith.constant 0.000000e+00 : f32
    %188 = vector.shape_cast %187 : vector<1x64xi1> to vector<1x64xi1>
    %189 = vector.broadcast %188 : vector<1x64xi1> to vector<16x64xi1>
    %190 = vector.broadcast %cst_153 : f32 to vector<16x64xf32>
    %191 = arith.select %189, %185, %190 : vector<16x64xi1>, vector<16x64xf32>
    %c0_154 = arith.constant 0 : index
    %c0_155 = arith.constant 0 : index
    %192 = vector.load %arg23[%c0_154, %c0_155] : memref<144x256xf32, #tpu.memory_space<vmem>>, vector<16x64xf32>
    tpu.vector_store %arg23[%c0_154, %c0_155], %191 {strides = array<i32>} : memref<144x256xf32, #tpu.memory_space<vmem>>, vector<16x64xf32>,
    %c0_156 = arith.constant 0 : index
    %c120 = arith.constant 120 : index
    %193 = vector.load %arg22[%c0_156, %c120] : memref<16x512xf32, #tpu.memory_space<vmem>>, vector<16x64xf32>
    %c16_157 = arith.constant 16 : index
    %c0_158 = arith.constant 0 : index
    %194 = vector.load %arg23[%c16_157, %c0_158] : memref<144x256xf32, #tpu.memory_space<vmem>>, vector<16x64xf32>
    tpu.vector_store %arg23[%c16_157, %c0_158], %193 {strides = array<i32>} : memref<144x256xf32, #tpu.memory_space<vmem>>, vector<16x64xf32>,
    %c0_159 = arith.constant 0 : index
    %c121 = arith.constant 121 : index
    %195 = vector.load %arg22[%c0_159, %c121] : memref<16x512xf32, #tpu.memory_space<vmem>>, vector<16x64xf32>
    %c6_i32 = arith.constant 6 : i32
    %196 = vector.broadcast %c6_i32 : i32 to vector<1x64xi32>
    %197 = arith.cmpi sle, %33, %196 : vector<1x64xi32>
    %cst_160 = arith.constant 0.000000e+00 : f32
    %198 = vector.shape_cast %197 : vector<1x64xi1> to vector<1x64xi1>
    %199 = vector.broadcast %198 : vector<1x64xi1> to vector<16x64xi1>
    %200 = vector.broadcast %cst_160 : f32 to vector<16x64xf32>
    %201 = arith.select %199, %195, %200 : vector<16x64xi1>, vector<16x64xf32>
    %c32_161 = arith.constant 32 : index
    %c0_162 = arith.constant 0 : index
    %202 = vector.load %arg23[%c32_161, %c0_162] : memref<144x256xf32, #tpu.memory_space<vmem>>, vector<16x64xf32>
    tpu.vector_store %arg23[%c32_161, %c0_162], %201 {strides = array<i32>} : memref<144x256xf32, #tpu.memory_space<vmem>>, vector<16x64xf32>,
    %c0_163 = arith.constant 0 : index
    %c127_164 = arith.constant 127 : index
    %203 = vector.load %arg22[%c0_163, %c127_164] : memref<16x512xf32, #tpu.memory_space<vmem>>, vector<16x64xf32>
    %c1_i32_165 = arith.constant 1 : i32
    %204 = vector.broadcast %c1_i32_165 : i32 to vector<1x64xi32>
    %205 = arith.cmpi sge, %33, %204 : vector<1x64xi32>
    %cst_166 = arith.constant 0.000000e+00 : f32
    %206 = vector.shape_cast %205 : vector<1x64xi1> to vector<1x64xi1>
    %207 = vector.broadcast %206 : vector<1x64xi1> to vector<16x64xi1>
    %208 = vector.broadcast %cst_166 : f32 to vector<16x64xf32>
    %209 = arith.select %207, %203, %208 : vector<16x64xi1>, vector<16x64xf32>
    %c48_167 = arith.constant 48 : index
    %c0_168 = arith.constant 0 : index
    %210 = vector.load %arg23[%c48_167, %c0_168] : memref<144x256xf32, #tpu.memory_space<vmem>>, vector<16x64xf32>
    tpu.vector_store %arg23[%c48_167, %c0_168], %209 {strides = array<i32>} : memref<144x256xf32, #tpu.memory_space<vmem>>, vector<16x64xf32>,
    %c0_169 = arith.constant 0 : index
    %c128_170 = arith.constant 128 : index
    %211 = vector.load %arg22[%c0_169, %c128_170] : memref<16x512xf32, #tpu.memory_space<vmem>>, vector<16x64xf32>
    %c64_171 = arith.constant 64 : index
    %c0_172 = arith.constant 0 : index
    %212 = vector.load %arg23[%c64_171, %c0_172] : memref<144x256xf32, #tpu.memory_space<vmem>>, vector<16x64xf32>
    tpu.vector_store %arg23[%c64_171, %c0_172], %211 {strides = array<i32>} : memref<144x256xf32, #tpu.memory_space<vmem>>, vector<16x64xf32>,
    %c0_173 = arith.constant 0 : index
    %c129_174 = arith.constant 129 : index
    %213 = vector.load %arg22[%c0_173, %c129_174] : memref<16x512xf32, #tpu.memory_space<vmem>>, vector<16x64xf32>
    %c6_i32_175 = arith.constant 6 : i32
    %214 = vector.broadcast %c6_i32_175 : i32 to vector<1x64xi32>
    %215 = arith.cmpi sle, %33, %214 : vector<1x64xi32>
    %cst_176 = arith.constant 0.000000e+00 : f32
    %216 = vector.shape_cast %215 : vector<1x64xi1> to vector<1x64xi1>
    %217 = vector.broadcast %216 : vector<1x64xi1> to vector<16x64xi1>
    %218 = vector.broadcast %cst_176 : f32 to vector<16x64xf32>
    %219 = arith.select %217, %213, %218 : vector<16x64xi1>, vector<16x64xf32>
    %c80_177 = arith.constant 80 : index
    %c0_178 = arith.constant 0 : index
    %220 = vector.load %arg23[%c80_177, %c0_178] : memref<144x256xf32, #tpu.memory_space<vmem>>, vector<16x64xf32>
    tpu.vector_store %arg23[%c80_177, %c0_178], %219 {strides = array<i32>} : memref<144x256xf32, #tpu.memory_space<vmem>>, vector<16x64xf32>,
    %c0_179 = arith.constant 0 : index
    %c135 = arith.constant 135 : index
    %221 = vector.load %arg22[%c0_179, %c135] : memref<16x512xf32, #tpu.memory_space<vmem>>, vector<16x64xf32>
    %c1_i32_180 = arith.constant 1 : i32
    %222 = vector.broadcast %c1_i32_180 : i32 to vector<1x64xi32>
    %223 = arith.cmpi sge, %33, %222 : vector<1x64xi32>
    %cst_181 = arith.constant 0.000000e+00 : f32
    %224 = vector.shape_cast %223 : vector<1x64xi1> to vector<1x64xi1>
    %225 = vector.broadcast %224 : vector<1x64xi1> to vector<16x64xi1>
    %226 = vector.broadcast %cst_181 : f32 to vector<16x64xf32>
    %227 = arith.select %225, %221, %226 : vector<16x64xi1>, vector<16x64xf32>
    %c96_182 = arith.constant 96 : index
    %c0_183 = arith.constant 0 : index
    %228 = vector.load %arg23[%c96_182, %c0_183] : memref<144x256xf32, #tpu.memory_space<vmem>>, vector<16x64xf32>
    tpu.vector_store %arg23[%c96_182, %c0_183], %227 {strides = array<i32>} : memref<144x256xf32, #tpu.memory_space<vmem>>, vector<16x64xf32>,
    %c0_184 = arith.constant 0 : index
    %c136 = arith.constant 136 : index
    %229 = vector.load %arg22[%c0_184, %c136] : memref<16x512xf32, #tpu.memory_space<vmem>>, vector<16x64xf32>
    %c112_185 = arith.constant 112 : index
    %c0_186 = arith.constant 0 : index
    %230 = vector.load %arg23[%c112_185, %c0_186] : memref<144x256xf32, #tpu.memory_space<vmem>>, vector<16x64xf32>
    tpu.vector_store %arg23[%c112_185, %c0_186], %229 {strides = array<i32>} : memref<144x256xf32, #tpu.memory_space<vmem>>, vector<16x64xf32>,
    %c0_187 = arith.constant 0 : index
    %c137 = arith.constant 137 : index
    %231 = vector.load %arg22[%c0_187, %c137] : memref<16x512xf32, #tpu.memory_space<vmem>>, vector<16x64xf32>
    %c6_i32_188 = arith.constant 6 : i32
    %232 = vector.broadcast %c6_i32_188 : i32 to vector<1x64xi32>
    %233 = arith.cmpi sle, %33, %232 : vector<1x64xi32>
    %cst_189 = arith.constant 0.000000e+00 : f32
    %234 = vector.shape_cast %233 : vector<1x64xi1> to vector<1x64xi1>
    %235 = vector.broadcast %234 : vector<1x64xi1> to vector<16x64xi1>
    %236 = vector.broadcast %cst_189 : f32 to vector<16x64xf32>
    %237 = arith.select %235, %231, %236 : vector<16x64xi1>, vector<16x64xf32>
    %c128_190 = arith.constant 128 : index
    %c0_191 = arith.constant 0 : index
    %238 = vector.load %arg23[%c128_190, %c0_191] : memref<144x256xf32, #tpu.memory_space<vmem>>, vector<16x64xf32>
    tpu.vector_store %arg23[%c128_190, %c0_191], %237 {strides = array<i32>} : memref<144x256xf32, #tpu.memory_space<vmem>>, vector<16x64xf32>,
    %c0_192 = arith.constant 0 : index
    %c0_193 = arith.constant 0 : index
    %239 = vector.load %arg5[%c0_192, %c0_193] : memref<4x144xf32, #tpu.memory_space<vmem>>, vector<4x144xf32>
    %c0_194 = arith.constant 0 : index
    %c0_195 = arith.constant 0 : index
    %240 = vector.load %arg23[%c0_194, %c0_195] : memref<144x256xf32, #tpu.memory_space<vmem>>, vector<144x64xf32>
    %cst_196 = arith.constant dense<0.000000e+00> : vector<4x64xf32>
    %241 = tpu.matmul %239, %240, %cst_196 {dimension_numbers = #tpu.dot_dimension_numbers<[1], [0], [0], [1], [0, 0, 1, 1], [], []>} : vector<4x144xf32>, vector<144x64xf32>, vector<4x64xf32> -> vector<4x64xf32>
    %c0_197 = arith.constant 0 : index
    %c0_198 = arith.constant 0 : index
    %242 = vector.load %arg13[%c0_197, %c0_198] : memref<4x1xf32, #tpu.memory_space<vmem>>, vector<4x1xf32>
    %243 = vector.broadcast %242 : vector<4x1xf32> to vector<4x64xf32>
    %244 = arith.addf %241, %243 : vector<4x64xf32>
    %cst_199 = arith.constant 0.000000e+00 : f32
    %245 = vector.broadcast %cst_199 : f32 to vector<16x512xf32>
    %c0_200 = arith.constant 0 : index
    %c0_201 = arith.constant 0 : index
    %246 = vector.load %arg21[%c0_200, %c0_201] : memref<16x512xf32, #tpu.memory_space<vmem>>, vector<16x512xf32>
    tpu.vector_store %arg21[%c0_200, %c0_201], %245 {strides = array<i32>} : memref<16x512xf32, #tpu.memory_space<vmem>>, vector<16x512xf32>,
    %c0_202 = arith.constant 0 : index
    %c128_203 = arith.constant 128 : index
    %247 = vector.load %arg21[%c0_202, %c128_203] : memref<16x512xf32, #tpu.memory_space<vmem>>, vector<4x64xf32>
    tpu.vector_store %arg21[%c0_202, %c128_203], %244 {strides = array<i32>} : memref<16x512xf32, #tpu.memory_space<vmem>>, vector<4x64xf32>,
    %c0_204 = arith.constant 0 : index
    %c119_205 = arith.constant 119 : index
    %248 = vector.load %arg21[%c0_204, %c119_205] : memref<16x512xf32, #tpu.memory_space<vmem>>, vector<4x64xf32>
    %c1_i32_206 = arith.constant 1 : i32
    %249 = vector.broadcast %c1_i32_206 : i32 to vector<1x64xi32>
    %250 = arith.cmpi sge, %33, %249 : vector<1x64xi32>
    %cst_207 = arith.constant 0.000000e+00 : f32
    %251 = vector.shape_cast %250 : vector<1x64xi1> to vector<1x64xi1>
    %252 = vector.broadcast %251 : vector<1x64xi1> to vector<4x64xi1>
    %253 = vector.broadcast %cst_207 : f32 to vector<4x64xf32>
    %254 = arith.select %252, %248, %253 : vector<4x64xi1>, vector<4x64xf32>
    %c0_208 = arith.constant 0 : index
    %c0_209 = arith.constant 0 : index
    %255 = vector.load %arg23[%c0_208, %c0_209] : memref<144x256xf32, #tpu.memory_space<vmem>>, vector<4x64xf32>
    tpu.vector_store %arg23[%c0_208, %c0_209], %254 {strides = array<i32>} : memref<144x256xf32, #tpu.memory_space<vmem>>, vector<4x64xf32>,
    %c0_210 = arith.constant 0 : index
    %c120_211 = arith.constant 120 : index
    %256 = vector.load %arg21[%c0_210, %c120_211] : memref<16x512xf32, #tpu.memory_space<vmem>>, vector<4x64xf32>
    %c4_212 = arith.constant 4 : index
    %c0_213 = arith.constant 0 : index
    %257 = vector.load %arg23[%c4_212, %c0_213] : memref<144x256xf32, #tpu.memory_space<vmem>>, vector<4x64xf32>
    tpu.vector_store %arg23[%c4_212, %c0_213], %256 {strides = array<i32>} : memref<144x256xf32, #tpu.memory_space<vmem>>, vector<4x64xf32>,
    %c0_214 = arith.constant 0 : index
    %c121_215 = arith.constant 121 : index
    %258 = vector.load %arg21[%c0_214, %c121_215] : memref<16x512xf32, #tpu.memory_space<vmem>>, vector<4x64xf32>
    %c6_i32_216 = arith.constant 6 : i32
    %259 = vector.broadcast %c6_i32_216 : i32 to vector<1x64xi32>
    %260 = arith.cmpi sle, %33, %259 : vector<1x64xi32>
    %cst_217 = arith.constant 0.000000e+00 : f32
    %261 = vector.shape_cast %260 : vector<1x64xi1> to vector<1x64xi1>
    %262 = vector.broadcast %261 : vector<1x64xi1> to vector<4x64xi1>
    %263 = vector.broadcast %cst_217 : f32 to vector<4x64xf32>
    %264 = arith.select %262, %258, %263 : vector<4x64xi1>, vector<4x64xf32>
    %c8_218 = arith.constant 8 : index
    %c0_219 = arith.constant 0 : index
    %265 = vector.load %arg23[%c8_218, %c0_219] : memref<144x256xf32, #tpu.memory_space<vmem>>, vector<4x64xf32>
    tpu.vector_store %arg23[%c8_218, %c0_219], %264 {strides = array<i32>} : memref<144x256xf32, #tpu.memory_space<vmem>>, vector<4x64xf32>,
    %c0_220 = arith.constant 0 : index
    %c127_221 = arith.constant 127 : index
    %266 = vector.load %arg21[%c0_220, %c127_221] : memref<16x512xf32, #tpu.memory_space<vmem>>, vector<4x64xf32>
    %c1_i32_222 = arith.constant 1 : i32
    %267 = vector.broadcast %c1_i32_222 : i32 to vector<1x64xi32>
    %268 = arith.cmpi sge, %33, %267 : vector<1x64xi32>
    %cst_223 = arith.constant 0.000000e+00 : f32
    %269 = vector.shape_cast %268 : vector<1x64xi1> to vector<1x64xi1>
    %270 = vector.broadcast %269 : vector<1x64xi1> to vector<4x64xi1>
    %271 = vector.broadcast %cst_223 : f32 to vector<4x64xf32>
    %272 = arith.select %270, %266, %271 : vector<4x64xi1>, vector<4x64xf32>
    %c12 = arith.constant 12 : index
    %c0_224 = arith.constant 0 : index
    %273 = vector.load %arg23[%c12, %c0_224] : memref<144x256xf32, #tpu.memory_space<vmem>>, vector<4x64xf32>
    tpu.vector_store %arg23[%c12, %c0_224], %272 {strides = array<i32>} : memref<144x256xf32, #tpu.memory_space<vmem>>, vector<4x64xf32>,
    %c0_225 = arith.constant 0 : index
    %c128_226 = arith.constant 128 : index
    %274 = vector.load %arg21[%c0_225, %c128_226] : memref<16x512xf32, #tpu.memory_space<vmem>>, vector<4x64xf32>
    %c16_227 = arith.constant 16 : index
    %c0_228 = arith.constant 0 : index
    %275 = vector.load %arg23[%c16_227, %c0_228] : memref<144x256xf32, #tpu.memory_space<vmem>>, vector<4x64xf32>
    tpu.vector_store %arg23[%c16_227, %c0_228], %274 {strides = array<i32>} : memref<144x256xf32, #tpu.memory_space<vmem>>, vector<4x64xf32>,
    %c0_229 = arith.constant 0 : index
    %c129_230 = arith.constant 129 : index
    %276 = vector.load %arg21[%c0_229, %c129_230] : memref<16x512xf32, #tpu.memory_space<vmem>>, vector<4x64xf32>
    %c6_i32_231 = arith.constant 6 : i32
    %277 = vector.broadcast %c6_i32_231 : i32 to vector<1x64xi32>
    %278 = arith.cmpi sle, %33, %277 : vector<1x64xi32>
    %cst_232 = arith.constant 0.000000e+00 : f32
    %279 = vector.shape_cast %278 : vector<1x64xi1> to vector<1x64xi1>
    %280 = vector.broadcast %279 : vector<1x64xi1> to vector<4x64xi1>
    %281 = vector.broadcast %cst_232 : f32 to vector<4x64xf32>
    %282 = arith.select %280, %276, %281 : vector<4x64xi1>, vector<4x64xf32>
    %c20 = arith.constant 20 : index
    %c0_233 = arith.constant 0 : index
    %283 = vector.load %arg23[%c20, %c0_233] : memref<144x256xf32, #tpu.memory_space<vmem>>, vector<4x64xf32>
    tpu.vector_store %arg23[%c20, %c0_233], %282 {strides = array<i32>} : memref<144x256xf32, #tpu.memory_space<vmem>>, vector<4x64xf32>,
    %c0_234 = arith.constant 0 : index
    %c135_235 = arith.constant 135 : index
    %284 = vector.load %arg21[%c0_234, %c135_235] : memref<16x512xf32, #tpu.memory_space<vmem>>, vector<4x64xf32>
    %c1_i32_236 = arith.constant 1 : i32
    %285 = vector.broadcast %c1_i32_236 : i32 to vector<1x64xi32>
    %286 = arith.cmpi sge, %33, %285 : vector<1x64xi32>
    %cst_237 = arith.constant 0.000000e+00 : f32
    %287 = vector.shape_cast %286 : vector<1x64xi1> to vector<1x64xi1>
    %288 = vector.broadcast %287 : vector<1x64xi1> to vector<4x64xi1>
    %289 = vector.broadcast %cst_237 : f32 to vector<4x64xf32>
    %290 = arith.select %288, %284, %289 : vector<4x64xi1>, vector<4x64xf32>
    %c24 = arith.constant 24 : index
    %c0_238 = arith.constant 0 : index
    %291 = vector.load %arg23[%c24, %c0_238] : memref<144x256xf32, #tpu.memory_space<vmem>>, vector<4x64xf32>
    tpu.vector_store %arg23[%c24, %c0_238], %290 {strides = array<i32>} : memref<144x256xf32, #tpu.memory_space<vmem>>, vector<4x64xf32>,
    %c0_239 = arith.constant 0 : index
    %c136_240 = arith.constant 136 : index
    %292 = vector.load %arg21[%c0_239, %c136_240] : memref<16x512xf32, #tpu.memory_space<vmem>>, vector<4x64xf32>
    %c28 = arith.constant 28 : index
    %c0_241 = arith.constant 0 : index
    %293 = vector.load %arg23[%c28, %c0_241] : memref<144x256xf32, #tpu.memory_space<vmem>>, vector<4x64xf32>
    tpu.vector_store %arg23[%c28, %c0_241], %292 {strides = array<i32>} : memref<144x256xf32, #tpu.memory_space<vmem>>, vector<4x64xf32>,
    %c0_242 = arith.constant 0 : index
    %c137_243 = arith.constant 137 : index
    %294 = vector.load %arg21[%c0_242, %c137_243] : memref<16x512xf32, #tpu.memory_space<vmem>>, vector<4x64xf32>
    %c6_i32_244 = arith.constant 6 : i32
    %295 = vector.broadcast %c6_i32_244 : i32 to vector<1x64xi32>
    %296 = arith.cmpi sle, %33, %295 : vector<1x64xi32>
    %cst_245 = arith.constant 0.000000e+00 : f32
    %297 = vector.shape_cast %296 : vector<1x64xi1> to vector<1x64xi1>
    %298 = vector.broadcast %297 : vector<1x64xi1> to vector<4x64xi1>
    %299 = vector.broadcast %cst_245 : f32 to vector<4x64xf32>
    %300 = arith.select %298, %294, %299 : vector<4x64xi1>, vector<4x64xf32>
    %c32_246 = arith.constant 32 : index
    %c0_247 = arith.constant 0 : index
    %301 = vector.load %arg23[%c32_246, %c0_247] : memref<144x256xf32, #tpu.memory_space<vmem>>, vector<4x64xf32>
    tpu.vector_store %arg23[%c32_246, %c0_247], %300 {strides = array<i32>} : memref<144x256xf32, #tpu.memory_space<vmem>>, vector<4x64xf32>,
    %c0_248 = arith.constant 0 : index
    %c0_249 = arith.constant 0 : index
    %302 = vector.load %arg6[%c0_248, %c0_249] : memref<16x36xf32, #tpu.memory_space<vmem>>, vector<16x36xf32>
    %c0_250 = arith.constant 0 : index
    %c0_251 = arith.constant 0 : index
    %303 = vector.load %arg23[%c0_250, %c0_251] : memref<144x256xf32, #tpu.memory_space<vmem>>, vector<36x64xf32>
    %cst_252 = arith.constant dense<0.000000e+00> : vector<16x64xf32>
    %304 = tpu.matmul %302, %303, %cst_252 {dimension_numbers = #tpu.dot_dimension_numbers<[1], [0], [0], [1], [0, 0, 1, 1], [], []>} : vector<16x36xf32>, vector<36x64xf32>, vector<16x64xf32> -> vector<16x64xf32>
    %c0_253 = arith.constant 0 : index
    %c0_254 = arith.constant 0 : index
    %305 = vector.load %arg14[%c0_253, %c0_254] : memref<16x1xf32, #tpu.memory_space<vmem>>, vector<16x1xf32>
    %306 = vector.broadcast %305 : vector<16x1xf32> to vector<16x64xf32>
    %307 = arith.addf %304, %306 : vector<16x64xf32>
    %cst_255 = arith.constant 0.000000e+00 : f32
    %308 = vector.broadcast %cst_255 : f32 to vector<16x64xf32>
    %309 = arith.maximumf %307, %308 : vector<16x64xf32>
    %cst_256 = arith.constant 0.000000e+00 : f32
    %310 = vector.broadcast %cst_256 : f32 to vector<16x512xf32>
    %c0_257 = arith.constant 0 : index
    %c0_258 = arith.constant 0 : index
    %311 = vector.load %arg22[%c0_257, %c0_258] : memref<16x512xf32, #tpu.memory_space<vmem>>, vector<16x512xf32>
    tpu.vector_store %arg22[%c0_257, %c0_258], %310 {strides = array<i32>} : memref<16x512xf32, #tpu.memory_space<vmem>>, vector<16x512xf32>,
    %c0_259 = arith.constant 0 : index
    %c128_260 = arith.constant 128 : index
    %312 = vector.load %arg22[%c0_259, %c128_260] : memref<16x512xf32, #tpu.memory_space<vmem>>, vector<16x64xf32>
    tpu.vector_store %arg22[%c0_259, %c128_260], %309 {strides = array<i32>} : memref<16x512xf32, #tpu.memory_space<vmem>>, vector<16x64xf32>,
    %c0_261 = arith.constant 0 : index
    %c128_262 = arith.constant 128 : index
    %313 = vector.load %arg22[%c0_261, %c128_262] : memref<16x512xf32, #tpu.memory_space<vmem>>, vector<16x64xf32>
    %c0_263 = arith.constant 0 : index
    %c0_264 = arith.constant 0 : index
    %c0_265 = arith.constant 0 : index
    %314 = vector.load %arg19[%c0_263, %c0_264, %c0_265] : memref<4x64x256xf32, #tpu.memory_space<vmem>>, vector<1x64x256xf32>
    %315 = vector.shape_cast %314 : vector<1x64x256xf32> to vector<64x256xf32>
    %cst_266 = arith.constant dense<0.000000e+00> : vector<16x256xf32>
    %316 = tpu.matmul %313, %315, %cst_266 {dimension_numbers = #tpu.dot_dimension_numbers<[1], [0], [0], [1], [0, 0, 1, 1], [], []>} : vector<16x64xf32>, vector<64x256xf32>, vector<16x256xf32> -> vector<16x256xf32>
    %c0_267 = arith.constant 0 : index
    %c0_268 = arith.constant 0 : index
    %317 = vector.load %arg23[%c0_267, %c0_268] : memref<144x256xf32, #tpu.memory_space<vmem>>, vector<16x256xf32>
    tpu.vector_store %arg23[%c0_267, %c0_268], %316 {strides = array<i32>} : memref<144x256xf32, #tpu.memory_space<vmem>>, vector<16x256xf32>,
    %c1_269 = arith.constant 1 : index
    %c0_270 = arith.constant 0 : index
    %c0_271 = arith.constant 0 : index
    %318 = vector.load %arg19[%c1_269, %c0_270, %c0_271] : memref<4x64x256xf32, #tpu.memory_space<vmem>>, vector<1x64x256xf32>
    %319 = vector.shape_cast %318 : vector<1x64x256xf32> to vector<64x256xf32>
    %cst_272 = arith.constant dense<0.000000e+00> : vector<16x256xf32>
    %320 = tpu.matmul %313, %319, %cst_272 {dimension_numbers = #tpu.dot_dimension_numbers<[1], [0], [0], [1], [0, 0, 1, 1], [], []>} : vector<16x64xf32>, vector<64x256xf32>, vector<16x256xf32> -> vector<16x256xf32>
    %c16_273 = arith.constant 16 : index
    %c0_274 = arith.constant 0 : index
    %321 = vector.load %arg23[%c16_273, %c0_274] : memref<144x256xf32, #tpu.memory_space<vmem>>, vector<16x256xf32>
    tpu.vector_store %arg23[%c16_273, %c0_274], %320 {strides = array<i32>} : memref<144x256xf32, #tpu.memory_space<vmem>>, vector<16x256xf32>,
    %c2_275 = arith.constant 2 : index
    %c0_276 = arith.constant 0 : index
    %c0_277 = arith.constant 0 : index
    %322 = vector.load %arg19[%c2_275, %c0_276, %c0_277] : memref<4x64x256xf32, #tpu.memory_space<vmem>>, vector<1x64x256xf32>
    %323 = vector.shape_cast %322 : vector<1x64x256xf32> to vector<64x256xf32>
    %cst_278 = arith.constant dense<0.000000e+00> : vector<16x256xf32>
    %324 = tpu.matmul %313, %323, %cst_278 {dimension_numbers = #tpu.dot_dimension_numbers<[1], [0], [0], [1], [0, 0, 1, 1], [], []>} : vector<16x64xf32>, vector<64x256xf32>, vector<16x256xf32> -> vector<16x256xf32>
    %c32_279 = arith.constant 32 : index
    %c0_280 = arith.constant 0 : index
    %325 = vector.load %arg23[%c32_279, %c0_280] : memref<144x256xf32, #tpu.memory_space<vmem>>, vector<16x256xf32>
    tpu.vector_store %arg23[%c32_279, %c0_280], %324 {strides = array<i32>} : memref<144x256xf32, #tpu.memory_space<vmem>>, vector<16x256xf32>,
    %c3_281 = arith.constant 3 : index
    %c0_282 = arith.constant 0 : index
    %c0_283 = arith.constant 0 : index
    %326 = vector.load %arg19[%c3_281, %c0_282, %c0_283] : memref<4x64x256xf32, #tpu.memory_space<vmem>>, vector<1x64x256xf32>
    %327 = vector.shape_cast %326 : vector<1x64x256xf32> to vector<64x256xf32>
    %cst_284 = arith.constant dense<0.000000e+00> : vector<16x256xf32>
    %328 = tpu.matmul %313, %327, %cst_284 {dimension_numbers = #tpu.dot_dimension_numbers<[1], [0], [0], [1], [0, 0, 1, 1], [], []>} : vector<16x64xf32>, vector<64x256xf32>, vector<16x256xf32> -> vector<16x256xf32>
    %c48_285 = arith.constant 48 : index
    %c0_286 = arith.constant 0 : index
    %329 = vector.load %arg23[%c48_285, %c0_286] : memref<144x256xf32, #tpu.memory_space<vmem>>, vector<16x256xf32>
    tpu.vector_store %arg23[%c48_285, %c0_286], %328 {strides = array<i32>} : memref<144x256xf32, #tpu.memory_space<vmem>>, vector<16x256xf32>,
    %c0_287 = arith.constant 0 : index
    %c0_288 = arith.constant 0 : index
    %330 = vector.load %arg7[%c0_287, %c0_288] : memref<16x64xf32, #tpu.memory_space<vmem>>, vector<16x64xf32>
    %c0_289 = arith.constant 0 : index
    %c0_290 = arith.constant 0 : index
    %331 = vector.load %arg23[%c0_289, %c0_290] : memref<144x256xf32, #tpu.memory_space<vmem>>, vector<64x256xf32>
    %cst_291 = arith.constant dense<0.000000e+00> : vector<16x256xf32>
    %332 = tpu.matmul %330, %331, %cst_291 {dimension_numbers = #tpu.dot_dimension_numbers<[1], [0], [0], [1], [0, 0, 1, 1], [], []>} : vector<16x64xf32>, vector<64x256xf32>, vector<16x256xf32> -> vector<16x256xf32>
    %c0_292 = arith.constant 0 : index
    %c0_293 = arith.constant 0 : index
    %333 = vector.load %arg15[%c0_292, %c0_293] : memref<16x1xf32, #tpu.memory_space<vmem>>, vector<16x1xf32>
    %334 = vector.broadcast %333 : vector<16x1xf32> to vector<16x256xf32>
    %335 = arith.addf %332, %334 : vector<16x256xf32>
    %cst_294 = arith.constant 0.000000e+00 : f32
    %336 = vector.broadcast %cst_294 : f32 to vector<16x256xf32>
    %337 = arith.maximumf %335, %336 : vector<16x256xf32>
    %cst_295 = arith.constant 0.000000e+00 : f32
    %338 = vector.broadcast %cst_295 : f32 to vector<16x512xf32>
    %c0_296 = arith.constant 0 : index
    %c0_297 = arith.constant 0 : index
    %339 = vector.load %arg21[%c0_296, %c0_297] : memref<16x512xf32, #tpu.memory_space<vmem>>, vector<16x512xf32>
    tpu.vector_store %arg21[%c0_296, %c0_297], %338 {strides = array<i32>} : memref<16x512xf32, #tpu.memory_space<vmem>>, vector<16x512xf32>,
    %c0_298 = arith.constant 0 : index
    %c128_299 = arith.constant 128 : index
    %340 = vector.load %arg21[%c0_298, %c128_299] : memref<16x512xf32, #tpu.memory_space<vmem>>, vector<16x256xf32>
    tpu.vector_store %arg21[%c0_298, %c128_299], %337 {strides = array<i32>} : memref<16x512xf32, #tpu.memory_space<vmem>>, vector<16x256xf32>,
    %c0_300 = arith.constant 0 : index
    %c111_301 = arith.constant 111 : index
    %341 = vector.load %arg21[%c0_300, %c111_301] : memref<16x512xf32, #tpu.memory_space<vmem>>, vector<16x256xf32>
    %c1_i32_302 = arith.constant 1 : i32
    %342 = vector.broadcast %c1_i32_302 : i32 to vector<1x256xi32>
    %343 = arith.cmpi sge, %16, %342 : vector<1x256xi32>
    %cst_303 = arith.constant 0.000000e+00 : f32
    %344 = vector.shape_cast %343 : vector<1x256xi1> to vector<1x256xi1>
    %345 = vector.broadcast %344 : vector<1x256xi1> to vector<16x256xi1>
    %346 = vector.broadcast %cst_303 : f32 to vector<16x256xf32>
    %347 = arith.select %345, %341, %346 : vector<16x256xi1>, vector<16x256xf32>
    %c0_304 = arith.constant 0 : index
    %c0_305 = arith.constant 0 : index
    %348 = vector.load %arg23[%c0_304, %c0_305] : memref<144x256xf32, #tpu.memory_space<vmem>>, vector<16x256xf32>
    tpu.vector_store %arg23[%c0_304, %c0_305], %347 {strides = array<i32>} : memref<144x256xf32, #tpu.memory_space<vmem>>, vector<16x256xf32>,
    %c0_306 = arith.constant 0 : index
    %c112_307 = arith.constant 112 : index
    %349 = vector.load %arg21[%c0_306, %c112_307] : memref<16x512xf32, #tpu.memory_space<vmem>>, vector<16x256xf32>
    %c16_308 = arith.constant 16 : index
    %c0_309 = arith.constant 0 : index
    %350 = vector.load %arg23[%c16_308, %c0_309] : memref<144x256xf32, #tpu.memory_space<vmem>>, vector<16x256xf32>
    tpu.vector_store %arg23[%c16_308, %c0_309], %349 {strides = array<i32>} : memref<144x256xf32, #tpu.memory_space<vmem>>, vector<16x256xf32>,
    %c0_310 = arith.constant 0 : index
    %c113_311 = arith.constant 113 : index
    %351 = vector.load %arg21[%c0_310, %c113_311] : memref<16x512xf32, #tpu.memory_space<vmem>>, vector<16x256xf32>
    %c14_i32_312 = arith.constant 14 : i32
    %352 = vector.broadcast %c14_i32_312 : i32 to vector<1x256xi32>
    %353 = arith.cmpi sle, %16, %352 : vector<1x256xi32>
    %cst_313 = arith.constant 0.000000e+00 : f32
    %354 = vector.shape_cast %353 : vector<1x256xi1> to vector<1x256xi1>
    %355 = vector.broadcast %354 : vector<1x256xi1> to vector<16x256xi1>
    %356 = vector.broadcast %cst_313 : f32 to vector<16x256xf32>
    %357 = arith.select %355, %351, %356 : vector<16x256xi1>, vector<16x256xf32>
    %c32_314 = arith.constant 32 : index
    %c0_315 = arith.constant 0 : index
    %358 = vector.load %arg23[%c32_314, %c0_315] : memref<144x256xf32, #tpu.memory_space<vmem>>, vector<16x256xf32>
    tpu.vector_store %arg23[%c32_314, %c0_315], %357 {strides = array<i32>} : memref<144x256xf32, #tpu.memory_space<vmem>>, vector<16x256xf32>,
    %c0_316 = arith.constant 0 : index
    %c127_317 = arith.constant 127 : index
    %359 = vector.load %arg21[%c0_316, %c127_317] : memref<16x512xf32, #tpu.memory_space<vmem>>, vector<16x256xf32>
    %c1_i32_318 = arith.constant 1 : i32
    %360 = vector.broadcast %c1_i32_318 : i32 to vector<1x256xi32>
    %361 = arith.cmpi sge, %16, %360 : vector<1x256xi32>
    %cst_319 = arith.constant 0.000000e+00 : f32
    %362 = vector.shape_cast %361 : vector<1x256xi1> to vector<1x256xi1>
    %363 = vector.broadcast %362 : vector<1x256xi1> to vector<16x256xi1>
    %364 = vector.broadcast %cst_319 : f32 to vector<16x256xf32>
    %365 = arith.select %363, %359, %364 : vector<16x256xi1>, vector<16x256xf32>
    %c48_320 = arith.constant 48 : index
    %c0_321 = arith.constant 0 : index
    %366 = vector.load %arg23[%c48_320, %c0_321] : memref<144x256xf32, #tpu.memory_space<vmem>>, vector<16x256xf32>
    tpu.vector_store %arg23[%c48_320, %c0_321], %365 {strides = array<i32>} : memref<144x256xf32, #tpu.memory_space<vmem>>, vector<16x256xf32>,
    %c0_322 = arith.constant 0 : index
    %c128_323 = arith.constant 128 : index
    %367 = vector.load %arg21[%c0_322, %c128_323] : memref<16x512xf32, #tpu.memory_space<vmem>>, vector<16x256xf32>
    %c64_324 = arith.constant 64 : index
    %c0_325 = arith.constant 0 : index
    %368 = vector.load %arg23[%c64_324, %c0_325] : memref<144x256xf32, #tpu.memory_space<vmem>>, vector<16x256xf32>
    tpu.vector_store %arg23[%c64_324, %c0_325], %367 {strides = array<i32>} : memref<144x256xf32, #tpu.memory_space<vmem>>, vector<16x256xf32>,
    %c0_326 = arith.constant 0 : index
    %c129_327 = arith.constant 129 : index
    %369 = vector.load %arg21[%c0_326, %c129_327] : memref<16x512xf32, #tpu.memory_space<vmem>>, vector<16x256xf32>
    %c14_i32_328 = arith.constant 14 : i32
    %370 = vector.broadcast %c14_i32_328 : i32 to vector<1x256xi32>
    %371 = arith.cmpi sle, %16, %370 : vector<1x256xi32>
    %cst_329 = arith.constant 0.000000e+00 : f32
    %372 = vector.shape_cast %371 : vector<1x256xi1> to vector<1x256xi1>
    %373 = vector.broadcast %372 : vector<1x256xi1> to vector<16x256xi1>
    %374 = vector.broadcast %cst_329 : f32 to vector<16x256xf32>
    %375 = arith.select %373, %369, %374 : vector<16x256xi1>, vector<16x256xf32>
    %c80_330 = arith.constant 80 : index
    %c0_331 = arith.constant 0 : index
    %376 = vector.load %arg23[%c80_330, %c0_331] : memref<144x256xf32, #tpu.memory_space<vmem>>, vector<16x256xf32>
    tpu.vector_store %arg23[%c80_330, %c0_331], %375 {strides = array<i32>} : memref<144x256xf32, #tpu.memory_space<vmem>>, vector<16x256xf32>,
    %c0_332 = arith.constant 0 : index
    %c143_333 = arith.constant 143 : index
    %377 = vector.load %arg21[%c0_332, %c143_333] : memref<16x512xf32, #tpu.memory_space<vmem>>, vector<16x256xf32>
    %c1_i32_334 = arith.constant 1 : i32
    %378 = vector.broadcast %c1_i32_334 : i32 to vector<1x256xi32>
    %379 = arith.cmpi sge, %16, %378 : vector<1x256xi32>
    %cst_335 = arith.constant 0.000000e+00 : f32
    %380 = vector.shape_cast %379 : vector<1x256xi1> to vector<1x256xi1>
    %381 = vector.broadcast %380 : vector<1x256xi1> to vector<16x256xi1>
    %382 = vector.broadcast %cst_335 : f32 to vector<16x256xf32>
    %383 = arith.select %381, %377, %382 : vector<16x256xi1>, vector<16x256xf32>
    %c96_336 = arith.constant 96 : index
    %c0_337 = arith.constant 0 : index
    %384 = vector.load %arg23[%c96_336, %c0_337] : memref<144x256xf32, #tpu.memory_space<vmem>>, vector<16x256xf32>
    tpu.vector_store %arg23[%c96_336, %c0_337], %383 {strides = array<i32>} : memref<144x256xf32, #tpu.memory_space<vmem>>, vector<16x256xf32>,
    %c0_338 = arith.constant 0 : index
    %c144_339 = arith.constant 144 : index
    %385 = vector.load %arg21[%c0_338, %c144_339] : memref<16x512xf32, #tpu.memory_space<vmem>>, vector<16x256xf32>
    %c112_340 = arith.constant 112 : index
    %c0_341 = arith.constant 0 : index
    %386 = vector.load %arg23[%c112_340, %c0_341] : memref<144x256xf32, #tpu.memory_space<vmem>>, vector<16x256xf32>
    tpu.vector_store %arg23[%c112_340, %c0_341], %385 {strides = array<i32>} : memref<144x256xf32, #tpu.memory_space<vmem>>, vector<16x256xf32>,
    %c0_342 = arith.constant 0 : index
    %c145_343 = arith.constant 145 : index
    %387 = vector.load %arg21[%c0_342, %c145_343] : memref<16x512xf32, #tpu.memory_space<vmem>>, vector<16x256xf32>
    %c14_i32_344 = arith.constant 14 : i32
    %388 = vector.broadcast %c14_i32_344 : i32 to vector<1x256xi32>
    %389 = arith.cmpi sle, %16, %388 : vector<1x256xi32>
    %cst_345 = arith.constant 0.000000e+00 : f32
    %390 = vector.shape_cast %389 : vector<1x256xi1> to vector<1x256xi1>
    %391 = vector.broadcast %390 : vector<1x256xi1> to vector<16x256xi1>
    %392 = vector.broadcast %cst_345 : f32 to vector<16x256xf32>
    %393 = arith.select %391, %387, %392 : vector<16x256xi1>, vector<16x256xf32>
    %c128_346 = arith.constant 128 : index
    %c0_347 = arith.constant 0 : index
    %394 = vector.load %arg23[%c128_346, %c0_347] : memref<144x256xf32, #tpu.memory_space<vmem>>, vector<16x256xf32>
    tpu.vector_store %arg23[%c128_346, %c0_347], %393 {strides = array<i32>} : memref<144x256xf32, #tpu.memory_space<vmem>>, vector<16x256xf32>,
    %c0_348 = arith.constant 0 : index
    %c0_349 = arith.constant 0 : index
    %395 = vector.load %arg8[%c0_348, %c0_349] : memref<16x144xf32, #tpu.memory_space<vmem>>, vector<16x144xf32>
    %c0_350 = arith.constant 0 : index
    %c0_351 = arith.constant 0 : index
    %396 = vector.load %arg23[%c0_350, %c0_351] : memref<144x256xf32, #tpu.memory_space<vmem>>, vector<144x256xf32>
    %cst_352 = arith.constant dense<0.000000e+00> : vector<16x256xf32>
    %397 = tpu.matmul %395, %396, %cst_352 {dimension_numbers = #tpu.dot_dimension_numbers<[1], [0], [0], [1], [0, 0, 1, 1], [], []>} : vector<16x144xf32>, vector<144x256xf32>, vector<16x256xf32> -> vector<16x256xf32>
    %c0_353 = arith.constant 0 : index
    %c0_354 = arith.constant 0 : index
    %398 = vector.load %arg16[%c0_353, %c0_354] : memref<16x1xf32, #tpu.memory_space<vmem>>, vector<16x1xf32>
    %399 = vector.broadcast %398 : vector<16x1xf32> to vector<16x256xf32>
    %400 = arith.addf %397, %399 : vector<16x256xf32>
    %cst_355 = arith.constant 0.000000e+00 : f32
    %401 = vector.broadcast %cst_355 : f32 to vector<16x256xf32>
    %402 = arith.maximumf %400, %401 : vector<16x256xf32>
    %cst_356 = arith.constant 0.000000e+00 : f32
    %403 = vector.broadcast %cst_356 : f32 to vector<16x512xf32>
    %c0_357 = arith.constant 0 : index
    %c0_358 = arith.constant 0 : index
    %404 = vector.load %arg22[%c0_357, %c0_358] : memref<16x512xf32, #tpu.memory_space<vmem>>, vector<16x512xf32>
    tpu.vector_store %arg22[%c0_357, %c0_358], %403 {strides = array<i32>} : memref<16x512xf32, #tpu.memory_space<vmem>>, vector<16x512xf32>,
    %c0_359 = arith.constant 0 : index
    %c128_360 = arith.constant 128 : index
    %405 = vector.load %arg22[%c0_359, %c128_360] : memref<16x512xf32, #tpu.memory_space<vmem>>, vector<16x256xf32>
    tpu.vector_store %arg22[%c0_359, %c128_360], %402 {strides = array<i32>} : memref<16x512xf32, #tpu.memory_space<vmem>>, vector<16x256xf32>,
    %c0_361 = arith.constant 0 : index
    %c111_362 = arith.constant 111 : index
    %406 = vector.load %arg22[%c0_361, %c111_362] : memref<16x512xf32, #tpu.memory_space<vmem>>, vector<16x256xf32>
    %c1_i32_363 = arith.constant 1 : i32
    %407 = vector.broadcast %c1_i32_363 : i32 to vector<1x256xi32>
    %408 = arith.cmpi sge, %16, %407 : vector<1x256xi32>
    %cst_364 = arith.constant 0.000000e+00 : f32
    %409 = vector.shape_cast %408 : vector<1x256xi1> to vector<1x256xi1>
    %410 = vector.broadcast %409 : vector<1x256xi1> to vector<16x256xi1>
    %411 = vector.broadcast %cst_364 : f32 to vector<16x256xf32>
    %412 = arith.select %410, %406, %411 : vector<16x256xi1>, vector<16x256xf32>
    %c0_365 = arith.constant 0 : index
    %c0_366 = arith.constant 0 : index
    %413 = vector.load %arg23[%c0_365, %c0_366] : memref<144x256xf32, #tpu.memory_space<vmem>>, vector<16x256xf32>
    tpu.vector_store %arg23[%c0_365, %c0_366], %412 {strides = array<i32>} : memref<144x256xf32, #tpu.memory_space<vmem>>, vector<16x256xf32>,
    %c0_367 = arith.constant 0 : index
    %c112_368 = arith.constant 112 : index
    %414 = vector.load %arg22[%c0_367, %c112_368] : memref<16x512xf32, #tpu.memory_space<vmem>>, vector<16x256xf32>
    %c16_369 = arith.constant 16 : index
    %c0_370 = arith.constant 0 : index
    %415 = vector.load %arg23[%c16_369, %c0_370] : memref<144x256xf32, #tpu.memory_space<vmem>>, vector<16x256xf32>
    tpu.vector_store %arg23[%c16_369, %c0_370], %414 {strides = array<i32>} : memref<144x256xf32, #tpu.memory_space<vmem>>, vector<16x256xf32>,
    %c0_371 = arith.constant 0 : index
    %c113_372 = arith.constant 113 : index
    %416 = vector.load %arg22[%c0_371, %c113_372] : memref<16x512xf32, #tpu.memory_space<vmem>>, vector<16x256xf32>
    %c14_i32_373 = arith.constant 14 : i32
    %417 = vector.broadcast %c14_i32_373 : i32 to vector<1x256xi32>
    %418 = arith.cmpi sle, %16, %417 : vector<1x256xi32>
    %cst_374 = arith.constant 0.000000e+00 : f32
    %419 = vector.shape_cast %418 : vector<1x256xi1> to vector<1x256xi1>
    %420 = vector.broadcast %419 : vector<1x256xi1> to vector<16x256xi1>
    %421 = vector.broadcast %cst_374 : f32 to vector<16x256xf32>
    %422 = arith.select %420, %416, %421 : vector<16x256xi1>, vector<16x256xf32>
    %c32_375 = arith.constant 32 : index
    %c0_376 = arith.constant 0 : index
    %423 = vector.load %arg23[%c32_375, %c0_376] : memref<144x256xf32, #tpu.memory_space<vmem>>, vector<16x256xf32>
    tpu.vector_store %arg23[%c32_375, %c0_376], %422 {strides = array<i32>} : memref<144x256xf32, #tpu.memory_space<vmem>>, vector<16x256xf32>,
    %c0_377 = arith.constant 0 : index
    %c127_378 = arith.constant 127 : index
    %424 = vector.load %arg22[%c0_377, %c127_378] : memref<16x512xf32, #tpu.memory_space<vmem>>, vector<16x256xf32>
    %c1_i32_379 = arith.constant 1 : i32
    %425 = vector.broadcast %c1_i32_379 : i32 to vector<1x256xi32>
    %426 = arith.cmpi sge, %16, %425 : vector<1x256xi32>
    %cst_380 = arith.constant 0.000000e+00 : f32
    %427 = vector.shape_cast %426 : vector<1x256xi1> to vector<1x256xi1>
    %428 = vector.broadcast %427 : vector<1x256xi1> to vector<16x256xi1>
    %429 = vector.broadcast %cst_380 : f32 to vector<16x256xf32>
    %430 = arith.select %428, %424, %429 : vector<16x256xi1>, vector<16x256xf32>
    %c48_381 = arith.constant 48 : index
    %c0_382 = arith.constant 0 : index
    %431 = vector.load %arg23[%c48_381, %c0_382] : memref<144x256xf32, #tpu.memory_space<vmem>>, vector<16x256xf32>
    tpu.vector_store %arg23[%c48_381, %c0_382], %430 {strides = array<i32>} : memref<144x256xf32, #tpu.memory_space<vmem>>, vector<16x256xf32>,
    %c0_383 = arith.constant 0 : index
    %c128_384 = arith.constant 128 : index
    %432 = vector.load %arg22[%c0_383, %c128_384] : memref<16x512xf32, #tpu.memory_space<vmem>>, vector<16x256xf32>
    %c64_385 = arith.constant 64 : index
    %c0_386 = arith.constant 0 : index
    %433 = vector.load %arg23[%c64_385, %c0_386] : memref<144x256xf32, #tpu.memory_space<vmem>>, vector<16x256xf32>
    tpu.vector_store %arg23[%c64_385, %c0_386], %432 {strides = array<i32>} : memref<144x256xf32, #tpu.memory_space<vmem>>, vector<16x256xf32>,
    %c0_387 = arith.constant 0 : index
    %c129_388 = arith.constant 129 : index
    %434 = vector.load %arg22[%c0_387, %c129_388] : memref<16x512xf32, #tpu.memory_space<vmem>>, vector<16x256xf32>
    %c14_i32_389 = arith.constant 14 : i32
    %435 = vector.broadcast %c14_i32_389 : i32 to vector<1x256xi32>
    %436 = arith.cmpi sle, %16, %435 : vector<1x256xi32>
    %cst_390 = arith.constant 0.000000e+00 : f32
    %437 = vector.shape_cast %436 : vector<1x256xi1> to vector<1x256xi1>
    %438 = vector.broadcast %437 : vector<1x256xi1> to vector<16x256xi1>
    %439 = vector.broadcast %cst_390 : f32 to vector<16x256xf32>
    %440 = arith.select %438, %434, %439 : vector<16x256xi1>, vector<16x256xf32>
    %c80_391 = arith.constant 80 : index
    %c0_392 = arith.constant 0 : index
    %441 = vector.load %arg23[%c80_391, %c0_392] : memref<144x256xf32, #tpu.memory_space<vmem>>, vector<16x256xf32>
    tpu.vector_store %arg23[%c80_391, %c0_392], %440 {strides = array<i32>} : memref<144x256xf32, #tpu.memory_space<vmem>>, vector<16x256xf32>,
    %c0_393 = arith.constant 0 : index
    %c143_394 = arith.constant 143 : index
    %442 = vector.load %arg22[%c0_393, %c143_394] : memref<16x512xf32, #tpu.memory_space<vmem>>, vector<16x256xf32>
    %c1_i32_395 = arith.constant 1 : i32
    %443 = vector.broadcast %c1_i32_395 : i32 to vector<1x256xi32>
    %444 = arith.cmpi sge, %16, %443 : vector<1x256xi32>
    %cst_396 = arith.constant 0.000000e+00 : f32
    %445 = vector.shape_cast %444 : vector<1x256xi1> to vector<1x256xi1>
    %446 = vector.broadcast %445 : vector<1x256xi1> to vector<16x256xi1>
    %447 = vector.broadcast %cst_396 : f32 to vector<16x256xf32>
    %448 = arith.select %446, %442, %447 : vector<16x256xi1>, vector<16x256xf32>
    %c96_397 = arith.constant 96 : index
    %c0_398 = arith.constant 0 : index
    %449 = vector.load %arg23[%c96_397, %c0_398] : memref<144x256xf32, #tpu.memory_space<vmem>>, vector<16x256xf32>
    tpu.vector_store %arg23[%c96_397, %c0_398], %448 {strides = array<i32>} : memref<144x256xf32, #tpu.memory_space<vmem>>, vector<16x256xf32>,
    %c0_399 = arith.constant 0 : index
    %c144_400 = arith.constant 144 : index
    %450 = vector.load %arg22[%c0_399, %c144_400] : memref<16x512xf32, #tpu.memory_space<vmem>>, vector<16x256xf32>
    %c112_401 = arith.constant 112 : index
    %c0_402 = arith.constant 0 : index
    %451 = vector.load %arg23[%c112_401, %c0_402] : memref<144x256xf32, #tpu.memory_space<vmem>>, vector<16x256xf32>
    tpu.vector_store %arg23[%c112_401, %c0_402], %450 {strides = array<i32>} : memref<144x256xf32, #tpu.memory_space<vmem>>, vector<16x256xf32>,
    %c0_403 = arith.constant 0 : index
    %c145_404 = arith.constant 145 : index
    %452 = vector.load %arg22[%c0_403, %c145_404] : memref<16x512xf32, #tpu.memory_space<vmem>>, vector<16x256xf32>
    %c14_i32_405 = arith.constant 14 : i32
    %453 = vector.broadcast %c14_i32_405 : i32 to vector<1x256xi32>
    %454 = arith.cmpi sle, %16, %453 : vector<1x256xi32>
    %cst_406 = arith.constant 0.000000e+00 : f32
    %455 = vector.shape_cast %454 : vector<1x256xi1> to vector<1x256xi1>
    %456 = vector.broadcast %455 : vector<1x256xi1> to vector<16x256xi1>
    %457 = vector.broadcast %cst_406 : f32 to vector<16x256xf32>
    %458 = arith.select %456, %452, %457 : vector<16x256xi1>, vector<16x256xf32>
    %c128_407 = arith.constant 128 : index
    %c0_408 = arith.constant 0 : index
    %459 = vector.load %arg23[%c128_407, %c0_408] : memref<144x256xf32, #tpu.memory_space<vmem>>, vector<16x256xf32>
    tpu.vector_store %arg23[%c128_407, %c0_408], %458 {strides = array<i32>} : memref<144x256xf32, #tpu.memory_space<vmem>>, vector<16x256xf32>,
    %c0_409 = arith.constant 0 : index
    %c0_410 = arith.constant 0 : index
    %460 = vector.load %arg9[%c0_409, %c0_410] : memref<1x144xf32, #tpu.memory_space<vmem>>, vector<1x144xf32>
    %c0_411 = arith.constant 0 : index
    %c0_412 = arith.constant 0 : index
    %461 = vector.load %arg23[%c0_411, %c0_412] : memref<144x256xf32, #tpu.memory_space<vmem>>, vector<144x256xf32>
    %cst_413 = arith.constant dense<0.000000e+00> : vector<1x256xf32>
    %462 = tpu.matmul %460, %461, %cst_413 {dimension_numbers = #tpu.dot_dimension_numbers<[1], [0], [0], [1], [0, 0, 1, 1], [], []>} : vector<1x144xf32>, vector<144x256xf32>, vector<1x256xf32> -> vector<1x256xf32>
    %c0_414 = arith.constant 0 : index
    %c0_415 = arith.constant 0 : index
    %463 = vector.load %arg17[%c0_414, %c0_415] : memref<1x1xf32, #tpu.memory_space<vmem>>, vector<1x1xf32>
    %464 = vector.broadcast %463 : vector<1x1xf32> to vector<1x256xf32>
    %465 = arith.addf %462, %464 : vector<1x256xf32>
    %cst_416 = arith.constant 0.000000e+00 : f32
    %466 = vector.broadcast %cst_416 : f32 to vector<1x256xf32>
    %467 = arith.subf %466, %465 : vector<1x256xf32>
    %468 = math.exp %467 : vector<1x256xf32>
    %cst_417 = arith.constant 1.000000e+00 : f32
    %469 = vector.broadcast %cst_417 : f32 to vector<1x256xf32>
    %470 = arith.addf %469, %468 : vector<1x256xf32>
    %cst_418 = arith.constant 1.000000e+00 : f32
    %471 = vector.broadcast %cst_418 : f32 to vector<1x256xf32>
    %472 = arith.divf %471, %470 : vector<1x256xf32>
    %c0_419 = arith.constant 0 : index
    %c0_420 = arith.constant 0 : index
    %c0_421 = arith.constant 0 : index
    %473 = vector.load %arg20[%c0_419, %c0_420, %c0_421] : memref<1x1x256xf32, #tpu.memory_space<vmem>>, vector<1x1x256xf32>
    %474 = vector.shape_cast %473 : vector<1x1x256xf32> to vector<1x256xf32>
    %475 = vector.shape_cast %472 : vector<1x256xf32> to vector<1x1x256xf32>
    tpu.vector_store %arg20[%c0_419, %c0_420, %c0_421], %475 {strides = array<i32>} : memref<1x1x256xf32, #tpu.memory_space<vmem>>, vector<1x1x256xf32>,
    return
  }
  func.func @transform_0(%arg0: i32) -> (i32, i32, i32) {
    %c0_i32 = arith.constant 0 : i32
    %c0_i32_0 = arith.constant 0 : i32
    %c0_i32_1 = arith.constant 0 : i32
    return %arg0, %c0_i32, %c0_i32_0 : i32, i32, i32
  }
  func.func @transform_1(%arg0: i32) -> (i32, i32) {
    %c0_i32 = arith.constant 0 : i32
    %c0_i32_0 = arith.constant 0 : i32
    %c0_i32_1 = arith.constant 0 : i32
    return %c0_i32, %c0_i32_0 : i32, i32
  }
  func.func @transform_2(%arg0: i32) -> (i32, i32) {
    %c0_i32 = arith.constant 0 : i32
    %c0_i32_0 = arith.constant 0 : i32
    %c0_i32_1 = arith.constant 0 : i32
    return %c0_i32, %c0_i32_0 : i32, i32
  }
  func.func @transform_3(%arg0: i32) -> (i32, i32) {
    %c0_i32 = arith.constant 0 : i32
    %c0_i32_0 = arith.constant 0 : i32
    %c0_i32_1 = arith.constant 0 : i32
    return %c0_i32, %c0_i32_0 : i32, i32
  }
  func.func @transform_4(%arg0: i32) -> (i32, i32) {
    %c0_i32 = arith.constant 0 : i32
    %c0_i32_0 = arith.constant 0 : i32
    %c0_i32_1 = arith.constant 0 : i32
    return %c0_i32, %c0_i32_0 : i32, i32
  }
  func.func @transform_5(%arg0: i32) -> (i32, i32) {
    %c0_i32 = arith.constant 0 : i32
    %c0_i32_0 = arith.constant 0 : i32
    %c0_i32_1 = arith.constant 0 : i32
    return %c0_i32, %c0_i32_0 : i32, i32
  }
  func.func @transform_6(%arg0: i32) -> (i32, i32) {
    %c0_i32 = arith.constant 0 : i32
    %c0_i32_0 = arith.constant 0 : i32
    %c0_i32_1 = arith.constant 0 : i32
    return %c0_i32, %c0_i32_0 : i32, i32
  }
  func.func @transform_7(%arg0: i32) -> (i32, i32) {
    %c0_i32 = arith.constant 0 : i32
    %c0_i32_0 = arith.constant 0 : i32
    %c0_i32_1 = arith.constant 0 : i32
    return %c0_i32, %c0_i32_0 : i32, i32
  }
  func.func @transform_8(%arg0: i32) -> (i32, i32) {
    %c0_i32 = arith.constant 0 : i32
    %c0_i32_0 = arith.constant 0 : i32
    %c0_i32_1 = arith.constant 0 : i32
    return %c0_i32, %c0_i32_0 : i32, i32
  }
  func.func @transform_9(%arg0: i32) -> (i32, i32) {
    %c0_i32 = arith.constant 0 : i32
    %c0_i32_0 = arith.constant 0 : i32
    %c0_i32_1 = arith.constant 0 : i32
    return %c0_i32, %c0_i32_0 : i32, i32
  }
  func.func @transform_10(%arg0: i32) -> (i32, i32) {
    %c0_i32 = arith.constant 0 : i32
    %c0_i32_0 = arith.constant 0 : i32
    %c0_i32_1 = arith.constant 0 : i32
    return %c0_i32, %c0_i32_0 : i32, i32
  }
  func.func @transform_11(%arg0: i32) -> (i32, i32) {
    %c0_i32 = arith.constant 0 : i32
    %c0_i32_0 = arith.constant 0 : i32
    %c0_i32_1 = arith.constant 0 : i32
    return %c0_i32, %c0_i32_0 : i32, i32
  }
  func.func @transform_12(%arg0: i32) -> (i32, i32) {
    %c0_i32 = arith.constant 0 : i32
    %c0_i32_0 = arith.constant 0 : i32
    %c0_i32_1 = arith.constant 0 : i32
    return %c0_i32, %c0_i32_0 : i32, i32
  }
  func.func @transform_13(%arg0: i32) -> (i32, i32) {
    %c0_i32 = arith.constant 0 : i32
    %c0_i32_0 = arith.constant 0 : i32
    %c0_i32_1 = arith.constant 0 : i32
    return %c0_i32, %c0_i32_0 : i32, i32
  }
  func.func @transform_14(%arg0: i32) -> (i32, i32) {
    %c0_i32 = arith.constant 0 : i32
    %c0_i32_0 = arith.constant 0 : i32
    %c0_i32_1 = arith.constant 0 : i32
    return %c0_i32, %c0_i32_0 : i32, i32
  }
  func.func @transform_15(%arg0: i32) -> (i32, i32) {
    %c0_i32 = arith.constant 0 : i32
    %c0_i32_0 = arith.constant 0 : i32
    %c0_i32_1 = arith.constant 0 : i32
    return %c0_i32, %c0_i32_0 : i32, i32
  }
  func.func @transform_16(%arg0: i32) -> (i32, i32) {
    %c0_i32 = arith.constant 0 : i32
    %c0_i32_0 = arith.constant 0 : i32
    %c0_i32_1 = arith.constant 0 : i32
    return %c0_i32, %c0_i32_0 : i32, i32
  }
  func.func @transform_17(%arg0: i32) -> (i32, i32, i32) {
    %c0_i32 = arith.constant 0 : i32
    %c0_i32_0 = arith.constant 0 : i32
    %c0_i32_1 = arith.constant 0 : i32
    %c0_i32_2 = arith.constant 0 : i32
    return %c0_i32, %c0_i32_0, %c0_i32_1 : i32, i32, i32
  }
  func.func @transform_18(%arg0: i32) -> (i32, i32, i32) {
    %c0_i32 = arith.constant 0 : i32
    %c0_i32_0 = arith.constant 0 : i32
    %c0_i32_1 = arith.constant 0 : i32
    %c0_i32_2 = arith.constant 0 : i32
    return %c0_i32, %c0_i32_0, %c0_i32_1 : i32, i32, i32
  }
  func.func @transform_19(%arg0: i32) -> (i32, i32, i32) {
    %c0_i32 = arith.constant 0 : i32
    %c0_i32_0 = arith.constant 0 : i32
    %c0_i32_1 = arith.constant 0 : i32
    return %arg0, %c0_i32, %c0_i32_0 : i32, i32, i32
  }
}

</mosaic_0001>

<llo_original>
// kernel: forward.1
$region0: #{forward.1}
  #allocation0 [shape = 'u32[]', space=smem, size = 0x4, offset = 0x4, fixed_abs, tag = 'smem constant byte address 0x4 - core index']
  #allocation1 [shape = 'u32[144,128]{1,0:T(1,128)}', space=vmem, size = 0x12000, scoped, tag = 'internal scratch']
  #allocation2 [shape = 'f32[16,512]{1,0:T(8,128)}', space=vmem, size = 0x8000, scoped, tag = 'scratch operand']
  #allocation3 [shape = 'f32[16,512]{1,0:T(8,128)}', space=vmem, size = 0x8000, scoped, tag = 'scratch operand']
  #allocation4 [shape = 'f32[144,256]{1,0:T(8,128)}', space=vmem, size = 0x24000, scoped, tag = 'scratch operand']
  #allocation5 [shape = 'f32[1,1]{1,0:T(1,128)S(1)}', space=vmem, size = 0x200, scoped, tag = 'scoped memory for forward.1']
  %s0 = inlined_call_operand.vmem [shape: f32[2,1,256], index: 0, kind: input, shape index: {}]
  %s1 = inlined_call_operand.vmem [shape: f32[16,9], index: 1, kind: input, shape index: {}]
  %s2 = inlined_call_operand.vmem [shape: f32[16,144], index: 2, kind: input, shape index: {}]
  %s3 = inlined_call_operand.vmem [shape: f32[16,64], index: 3, kind: input, shape index: {}]
  %s4 = inlined_call_operand.vmem [shape: f32[4,144], index: 4, kind: input, shape index: {}]
  %s5 = inlined_call_operand.vmem [shape: f32[16,36], index: 5, kind: input, shape index: {}]
  %s6 = inlined_call_operand.vmem [shape: f32[16,64], index: 6, kind: input, shape index: {}]
  %s7 = inlined_call_operand.vmem [shape: f32[16,144], index: 7, kind: input, shape index: {}]
  %s8 = inlined_call_operand.vmem [shape: f32[1,144], index: 8, kind: input, shape index: {}]
  %s9 = inlined_call_operand.vmem [shape: f32[16,1], index: 9, kind: input, shape index: {}]
  %s10 = inlined_call_operand.vmem [shape: f32[16,1], index: 10, kind: input, shape index: {}]
  %s11 = inlined_call_operand.vmem [shape: f32[16,1], index: 11, kind: input, shape index: {}]
  %s12 = inlined_call_operand.vmem [shape: f32[4,1], index: 12, kind: input, shape index: {}]
  %s13 = inlined_call_operand.vmem [shape: f32[16,1], index: 13, kind: input, shape index: {}]
  %s14 = inlined_call_operand.vmem [shape: f32[16,1], index: 14, kind: input, shape index: {}]
  %s15 = inlined_call_operand.vmem [shape: f32[16,1], index: 15, kind: input, shape index: {}]
  %s16 = inlined_call_operand.<no memory space> [shape: f32[1,1], index: 16, kind: input, shape index: {}]
  %s17 = inlined_call_operand.vmem [shape: f32[4,256,64], index: 17, kind: input, shape index: {}]
  %s18 = inlined_call_operand.vmem [shape: f32[4,64,256], index: 18, kind: input, shape index: {}]
  %s19 = inlined_call_operand.vmem [shape: f32[2,1,256], index: 19, kind: output, shape index: {}]
  %s20 = sld [smem:[#allocation0]]
  $region109: #{forward.1} parent=0
    _
  %s22 = ssub.s32 1, %s20
  %s23 = scalar_select 0, %s22, %s20
  %v24 = vstv %s16
  %25 = vst [vmem:[#allocation5] sm:$0x1] %v24
  loop: start=0, step=1, limit=4
  $region2: #{forward.1} parent=0 // loop_pre_header
    _
  $region3: #{forward.1} parent=0 // loop_header
    %s27 = sphi 0, %s31
    %p28 = scmp.ge.s32.totalorder %s27, 4
    %s37 = sphi 0, %s39
    %s40 = sphi 0, %s37
    %s41 = sphi 0, %s40
    %s57 = sphi 0, %s41
    %s61 = sphi 0, %s61
    %s63 = sphi 0, %s61
    %s64 = sphi 0, %s63
    %s78 = sphi 0, %s64
    %s82 = sphi 0, %s82
    %s84 = sphi 0, %s82
    %s85 = sphi 0, %s84
    %s99 = sphi 0, %s85
    %s103 = sphi 0, %s103
    %s105 = sphi 0, %s103
    %s106 = sphi 0, %s105
    %s120 = sphi 0, %s106
    %s124 = sphi 0, %s124
    %s126 = sphi 0, %s124
    %s127 = sphi 0, %s126
    %s141 = sphi 0, %s127
    %s145 = sphi 0, %s145
    %s147 = sphi 0, %s145
    %s148 = sphi 0, %s147
    %s162 = sphi 0, %s148
    %s166 = sphi 0, %s166
    %s168 = sphi 0, %s166
    %s169 = sphi 0, %s168
    %s183 = sphi 0, %s169
    %s187 = sphi 0, %s187
    %s189 = sphi 0, %s187
    %s190 = sphi 0, %s189
    %s204 = sphi 0, %s190
    %s208 = sphi 0, %s208
    %s210 = sphi 0, %s208
    %s211 = sphi 0, %s210
    %s225 = sphi 0, %s211
    %s229 = sphi 0, %s229
    %s231 = sphi 0, %s229
    %s232 = sphi 0, %s231
    %s246 = sphi 0, %s232
    %s250 = sphi 0, %s250
    %s252 = sphi 0, %s250
    %s253 = sphi 0, %s252
    %s267 = sphi 0, %s253
    %s271 = sphi 0, %s271
    %s273 = sphi 0, %s271
    %s274 = sphi 0, %s273
    %s288 = sphi 0, %s274
    %s292 = sphi 0, %s292
    %s294 = sphi 0, %s292
    %s295 = sphi 0, %s294
    %s309 = sphi 0, %s295
    %s313 = sphi 0, %s313
    %s315 = sphi 0, %s313
    %s316 = sphi 0, %s315
    %s330 = sphi 0, %s316
    %s334 = sphi 0, %s334
    %s336 = sphi 0, %s334
    %s337 = sphi 0, %s336
    %s351 = sphi 0, %s337
    %s355 = sphi 0, %s355
    %s357 = sphi 0, %s355
    %s358 = sphi 0, %s357
    %s372 = sphi 0, %s358
    %s376 = sphi 0, %s376
    %s378 = sphi 0, %s376
    %s379 = sphi 0, %s378
    %s393 = sphi 0, %s379
    %s397 = sphi 0, %s397
    %s399 = sphi 0, %s397
    %s400 = sphi 0, %s399
    %s414 = sphi 0, %s400
    %s418 = sphi 0, %s418
    %s420 = sphi 0, %s418
    %s421 = sphi 0, %s420
    %s435 = sphi 0, %s421
    %s441 = sphi 0, %s443
    %s444 = sphi 0, %s441
    %s445 = sphi 0, %s444
    %s461 = sphi 0, %s445
  $region4: #{forward.1} parent=0 // loop_header_branch
    %30 = sbr.rel (%p28) target = $region8
  $region5: #{forward.1} parent=0 // loop_body
    %s32 = ssub.s32 %s27, 1
    %s33 = ssub.s32 %s27, 2
    %s34 = sadd.s32 %s27, 1
    %s35 = ssub.s32 %s27, %s34
    %p36 = scmp.eq.s32.totalorder %s35, 0
    %s38 = sadd.s32 %s37, 1
    %s39 = scalar_select %p36, %s37, %s38
    %p42 = pneg %p36
    %p43 = scmp.eq.s32.totalorder %s27, 1
    %p44 = por %p42, %p43
    %p45 = scmp.ne.s32.totalorder %s37, %s40
    %p46 = scmp.eq.s32.totalorder %s27, 0
    %p47 = por %p45, %p46
    %p48 = scmp.ne.s32.totalorder %s37, %s40
    %p49 = scmp.eq.s32.totalorder %s32, 1
    %p50 = por %p48, %p49
    %p51 = scmp.ne.s32.totalorder %s40, %s41
    %p52 = scmp.eq.s32.totalorder %s32, 0
    %p53 = por %p51, %p52
    %p54 = scmp.ne.s32.totalorder %s40, %s41
    %p55 = scmp.eq.s32.totalorder %s33, 1
    %p56 = por %p54, %p55
    %p58 = scmp.ne.s32.totalorder %s41, %s57
    %p59 = scmp.eq.s32.totalorder %s33, 0
    %p60 = por %p58, %p59
    %s62 = sadd.s32 %s61, 1
    %p65 = scmp.eq.s32.totalorder %s27, 1
    %p66 = scmp.ne.s32.totalorder %s61, %s63
    %p67 = scmp.eq.s32.totalorder %s27, 0
    %p68 = por %p66, %p67
    %p69 = scmp.ne.s32.totalorder %s61, %s63
    %p70 = scmp.eq.s32.totalorder %s32, 1
    %p71 = por %p69, %p70
    %p72 = scmp.ne.s32.totalorder %s63, %s64
    %p73 = scmp.eq.s32.totalorder %s32, 0
    %p74 = por %p72, %p73
    %p75 = scmp.ne.s32.totalorder %s63, %s64
    %p76 = scmp.eq.s32.totalorder %s33, 1
    %p77 = por %p75, %p76
    %p79 = scmp.ne.s32.totalorder %s64, %s78
    %p80 = scmp.eq.s32.totalorder %s33, 0
    %p81 = por %p79, %p80
    %s83 = sadd.s32 %s82, 1
    %p86 = scmp.eq.s32.totalorder %s27, 1
    %p87 = scmp.ne.s32.totalorder %s82, %s84
    %p88 = scmp.eq.s32.totalorder %s27, 0
    %p89 = por %p87, %p88
    %p90 = scmp.ne.s32.totalorder %s82, %s84
    %p91 = scmp.eq.s32.totalorder %s32, 1
    %p92 = por %p90, %p91
    %p93 = scmp.ne.s32.totalorder %s84, %s85
    %p94 = scmp.eq.s32.totalorder %s32, 0
    %p95 = por %p93, %p94
    %p96 = scmp.ne.s32.totalorder %s84, %s85
    %p97 = scmp.eq.s32.totalorder %s33, 1
    %p98 = por %p96, %p97
    %p100 = scmp.ne.s32.totalorder %s85, %s99
    %p101 = scmp.eq.s32.totalorder %s33, 0
    %p102 = por %p100, %p101
    %s104 = sadd.s32 %s103, 1
    %p107 = scmp.eq.s32.totalorder %s27, 1
    %p108 = scmp.ne.s32.totalorder %s103, %s105
    %p109 = scmp.eq.s32.totalorder %s27, 0
    %p110 = por %p108, %p109
    %p111 = scmp.ne.s32.totalorder %s103, %s105
    %p112 = scmp.eq.s32.totalorder %s32, 1
    %p113 = por %p111, %p112
    %p114 = scmp.ne.s32.totalorder %s105, %s106
    %p115 = scmp.eq.s32.totalorder %s32, 0
    %p116 = por %p114, %p115
    %p117 = scmp.ne.s32.totalorder %s105, %s106
    %p118 = scmp.eq.s32.totalorder %s33, 1
    %p119 = por %p117, %p118
    %p121 = scmp.ne.s32.totalorder %s106, %s120
    %p122 = scmp.eq.s32.totalorder %s33, 0
    %p123 = por %p121, %p122
    %s125 = sadd.s32 %s124, 1
    %p128 = scmp.eq.s32.totalorder %s27, 1
    %p129 = scmp.ne.s32.totalorder %s124, %s126
    %p130 = scmp.eq.s32.totalorder %s27, 0
    %p131 = por %p129, %p130
    %p132 = scmp.ne.s32.totalorder %s124, %s126
    %p133 = scmp.eq.s32.totalorder %s32, 1
    %p134 = por %p132, %p133
    %p135 = scmp.ne.s32.totalorder %s126, %s127
    %p136 = scmp.eq.s32.totalorder %s32, 0
    %p137 = por %p135, %p136
    %p138 = scmp.ne.s32.totalorder %s126, %s127
    %p139 = scmp.eq.s32.totalorder %s33, 1
    %p140 = por %p138, %p139
    %p142 = scmp.ne.s32.totalorder %s127, %s141
    %p143 = scmp.eq.s32.totalorder %s33, 0
    %p144 = por %p142, %p143
    %s146 = sadd.s32 %s145, 1
    %p149 = scmp.eq.s32.totalorder %s27, 1
    %p150 = scmp.ne.s32.totalorder %s145, %s147
    %p151 = scmp.eq.s32.totalorder %s27, 0
    %p152 = por %p150, %p151
    %p153 = scmp.ne.s32.totalorder %s145, %s147
    %p154 = scmp.eq.s32.totalorder %s32, 1
    %p155 = por %p153, %p154
    %p156 = scmp.ne.s32.totalorder %s147, %s148
    %p157 = scmp.eq.s32.totalorder %s32, 0
    %p158 = por %p156, %p157
    %p159 = scmp.ne.s32.totalorder %s147, %s148
    %p160 = scmp.eq.s32.totalorder %s33, 1
    %p161 = por %p159, %p160
    %p163 = scmp.ne.s32.totalorder %s148, %s162
    %p164 = scmp.eq.s32.totalorder %s33, 0
    %p165 = por %p163, %p164
    %s167 = sadd.s32 %s166, 1
    %p170 = scmp.eq.s32.totalorder %s27, 1
    %p171 = scmp.ne.s32.totalorder %s166, %s168
    %p172 = scmp.eq.s32.totalorder %s27, 0
    %p173 = por %p171, %p172
    %p174 = scmp.ne.s32.totalorder %s166, %s168
    %p175 = scmp.eq.s32.totalorder %s32, 1
    %p176 = por %p174, %p175
    %p177 = scmp.ne.s32.totalorder %s168, %s169
    %p178 = scmp.eq.s32.totalorder %s32, 0
    %p179 = por %p177, %p178
    %p180 = scmp.ne.s32.totalorder %s168, %s169
    %p181 = scmp.eq.s32.totalorder %s33, 1
    %p182 = por %p180, %p181
    %p184 = scmp.ne.s32.totalorder %s169, %s183
    %p185 = scmp.eq.s32.totalorder %s33, 0
    %p186 = por %p184, %p185
    %s188 = sadd.s32 %s187, 1
    %p191 = scmp.eq.s32.totalorder %s27, 1
    %p192 = scmp.ne.s32.totalorder %s187, %s189
    %p193 = scmp.eq.s32.totalorder %s27, 0
    %p194 = por %p192, %p193
    %p195 = scmp.ne.s32.totalorder %s187, %s189
    %p196 = scmp.eq.s32.totalorder %s32, 1
    %p197 = por %p195, %p196
    %p198 = scmp.ne.s32.totalorder %s189, %s190
    %p199 = scmp.eq.s32.totalorder %s32, 0
    %p200 = por %p198, %p199
    %p201 = scmp.ne.s32.totalorder %s189, %s190
    %p202 = scmp.eq.s32.totalorder %s33, 1
    %p203 = por %p201, %p202
    %p205 = scmp.ne.s32.totalorder %s190, %s204
    %p206 = scmp.eq.s32.totalorder %s33, 0
    %p207 = por %p205, %p206
    %s209 = sadd.s32 %s208, 1
    %p212 = scmp.eq.s32.totalorder %s27, 1
    %p213 = scmp.ne.s32.totalorder %s208, %s210
    %p214 = scmp.eq.s32.totalorder %s27, 0
    %p215 = por %p213, %p214
    %p216 = scmp.ne.s32.totalorder %s208, %s210
    %p217 = scmp.eq.s32.totalorder %s32, 1
    %p218 = por %p216, %p217
    %p219 = scmp.ne.s32.totalorder %s210, %s211
    %p220 = scmp.eq.s32.totalorder %s32, 0
    %p221 = por %p219, %p220
    %p222 = scmp.ne.s32.totalorder %s210, %s211
    %p223 = scmp.eq.s32.totalorder %s33, 1
    %p224 = por %p222, %p223
    %p226 = scmp.ne.s32.totalorder %s211, %s225
    %p227 = scmp.eq.s32.totalorder %s33, 0
    %p228 = por %p226, %p227
    %s230 = sadd.s32 %s229, 1
    %p233 = scmp.eq.s32.totalorder %s27, 1
    %p234 = scmp.ne.s32.totalorder %s229, %s231
    %p235 = scmp.eq.s32.totalorder %s27, 0
    %p236 = por %p234, %p235
    %p237 = scmp.ne.s32.totalorder %s229, %s231
    %p238 = scmp.eq.s32.totalorder %s32, 1
    %p239 = por %p237, %p238
    %p240 = scmp.ne.s32.totalorder %s231, %s232
    %p241 = scmp.eq.s32.totalorder %s32, 0
    %p242 = por %p240, %p241
    %p243 = scmp.ne.s32.totalorder %s231, %s232
    %p244 = scmp.eq.s32.totalorder %s33, 1
    %p245 = por %p243, %p244
    %p247 = scmp.ne.s32.totalorder %s232, %s246
    %p248 = scmp.eq.s32.totalorder %s33, 0
    %p249 = por %p247, %p248
    %s251 = sadd.s32 %s250, 1
    %p254 = scmp.eq.s32.totalorder %s27, 1
    %p255 = scmp.ne.s32.totalorder %s250, %s252
    %p256 = scmp.eq.s32.totalorder %s27, 0
    %p257 = por %p255, %p256
    %p258 = scmp.ne.s32.totalorder %s250, %s252
    %p259 = scmp.eq.s32.totalorder %s32, 1
    %p260 = por %p258, %p259
    %p261 = scmp.ne.s32.totalorder %s252, %s253
    %p262 = scmp.eq.s32.totalorder %s32, 0
    %p263 = por %p261, %p262
    %p264 = scmp.ne.s32.totalorder %s252, %s253
    %p265 = scmp.eq.s32.totalorder %s33, 1
    %p266 = por %p264, %p265
    %p268 = scmp.ne.s32.totalorder %s253, %s267
    %p269 = scmp.eq.s32.totalorder %s33, 0
    %p270 = por %p268, %p269
    %s272 = sadd.s32 %s271, 1
    %p275 = scmp.eq.s32.totalorder %s27, 1
    %p276 = scmp.ne.s32.totalorder %s271, %s273
    %p277 = scmp.eq.s32.totalorder %s27, 0
    %p278 = por %p276, %p277
    %p279 = scmp.ne.s32.totalorder %s271, %s273
    %p280 = scmp.eq.s32.totalorder %s32, 1
    %p281 = por %p279, %p280
    %p282 = scmp.ne.s32.totalorder %s273, %s274
    %p283 = scmp.eq.s32.totalorder %s32, 0
    %p284 = por %p282, %p283
    %p285 = scmp.ne.s32.totalorder %s273, %s274
    %p286 = scmp.eq.s32.totalorder %s33, 1
    %p287 = por %p285, %p286
    %p289 = scmp.ne.s32.totalorder %s274, %s288
    %p290 = scmp.eq.s32.totalorder %s33, 0
    %p291 = por %p289, %p290
    %s293 = sadd.s32 %s292, 1
    %p296 = scmp.eq.s32.totalorder %s27, 1
    %p297 = scmp.ne.s32.totalorder %s292, %s294
    %p298 = scmp.eq.s32.totalorder %s27, 0
    %p299 = por %p297, %p298
    %p300 = scmp.ne.s32.totalorder %s292, %s294
    %p301 = scmp.eq.s32.totalorder %s32, 1
    %p302 = por %p300, %p301
    %p303 = scmp.ne.s32.totalorder %s294, %s295
    %p304 = scmp.eq.s32.totalorder %s32, 0
    %p305 = por %p303, %p304
    %p306 = scmp.ne.s32.totalorder %s294, %s295
    %p307 = scmp.eq.s32.totalorder %s33, 1
    %p308 = por %p306, %p307
    %p310 = scmp.ne.s32.totalorder %s295, %s309
    %p311 = scmp.eq.s32.totalorder %s33, 0
    %p312 = por %p310, %p311
    %s314 = sadd.s32 %s313, 1
    %p317 = scmp.eq.s32.totalorder %s27, 1
    %p318 = scmp.ne.s32.totalorder %s313, %s315
    %p319 = scmp.eq.s32.totalorder %s27, 0
    %p320 = por %p318, %p319
    %p321 = scmp.ne.s32.totalorder %s313, %s315
    %p322 = scmp.eq.s32.totalorder %s32, 1
    %p323 = por %p321, %p322
    %p324 = scmp.ne.s32.totalorder %s315, %s316
    %p325 = scmp.eq.s32.totalorder %s32, 0
    %p326 = por %p324, %p325
    %p327 = scmp.ne.s32.totalorder %s315, %s316
    %p328 = scmp.eq.s32.totalorder %s33, 1
    %p329 = por %p327, %p328
    %p331 = scmp.ne.s32.totalorder %s316, %s330
    %p332 = scmp.eq.s32.totalorder %s33, 0
    %p333 = por %p331, %p332
    %s335 = sadd.s32 %s334, 1
    %p338 = scmp.eq.s32.totalorder %s27, 1
    %p339 = scmp.ne.s32.totalorder %s334, %s336
    %p340 = scmp.eq.s32.totalorder %s27, 0
    %p341 = por %p339, %p340
    %p342 = scmp.ne.s32.totalorder %s334, %s336
    %p343 = scmp.eq.s32.totalorder %s32, 1
    %p344 = por %p342, %p343
    %p345 = scmp.ne.s32.totalorder %s336, %s337
    %p346 = scmp.eq.s32.totalorder %s32, 0
    %p347 = por %p345, %p346
    %p348 = scmp.ne.s32.totalorder %s336, %s337
    %p349 = scmp.eq.s32.totalorder %s33, 1
    %p350 = por %p348, %p349
    %p352 = scmp.ne.s32.totalorder %s337, %s351
    %p353 = scmp.eq.s32.totalorder %s33, 0
    %p354 = por %p352, %p353
    %s356 = sadd.s32 %s355, 1
    %p359 = scmp.eq.s32.totalorder %s27, 1
    %p360 = scmp.ne.s32.totalorder %s355, %s357
    %p361 = scmp.eq.s32.totalorder %s27, 0
    %p362 = por %p360, %p361
    %p363 = scmp.ne.s32.totalorder %s355, %s357
    %p364 = scmp.eq.s32.totalorder %s32, 1
    %p365 = por %p363, %p364
    %p366 = scmp.ne.s32.totalorder %s357, %s358
    %p367 = scmp.eq.s32.totalorder %s32, 0
    %p368 = por %p366, %p367
    %p369 = scmp.ne.s32.totalorder %s357, %s358
    %p370 = scmp.eq.s32.totalorder %s33, 1
    %p371 = por %p369, %p370
    %p373 = scmp.ne.s32.totalorder %s358, %s372
    %p374 = scmp.eq.s32.totalorder %s33, 0
    %p375 = por %p373, %p374
    %s377 = sadd.s32 %s376, 1
    %p380 = scmp.eq.s32.totalorder %s27, 1
    %p381 = scmp.ne.s32.totalorder %s376, %s378
    %p382 = scmp.eq.s32.totalorder %s27, 0
    %p383 = por %p381, %p382
    %p384 = scmp.ne.s32.totalorder %s376, %s378
    %p385 = scmp.eq.s32.totalorder %s32, 1
    %p386 = por %p384, %p385
    %p387 = scmp.ne.s32.totalorder %s378, %s379
    %p388 = scmp.eq.s32.totalorder %s32, 0
    %p389 = por %p387, %p388
    %p390 = scmp.ne.s32.totalorder %s378, %s379
    %p391 = scmp.eq.s32.totalorder %s33, 1
    %p392 = por %p390, %p391
    %p394 = scmp.ne.s32.totalorder %s379, %s393
    %p395 = scmp.eq.s32.totalorder %s33, 0
    %p396 = por %p394, %p395
    %s398 = sadd.s32 %s397, 1
    %p401 = scmp.eq.s32.totalorder %s27, 1
    %p402 = scmp.ne.s32.totalorder %s397, %s399
    %p403 = scmp.eq.s32.totalorder %s27, 0
    %p404 = por %p402, %p403
    %p405 = scmp.ne.s32.totalorder %s397, %s399
    %p406 = scmp.eq.s32.totalorder %s32, 1
    %p407 = por %p405, %p406
    %p408 = scmp.ne.s32.totalorder %s399, %s400
    %p409 = scmp.eq.s32.totalorder %s32, 0
    %p410 = por %p408, %p409
    %p411 = scmp.ne.s32.totalorder %s399, %s400
    %p412 = scmp.eq.s32.totalorder %s33, 1
    %p413 = por %p411, %p412
    %p415 = scmp.ne.s32.totalorder %s400, %s414
    %p416 = scmp.eq.s32.totalorder %s33, 0
    %p417 = por %p415, %p416
    %s419 = sadd.s32 %s418, 1
    %p422 = scmp.eq.s32.totalorder %s27, 1
    %p423 = scmp.ne.s32.totalorder %s418, %s420
    %p424 = scmp.eq.s32.totalorder %s27, 0
    %p425 = por %p423, %p424
    %p426 = scmp.ne.s32.totalorder %s418, %s420
    %p427 = scmp.eq.s32.totalorder %s32, 1
    %p428 = por %p426, %p427
    %p429 = scmp.ne.s32.totalorder %s420, %s421
    %p430 = scmp.eq.s32.totalorder %s32, 0
    %p431 = por %p429, %p430
    %p432 = scmp.ne.s32.totalorder %s420, %s421
    %p433 = scmp.eq.s32.totalorder %s33, 1
    %p434 = por %p432, %p433
    %p436 = scmp.ne.s32.totalorder %s421, %s435
    %p437 = scmp.eq.s32.totalorder %s33, 0
    %p438 = por %p436, %p437
    %s439 = ssub.s32 %s27, %s34
    %p440 = scmp.eq.s32.totalorder %s439, 0
    %s442 = sadd.s32 %s441, 1
    %s443 = scalar_select %p440, %s441, %s442
    %p446 = pneg %p440
    %p447 = scmp.eq.s32.totalorder %s27, 1
    %p448 = por %p446, %p447
    %p449 = scmp.ne.s32.totalorder %s441, %s444
    %p450 = scmp.eq.s32.totalorder %s27, 0
    %p451 = por %p449, %p450
    %p452 = scmp.ne.s32.totalorder %s441, %s444
    %p453 = scmp.eq.s32.totalorder %s32, 1
    %p454 = por %p452, %p453
    %p455 = scmp.ne.s32.totalorder %s444, %s445
    %p456 = scmp.eq.s32.totalorder %s32, 0
    %p457 = por %p455, %p456
    %p458 = scmp.ne.s32.totalorder %s444, %s445
    %p459 = scmp.eq.s32.totalorder %s33, 1
    %p460 = por %p458, %p459
    %p462 = scmp.ne.s32.totalorder %s445, %s461
    %p463 = scmp.eq.s32.totalorder %s33, 0
    %p464 = por %p462, %p463
    %p465 = scmp.le.s32.totalorder 1, %s27
    %p466 = scmp.lt.s32.totalorder %s27, 3
    %p467 = pnand %p465, %p466
    %p468 = pneg %p467
    // Predicated region
    $region9: #{forward.1} parent=5 // pred_check
      _
    $region10: #{forward.1} parent=5 // pred_check_branch
      %470 = sbr.rel (%p467) target = $region12
    $region11: #{forward.1} parent=5 // pred_region
      %s471 = ssub.s32 %s27, 1
      // Predicated region
      $region13: #{forward.1} parent=11 // pred_check
        %p472 = pneg %p74
      $region14: #{forward.1} parent=11 // pred_check_branch
        %474 = sbr.rel (%p472) target = $region16
      $region15: #{forward.1} parent=11 // pred_region
        _
      $region16: #{forward.1} parent=11 // pred_fallthru
        _
      // Predicated region
      $region17: #{forward.1} parent=11 // pred_check
        %p475 = pneg %p95
      $region18: #{forward.1} parent=11 // pred_check_branch
        %477 = sbr.rel (%p475) target = $region20
      $region19: #{forward.1} parent=11 // pred_region
        _
      $region20: #{forward.1} parent=11 // pred_fallthru
        _
      // Predicated region
      $region21: #{forward.1} parent=11 // pred_check
        %p478 = pneg %p116
      $region22: #{forward.1} parent=11 // pred_check_branch
        %480 = sbr.rel (%p478) target = $region24
      $region23: #{forward.1} parent=11 // pred_region
        _
      $region24: #{forward.1} parent=11 // pred_fallthru
        _
      // Predicated region
      $region25: #{forward.1} parent=11 // pred_check
        %p481 = pneg %p137
      $region26: #{forward.1} parent=11 // pred_check_branch
        %483 = sbr.rel (%p481) target = $region28
      $region27: #{forward.1} parent=11 // pred_region
        _
      $region28: #{forward.1} parent=11 // pred_fallthru
        _
      // Predicated region
      $region29: #{forward.1} parent=11 // pred_check
        %p484 = pneg %p158
      $region30: #{forward.1} parent=11 // pred_check_branch
        %486 = sbr.rel (%p484) target = $region32
      $region31: #{forward.1} parent=11 // pred_region
        _
      $region32: #{forward.1} parent=11 // pred_fallthru
        _
      // Predicated region
      $region33: #{forward.1} parent=11 // pred_check
        %p487 = pneg %p179
      $region34: #{forward.1} parent=11 // pred_check_branch
        %489 = sbr.rel (%p487) target = $region36
      $region35: #{forward.1} parent=11 // pred_region
        _
      $region36: #{forward.1} parent=11 // pred_fallthru
        _
      // Predicated region
      $region37: #{forward.1} parent=11 // pred_check
        %p490 = pneg %p200
      $region38: #{forward.1} parent=11 // pred_check_branch
        %492 = sbr.rel (%p490) target = $region40
      $region39: #{forward.1} parent=11 // pred_region
        _
      $region40: #{forward.1} parent=11 // pred_fallthru
        _
      // Predicated region
      $region41: #{forward.1} parent=11 // pred_check
        %p493 = pneg %p221
      $region42: #{forward.1} parent=11 // pred_check_branch
        %495 = sbr.rel (%p493) target = $region44
      $region43: #{forward.1} parent=11 // pred_region
        _
      $region44: #{forward.1} parent=11 // pred_fallthru
        _
      // Predicated region
      $region45: #{forward.1} parent=11 // pred_check
        %p496 = pneg %p242
      $region46: #{forward.1} parent=11 // pred_check_branch
        %498 = sbr.rel (%p496) target = $region48
      $region47: #{forward.1} parent=11 // pred_region
        _
      $region48: #{forward.1} parent=11 // pred_fallthru
        _
      // Predicated region
      $region49: #{forward.1} parent=11 // pred_check
        %p499 = pneg %p263
      $region50: #{forward.1} parent=11 // pred_check_branch
        %501 = sbr.rel (%p499) target = $region52
      $region51: #{forward.1} parent=11 // pred_region
        _
      $region52: #{forward.1} parent=11 // pred_fallthru
        _
      // Predicated region
      $region53: #{forward.1} parent=11 // pred_check
        %p502 = pneg %p284
      $region54: #{forward.1} parent=11 // pred_check_branch
        %504 = sbr.rel (%p502) target = $region56
      $region55: #{forward.1} parent=11 // pred_region
        _
      $region56: #{forward.1} parent=11 // pred_fallthru
        _
      // Predicated region
      $region57: #{forward.1} parent=11 // pred_check
        %p505 = pneg %p305
      $region58: #{forward.1} parent=11 // pred_check_branch
        %507 = sbr.rel (%p505) target = $region60
      $region59: #{forward.1} parent=11 // pred_region
        _
      $region60: #{forward.1} parent=11 // pred_fallthru
        _
      // Predicated region
      $region61: #{forward.1} parent=11 // pred_check
        %p508 = pneg %p326
      $region62: #{forward.1} parent=11 // pred_check_branch
        %510 = sbr.rel (%p508) target = $region64
      $region63: #{forward.1} parent=11 // pred_region
        _
      $region64: #{forward.1} parent=11 // pred_fallthru
        _
      // Predicated region
      $region65: #{forward.1} parent=11 // pred_check
        %p511 = pneg %p347
      $region66: #{forward.1} parent=11 // pred_check_branch
        %513 = sbr.rel (%p511) target = $region68
      $region67: #{forward.1} parent=11 // pred_region
        _
      $region68: #{forward.1} parent=11 // pred_fallthru
        _
      // Predicated region
      $region69: #{forward.1} parent=11 // pred_check
        %p514 = pneg %p368
      $region70: #{forward.1} parent=11 // pred_check_branch
        %516 = sbr.rel (%p514) target = $region72
      $region71: #{forward.1} parent=11 // pred_region
        _
      $region72: #{forward.1} parent=11 // pred_fallthru
        _
      // Predicated region
      $region73: #{forward.1} parent=11 // pred_check
        %p517 = pneg %p389
      $region74: #{forward.1} parent=11 // pred_check_branch
        %519 = sbr.rel (%p517) target = $region76
      $region75: #{forward.1} parent=11 // pred_region
        _
      $region76: #{forward.1} parent=11 // pred_fallthru
        _
      // Predicated region
      $region77: #{forward.1} parent=11 // pred_check
        %p520 = pneg %p410
      $region78: #{forward.1} parent=11 // pred_check_branch
        %522 = sbr.rel (%p520) target = $region80
      $region79: #{forward.1} parent=11 // pred_region
        _
      $region80: #{forward.1} parent=11 // pred_fallthru
        _
      // Predicated region
      $region81: #{forward.1} parent=11 // pred_check
        %p523 = pneg %p431
      $region82: #{forward.1} parent=11 // pred_check_branch
        %525 = sbr.rel (%p523) target = $region84
      $region83: #{forward.1} parent=11 // pred_region
        _
      $region84: #{forward.1} parent=11 // pred_fallthru
        _
    $region12: #{forward.1} parent=5 // pred_fallthru
      _
    %p526 = scmp.lt.s32.totalorder %s27, 2
    // Predicated region
    $region85: #{forward.1} parent=5 // pred_check
      %p527 = pneg %p526
    $region86: #{forward.1} parent=5 // pred_check_branch
      %529 = sbr.rel (%p527) target = $region88
    $region87: #{forward.1} parent=5 // pred_region
      // Predicated region
      $region89: #{forward.1} parent=87 // pred_check
        %p530 = pneg %p47
      $region90: #{forward.1} parent=87 // pred_check_branch
        %532 = sbr.rel (%p530) target = $region92
      $region91: #{forward.1} parent=87 // pred_region
        %p533 = scmp.lt.s32.totalorder %s27, 1
        %s534 = scalar_select %p533, %s27, 1
        %s535 = smul.addr %s534, 2
        %s536 = scalar_lea.vmem %s0, %s535
      $region92: #{forward.1} parent=87 // pred_fallthru
        _
    $region88: #{forward.1} parent=5 // pred_fallthru
      _
    %p537 = scmp.le.s32.totalorder 1, %s27
    %p538 = scmp.lt.s32.totalorder %s27, 3
    %p539 = pnand %p537, %p538
    %p540 = pneg %p539
    // Predicated region
    $region93: #{forward.1} parent=5 // pred_check
      _
    $region94: #{forward.1} parent=5 // pred_check_branch
      %542 = sbr.rel (%p539) target = $region96
    $region95: #{forward.1} parent=5 // pred_region
      %s543 = ssub.s32 %s27, 1
      %p544 = scmp.lt.s32.totalorder %s32, 1
      %s545 = scalar_select %p544, %s32, 1
      %s546 = smul.addr %s545, 2
      %s547 = scalar_lea.vmem %s0, %s546
      %p548 = pneg %p53
      %p549 = pneg %p50
      %p550 = pneg %p74
      %p551 = pneg %p71
      %p552 = pneg %p95
      %p553 = pneg %p92
      %p554 = pneg %p116
      %p555 = pneg %p113
      %p556 = pneg %p137
      %p557 = pneg %p134
      %p558 = pneg %p158
      %p559 = pneg %p155
      %p560 = pneg %p179
      %p561 = pneg %p176
      %p562 = pneg %p200
      %p563 = pneg %p197
      %p564 = pneg %p221
      %p565 = pneg %p218
      %p566 = pneg %p242
      %p567 = pneg %p239
      %p568 = pneg %p263
      %p569 = pneg %p260
      %p570 = pneg %p284
      %p571 = pneg %p281
      %p572 = pneg %p305
      %p573 = pneg %p302
      %p574 = pneg %p326
      %p575 = pneg %p323
      %p576 = pneg %p347
      %p577 = pneg %p344
      %p578 = pneg %p368
      %p579 = pneg %p365
      %p580 = pneg %p389
      %p581 = pneg %p386
      %p582 = pneg %p410
      %p583 = pneg %p407
      %p584 = pneg %p431
      %p585 = pneg %p428
      %p586 = pneg %p457
      %p587 = pneg %p454
      %p588 = scmp.lt.s32.totalorder %s32, 1
      %s589 = scalar_select %p588, %s32, 1
      %s590 = smul.addr %s589, 2
      %s591 = scalar_lea.vmem %s19, %s590
      %p592 = scmp.lt.s32.totalorder %s32, 1
      %s593 = scalar_select %p592, %s32, 1
      %s594 = smul.addr %s593, 2
      %s595 = scalar_lea.vmem %s0, %s594
      %p596 = scmp.lt.s32.totalorder %s32, 1
      %s597 = scalar_select %p596, %s32, 1
      %s598 = smul.addr %s597, 2
      %s599 = scalar_lea.vmem %s19, %s598
      %v600 = vlaneseq
      %v601 = vand.u32 %v600, 127
      %v602 = vadd.s32 %v601, 128
      %vm603 = vcmp.lt.s32.totalorder %v601, 0
      %v604 = vsub.s32 0, %v601
      %v605 = vsel %vm603, %v604, %v601
      %v606 = vshrl.u32 %v605, 4
      %v607 = vand.u32 %v605, 15
      %v608 = vsub.s32 0, %v607
      %v609 = vsel %vm603, %v608, %v607
      %vm610 = vcmp.lt.s32.totalorder %v602, 0
      %v611 = vsub.s32 0, %v602
      %v612 = vsel %vm610, %v611, %v602
      %v613 = vshrl.u32 %v612, 4
      %v614 = vand.u32 %v612, 15
      %v615 = vsub.s32 0, %v614
      %v616 = vsel %vm610, %v615, %v614
      %vm617 = vcmp.ne.s32.totalorder %v609, 0
      %vm618 = vcmp.ne.s32.totalorder %v616, 0
      %vm619 = vcmp.lt.s32.totalorder %v609, 0
      %vm620 = vcmp.lt.s32.totalorder %v616, 0
      %vm621 = vmand %vm619, %vm617
      %vm622 = vmand %vm620, %vm618
      %v623 = vadd.s32 %v609, 16
      %v624 = vadd.s32 %v616, 16
      %v625 = vsel %vm621, %v623, %v609
      %v626 = vsel %vm622, %v624, %v616
      %vm627 = vcmp.lt.s32.totalorder %v601, 0
      %v628 = vsub.s32 0, %v601
      %v629 = vsel %vm627, %v628, %v601
      %v630 = vshrl.u32 %v629, 3
      %v631 = vand.u32 %v629, 7
      %v632 = vsub.s32 0, %v631
      %v633 = vsel %vm627, %v632, %v631
      %vm634 = vcmp.ne.s32.totalorder %v633, 0
      %vm635 = vcmp.lt.s32.totalorder %v633, 0
      %vm636 = vmand %vm635, %vm634
      %v637 = vadd.s32 %v633, 8
      %v638 = vsel %vm636, %v637, %v633
      %639 = vst [vmem:[#allocation2] sm:$0xff] 0.0
      %640 = vst [vmem:[#allocation2 + $0x8] sm:$0xff] 0.0
      %641 = vst [vmem:[#allocation2 + $0x10] sm:$0xff] 0.0
      %642 = vst [vmem:[#allocation2 + $0x18] sm:$0xff] 0.0
      %643 = vst [vmem:[#allocation2 + $0x20] sm:$0xff] 0.0
      %644 = vst [vmem:[#allocation2 + $0x28] sm:$0xff] 0.0
      %645 = vst [vmem:[#allocation2 + $0x30] sm:$0xff] 0.0
      %646 = vst [vmem:[#allocation2 + $0x38] sm:$0xff] 0.0
      %v647 = vld [vmem:[%s595] sm:$0x3]
      %v648 = vlaneseq
      %vm649 = vcmp.ge.s32.totalorder %v648, 0
      %vm650 = vcmp.lt.s32.totalorder %v648, 256
      %vm651 = vmand %vm649, %vm650
      %s652 = scalar_lea.vmem [#allocation2], 8
      %653 = vst.msk [vmem:[%s652] ss:$8 sm:$0x3] %vm651, %v647
      %654 = vst.msk [vmem:[%s652] ss:$8 sm:$0x0] %vm651, %v647
      %v655 = vld [vmem:[#allocation2] ss:$8 sm:$0x7]
      %vm656 = vcmp.ge.s32.totalorder %v625, 1
      %vm657 = vcmp.ge.s32.totalorder %v626, 1
      %v659 = vlaneseq
      %v660 = vshrl.u32 %v659, 7
      %v661 = vsub.s32 0, %v660
      %v662 = vrot.slane %v655, %v661
      %v663 = vlaneseq
      %v664 = vshrl.u32 %v663, 7
      %v665 = vsub.s32 1, %v664
      %v666 = vrot.slane %v655, %v665
      %v667 = vlaneseq
      %v668 = vshrl.u32 %v667, 7
      %v669 = vsub.s32 2, %v668
      %v670 = vrot.slane %v655, %v669
      %671 = vrot.lane.b32.xlu0 %v662, 17
      %v672 = vpop.permute.xlu0 %671
      %673 = vrot.lane.b32.xlu0 %v666, 17
      %v674 = vpop.permute.xlu0 %673
      %675 = vrot.lane.b32.xlu0 %v670, 17
      %v676 = vpop.permute.xlu0 %675
      %vm677 = vcmask 138240
      %v678 = vsel %vm677, %v672, %v674
      %v679 = vsel %vm677, %v674, %v676
      %v682 = vsel %vm656, %v678, 0.0
      %v683 = vsel %vm657, %v679, 0.0
      %v686 = vcombine.low %v682, %v683
      %v688 = vunpack.c.l.s4 1966171168
      %v689 = vunpack.c.0.s8 %v688
      %v690 = vlaneseq
      %v691 = vshrl.u32 %v690, 7
      %v692 = vsub.s32 %v689, %v691
      %v693 = vrot.slane %v686, %v692
      %v695 = vunpack.c.l.s4 1966171168
      %v696 = vunpack.c.0.s8 %v695
      %v697 = vlaneseq
      %v698 = vshrl.u32 %v697, 7
      %v699 = vsub.s32 %v696, %v698
      %v700 = vrot.slane %v693, %v699
      %702 = vst.msk [vmem:[#allocation4] ss:$8 sm:$0x3] %vm651, %v700
      %703 = vst.msk [vmem:[#allocation4] ss:$8 sm:$0x0] %vm651, %v700
      %v704 = vld [vmem:[#allocation2] ss:$8 sm:$0x7]
      %706 = vrot.lane.b32.xlu0 %v704, 16
      %v707 = vpop.permute.xlu0 %706
      %v708 = vrot.slane %v707, 1
      %vm709 = vcmask 130048
      %v710 = vsel %vm709, %v707, %v708
      %s712 = scalar_lea.vmem [#allocation4], 1
      %713 = vst.msk [vmem:[%s712] ss:$8 sm:$0x3] %vm651, %v710
      %714 = vst.msk [vmem:[%s712] ss:$8 sm:$0x0] %vm651, %v710
      %v715 = vld [vmem:[#allocation2] ss:$8 sm:$0x7]
      %vm716 = vcmp.le.s32.totalorder %v625, 14
      %vm717 = vcmp.le.s32.totalorder %v626, 14
      %v719 = vlaneseq
      %v720 = vshrl.u32 %v719, 7
      %v721 = vsub.s32 0, %v720
      %v722 = vrot.slane %v715, %v721
      %v723 = vlaneseq
      %v724 = vshrl.u32 %v723, 7
      %v725 = vsub.s32 1, %v724
      %v726 = vrot.slane %v715, %v725
      %v727 = vlaneseq
      %v728 = vshrl.u32 %v727, 7
      %v729 = vsub.s32 2, %v728
      %v730 = vrot.slane %v715, %v729
      %731 = vrot.lane.b32.xlu0 %v722, 15
      %v732 = vpop.permute.xlu0 %731
      %733 = vrot.lane.b32.xlu0 %v726, 15
      %v734 = vpop.permute.xlu0 %733
      %735 = vrot.lane.b32.xlu0 %v730, 15
      %v736 = vpop.permute.xlu0 %735
      %vm737 = vcmask 121856
      %v738 = vsel %vm737, %v732, %v734
      %v739 = vsel %vm737, %v734, %v736
      %v742 = vsel %vm716, %v738, 0.0
      %v743 = vsel %vm717, %v739, 0.0
      %v746 = vcombine.low %v742, %v743
      %v748 = vunpack.c.l.s4 1966171168
      %v749 = vunpack.c.0.s8 %v748
      %v750 = vlaneseq
      %v751 = vshrl.u32 %v750, 7
      %v752 = vsub.s32 %v749, %v751
      %v753 = vrot.slane %v746, %v752
      %v755 = vunpack.c.l.s4 1966171168
      %v756 = vunpack.c.0.s8 %v755
      %v757 = vlaneseq
      %v758 = vshrl.u32 %v757, 7
      %v759 = vsub.s32 %v756, %v758
      %v760 = vrot.slane %v753, %v759
      %s762 = scalar_lea.vmem [#allocation4], 2
      %763 = vst.msk [vmem:[%s762] ss:$8 sm:$0x3] %vm651, %v760
      %764 = vst.msk [vmem:[%s762] ss:$8 sm:$0x0] %vm651, %v760
      %v765 = vld [vmem:[#allocation2] ss:$8 sm:$0x7]
      %v767 = vlaneseq
      %v768 = vshrl.u32 %v767, 7
      %v769 = vsub.s32 0, %v768
      %v770 = vrot.slane %v765, %v769
      %v771 = vlaneseq
      %v772 = vshrl.u32 %v771, 7
      %v773 = vsub.s32 1, %v772
      %v774 = vrot.slane %v765, %v773
      %v775 = vlaneseq
      %v776 = vshrl.u32 %v775, 7
      %v777 = vsub.s32 2, %v776
      %v778 = vrot.slane %v765, %v777
      %779 = vrot.lane.b32.xlu0 %v770, 1
      %v780 = vpop.permute.xlu0 %779
      %781 = vrot.lane.b32.xlu0 %v774, 1
      %v782 = vpop.permute.xlu0 %781
      %783 = vrot.lane.b32.xlu0 %v778, 1
      %v784 = vpop.permute.xlu0 %783
      %vm785 = vcmask 7168
      %v786 = vsel %vm785, %v780, %v782
      %v787 = vsel %vm785, %v782, %v784
      %v790 = vsel %vm656, %v786, 0.0
      %v791 = vsel %vm657, %v787, 0.0
      %v794 = vcombine.low %v790, %v791
      %v796 = vunpack.c.l.s4 1966171168
      %v797 = vunpack.c.0.s8 %v796
      %v798 = vlaneseq
      %v799 = vshrl.u32 %v798, 7
      %v800 = vsub.s32 %v797, %v799
      %v801 = vrot.slane %v794, %v800
      %v803 = vunpack.c.l.s4 1966171168
      %v804 = vunpack.c.0.s8 %v803
      %v805 = vlaneseq
      %v806 = vshrl.u32 %v805, 7
      %v807 = vsub.s32 %v804, %v806
      %v808 = vrot.slane %v801, %v807
      %s810 = scalar_lea.vmem [#allocation4], 3
      %811 = vst.msk [vmem:[%s810] ss:$8 sm:$0x3] %vm651, %v808
      %812 = vst.msk [vmem:[%s810] ss:$8 sm:$0x0] %vm651, %v808
      %v813 = vld [vmem:[%s652] ss:$8 sm:$0x3]
      %s814 = scalar_lea.vmem [#allocation4], 4
      %815 = vst.msk [vmem:[%s814] ss:$8 sm:$0x3] %vm651, %v813
      %816 = vst.msk [vmem:[%s814] ss:$8 sm:$0x0] %vm651, %v813
      %v817 = vld [vmem:[%s652] ss:$8 sm:$0x7]
      %v819 = vlaneseq
      %v820 = vshrl.u32 %v819, 7
      %v821 = vsub.s32 0, %v820
      %v822 = vrot.slane %v817, %v821
      %v823 = vlaneseq
      %v824 = vshrl.u32 %v823, 7
      %v825 = vsub.s32 1, %v824
      %v826 = vrot.slane %v817, %v825
      %v827 = vlaneseq
      %v828 = vshrl.u32 %v827, 7
      %v829 = vsub.s32 2, %v828
      %v830 = vrot.slane %v817, %v829
      %831 = vrot.lane.b32.xlu0 %v822, 127
      %v832 = vpop.permute.xlu0 %831
      %833 = vrot.lane.b32.xlu0 %v826, 127
      %v834 = vpop.permute.xlu0 %833
      %835 = vrot.lane.b32.xlu0 %v830, 127
      %v836 = vpop.permute.xlu0 %835
      %vm837 = vcmask 1039360
      %v838 = vsel %vm837, %v832, %v834
      %v839 = vsel %vm837, %v834, %v836
      %v842 = vsel %vm716, %v838, 0.0
      %v843 = vsel %vm717, %v839, 0.0
      %v846 = vcombine.low %v842, %v843
      %v848 = vunpack.c.l.s4 1966171168
      %v849 = vunpack.c.0.s8 %v848
      %v850 = vlaneseq
      %v851 = vshrl.u32 %v850, 7
      %v852 = vsub.s32 %v849, %v851
      %v853 = vrot.slane %v846, %v852
      %v855 = vunpack.c.l.s4 1966171168
      %v856 = vunpack.c.0.s8 %v855
      %v857 = vlaneseq
      %v858 = vshrl.u32 %v857, 7
      %v859 = vsub.s32 %v856, %v858
      %v860 = vrot.slane %v853, %v859
      %s862 = scalar_lea.vmem [#allocation4], 5
      %863 = vst.msk [vmem:[%s862] ss:$8 sm:$0x3] %vm651, %v860
      %864 = vst.msk [vmem:[%s862] ss:$8 sm:$0x0] %vm651, %v860
      %v865 = vld [vmem:[%s652] ss:$8 sm:$0x7]
      %v867 = vlaneseq
      %v868 = vshrl.u32 %v867, 7
      %v869 = vsub.s32 0, %v868
      %v870 = vrot.slane %v865, %v869
      %v871 = vlaneseq
      %v872 = vshrl.u32 %v871, 7
      %v873 = vsub.s32 1, %v872
      %v874 = vrot.slane %v865, %v873
      %v875 = vlaneseq
      %v876 = vshrl.u32 %v875, 7
      %v877 = vsub.s32 2, %v876
      %v878 = vrot.slane %v865, %v877
      %879 = vrot.lane.b32.xlu0 %v870, 113
      %v880 = vpop.permute.xlu0 %879
      %881 = vrot.lane.b32.xlu0 %v874, 113
      %v882 = vpop.permute.xlu0 %881
      %883 = vrot.lane.b32.xlu0 %v878, 113
      %v884 = vpop.permute.xlu0 %883
      %vm885 = vcmask 924672
      %v886 = vsel %vm885, %v880, %v882
      %v887 = vsel %vm885, %v882, %v884
      %v890 = vsel %vm656, %v886, 0.0
      %v891 = vsel %vm657, %v887, 0.0
      %v894 = vcombine.low %v890, %v891
      %v896 = vunpack.c.l.s4 1966171168
      %v897 = vunpack.c.0.s8 %v896
      %v898 = vlaneseq
      %v899 = vshrl.u32 %v898, 7
      %v900 = vsub.s32 %v897, %v899
      %v901 = vrot.slane %v894, %v900
      %v903 = vunpack.c.l.s4 1966171168
      %v904 = vunpack.c.0.s8 %v903
      %v905 = vlaneseq
      %v906 = vshrl.u32 %v905, 7
      %v907 = vsub.s32 %v904, %v906
      %v908 = vrot.slane %v901, %v907
      %s910 = scalar_lea.vmem [#allocation4], 6
      %911 = vst.msk [vmem:[%s910] ss:$8 sm:$0x3] %vm651, %v908
      %912 = vst.msk [vmem:[%s910] ss:$8 sm:$0x0] %vm651, %v908
      %v913 = vld [vmem:[%s652] ss:$8 sm:$0x7]
      %915 = vrot.lane.b32.xlu0 %v913, 112
      %v916 = vpop.permute.xlu0 %915
      %v917 = vrot.slane %v916, 1
      %vm918 = vcmask 916480
      %v919 = vsel %vm918, %v916, %v917
      %s921 = scalar_lea.vmem [#allocation4], 7
      %922 = vst.msk [vmem:[%s921] ss:$8 sm:$0x3] %vm651, %v919
      %923 = vst.msk [vmem:[%s921] ss:$8 sm:$0x0] %vm651, %v919
      %v924 = vld [vmem:[%s652] ss:$8 sm:$0x7]
      %v926 = vlaneseq
      %v927 = vshrl.u32 %v926, 7
      %v928 = vsub.s32 0, %v927
      %v929 = vrot.slane %v924, %v928
      %v930 = vlaneseq
      %v931 = vshrl.u32 %v930, 7
      %v932 = vsub.s32 1, %v931
      %v933 = vrot.slane %v924, %v932
      %v934 = vlaneseq
      %v935 = vshrl.u32 %v934, 7
      %v936 = vsub.s32 2, %v935
      %v937 = vrot.slane %v924, %v936
      %938 = vrot.lane.b32.xlu0 %v929, 111
      %v939 = vpop.permute.xlu0 %938
      %940 = vrot.lane.b32.xlu0 %v933, 111
      %v941 = vpop.permute.xlu0 %940
      %942 = vrot.lane.b32.xlu0 %v937, 111
      %v943 = vpop.permute.xlu0 %942
      %vm944 = vcmask 908288
      %v945 = vsel %vm944, %v939, %v941
      %v946 = vsel %vm944, %v941, %v943
      %v949 = vsel %vm716, %v945, 0.0
      %v950 = vsel %vm717, %v946, 0.0
      %v953 = vcombine.low %v949, %v950
      %v955 = vunpack.c.l.s4 1966171168
      %v956 = vunpack.c.0.s8 %v955
      %v957 = vlaneseq
      %v958 = vshrl.u32 %v957, 7
      %v959 = vsub.s32 %v956, %v958
      %v960 = vrot.slane %v953, %v959
      %v962 = vunpack.c.l.s4 1966171168
      %v963 = vunpack.c.0.s8 %v962
      %v964 = vlaneseq
      %v965 = vshrl.u32 %v964, 7
      %v966 = vsub.s32 %v963, %v965
      %v967 = vrot.slane %v960, %v966
      %s969 = scalar_lea.vmem [#allocation4], 16
      %970 = vst.msk [vmem:[%s969] ss:$8 sm:$0x3] %vm651, %v967
      %971 = vst.msk [vmem:[%s969] ss:$8 sm:$0x0] %vm651, %v967
      %v972 = vld [vmem:[%s1] sm:$0xff]
      %v973 = vld [vmem:[%s1 + $0x8] sm:$0xff]
      %v974 = vld [vmem:[#allocation4] sm:$0xff]
      %v975 = vld [vmem:[#allocation4 + $0x8] sm:$0xff]
      %v976 = vld [vmem:[#allocation4 + $0x10] sm:$0x1]
      %v977 = vld [vmem:[#allocation4 + $0x18] sm:$0x1]
      %v978 = vld [vmem:[%s9] sm:$0xff]
      %v979 = vld [vmem:[%s9 + $0x8] sm:$0xff]
      %981 = vset.pattern.permute.xlu0 0
      %982 = vperm.xlu0 %981, %v978
      %v983 = vpop.permute.xlu0 %982
      %986 = vset.pattern.permute.xlu0 0
      %987 = vperm.xlu0 %986, %v979
      %v988 = vpop.permute.xlu0 %987
      %vm990 = vcmask 72704
      %v992 = vsel %vm990, %v972, 0
      %v995 = vsel %vm990, %v973, 0
      %vm997 = vcmask 1040384
      %v999 = vsel %vm997, %v976, 0
      %v1002 = vsel %vm997, %v977, 0
      %1004 = vmatprep.subr.mxu0 %v975
      %1005 = vmatpush1.msra.mxu0 %v974
      %1006 = vmatprep.subr.mxu0 %v1002
      %1007 = vmatpush1.msra.mxu0 %v999
      %1008 = vmatprep.subr.mxu0 0.0
      %1009 = vmatpush1.msra.mxu0 0.0
      %1010 = vmatprep.subr.mxu0 0.0
      %1011 = vmatpush1.msra.mxu0 0.0
      %1012 = vmatprep.subr.mxu0 0.0
      %1013 = vmatpush1.msra.mxu0 0.0
      %1014 = vmatprep.subr.mxu0 0.0
      %1015 = vmatpush1.msra.mxu0 0.0
      %1016 = vmatprep.subr.mxu0 0.0
      %1017 = vmatpush1.msra.mxu0 0.0
      %1018 = vmatprep.subr.mxu0 0.0
      %1019 = vmatpush1.msra.mxu0 0.0
      %1020 = vmatprep.subr.mxu0 0.0
      %1021 = vmatpush1.msra.mxu0 0.0
      %1022 = vmatprep.subr.mxu0 0.0
      %1023 = vmatpush1.msra.mxu0 0.0
      %1024 = vmatprep.subr.mxu0 0.0
      %1025 = vmatpush1.msra.mxu0 0.0
      %1026 = vmatprep.subr.mxu0 0.0
      %1027 = vmatpush1.msra.mxu0 0.0
      %1028 = vmatprep.subr.mxu0 0.0
      %1029 = vmatpush1.msra.mxu0 0.0
      %1030 = vmatprep.subr.mxu0 0.0
      %1031 = vmatpush1.msra.mxu0 0.0
      %1032 = vmatprep.subr.mxu0 0.0
      %1033 = vmatpush1.msra.mxu0 0.0
      %1034 = vmatprep.subr.mxu0 0.0
      %1035 = vmatpush1.msra.mxu0 0.0
      %1036 = vmatprep.subr.mxu0 0.0
      %1037 = vmatpush1.msra.mxu0 0.0
      %1038 = vmatprep.subr.mxu0 0.0
      %1039 = vmatpush1.msra.mxu0 0.0
      %1040 = vmatprep.subr.mxu0 0.0
      %1041 = vmatpush1.msra.mxu0 0.0
      %1042 = vmatprep.subr.mxu0 0.0
      %1043 = vmatpush1.msra.mxu0 0.0
      %1044 = vmatprep.subr.mxu0 0.0
      %1045 = vmatpush1.msra.mxu0 0.0
      %1046 = vmatprep.subr.mxu0 0.0
      %1047 = vmatpush1.msra.mxu0 0.0
      %1048 = vmatprep.subr.mxu0 0.0
      %1049 = vmatpush1.msra.mxu0 0.0
      %1050 = vmatprep.subr.mxu0 0.0
      %1051 = vmatpush1.msra.mxu0 0.0
      %1052 = vmatprep.subr.mxu0 0.0
      %1053 = vmatpush1.msra.mxu0 0.0
      %1054 = vmatprep.subr.mxu0 0.0
      %1055 = vmatpush1.msra.mxu0 0.0
      %1056 = vmatprep.subr.mxu0 0.0
      %1057 = vmatpush1.msra.mxu0 0.0
      %1058 = vmatprep.subr.mxu0 0.0
      %1059 = vmatpush1.msra.mxu0 0.0
      %1060 = vmatprep.subr.mxu0 0.0
      %1061 = vmatpush1.msra.mxu0 0.0
      %1062 = vmatprep.subr.mxu0 0.0
      %1063 = vmatpush1.msra.mxu0 0.0
      %1064 = vmatprep.subr.mxu0 0.0
      %1065 = vmatpush1.msra.mxu0 0.0
      %1066 = vmatprep.subr.mxu0 0.0
      %1067 = vmatpush1.msra.mxu0 0.0
      %1068 = vmatprep.mubr.f32.mxu0 0.0
      %1069 = vmatmul.mubr.f32.gmra.mrb[0].mxu0 %v992
      %v1070 = vpop.f32.mrb[0].mxu0
      %v1071 = vadd.f32 %v983, %v1070
      %v1072 = vpop.f32.mrb[0].mxu0
      %v1073 = vadd.f32 %v983, %v1072
      %1074 = vmatprep.mubr.f32.mxu0 0.0
      %1075 = vmatmul.mubr.f32.gmra.mrb[0].mxu0 %v995
      %v1076 = vpop.f32.mrb[0].mxu0
      %v1077 = vadd.f32 %v988, %v1076
      %v1078 = vpop.f32.mrb[0].mxu0
      %v1079 = vadd.f32 %v988, %v1078
      %1080 = vdwg.mxu0
      %v1081 = vmax.f32 %v1071, 0.0
      %v1082 = vmax.f32 %v1073, 0.0
      %v1083 = vmax.f32 %v1077, 0.0
      %v1084 = vmax.f32 %v1079, 0.0
      %1085 = vst [vmem:[#allocation3] sm:$0xff] 0.0
      %1086 = vst [vmem:[#allocation3 + $0x8] sm:$0xff] 0.0
      %1087 = vst [vmem:[#allocation3 + $0x10] sm:$0xff] 0.0
      %1088 = vst [vmem:[#allocation3 + $0x18] sm:$0xff] 0.0
      %1089 = vst [vmem:[#allocation3 + $0x20] sm:$0xff] 0.0
      %1090 = vst [vmem:[#allocation3 + $0x28] sm:$0xff] 0.0
      %1091 = vst [vmem:[#allocation3 + $0x30] sm:$0xff] 0.0
      %1092 = vst [vmem:[#allocation3 + $0x38] sm:$0xff] 0.0
      %1093 = vst [vmem:[#allocation3 + $0x8] sm:$0xff] %v1081
      %1094 = vst [vmem:[#allocation3 + $0x10] sm:$0xff] %v1082
      %1095 = vst [vmem:[#allocation3 + $0x28] sm:$0xff] %v1083
      %1096 = vst [vmem:[#allocation3 + $0x30] sm:$0xff] %v1084
      %v1097 = vld [vmem:[#allocation3] sm:$0xff]
      %v1098 = vld [vmem:[#allocation3 + $0x8] sm:$0xff]
      %v1099 = vld [vmem:[#allocation3 + $0x10] sm:$0xff]
      %v1100 = vld [vmem:[#allocation3 + $0x20] sm:$0xff]
      %v1101 = vld [vmem:[#allocation3 + $0x28] sm:$0xff]
      %v1102 = vld [vmem:[#allocation3 + $0x30] sm:$0xff]
      %v1103 = vsel %vm656, 1, 0
      %v1104 = vsel %vm657, 1, 0
      %vm1105 = vcmp.eq.s32.totalorder %v1103, 1
      %vm1106 = vcmp.eq.s32.totalorder %v1104, 1
      %1113 = vrot.lane.b32.xlu0 %v1097, 17
      %v1114 = vpop.permute.xlu0 %1113
      %1115 = vrot.lane.b32.xlu0 %v1098, 17
      %v1116 = vpop.permute.xlu0 %1115
      %1117 = vrot.lane.b32.xlu0 %v1099, 17
      %v1118 = vpop.permute.xlu0 %1117
      %1119 = vrot.lane.b32.xlu0 %v1100, 17
      %v1120 = vpop.permute.xlu0 %1119
      %1121 = vrot.lane.b32.xlu0 %v1101, 17
      %v1122 = vpop.permute.xlu0 %1121
      %1123 = vrot.lane.b32.xlu0 %v1102, 17
      %v1124 = vpop.permute.xlu0 %1123
      %v1125 = vsel %vm677, %v1114, %v1116
      %v1126 = vsel %vm677, %v1116, %v1118
      %v1127 = vsel %vm677, %v1120, %v1122
      %v1128 = vsel %vm677, %v1122, %v1124
      %v1133 = vsel %vm1105, %v1125, 0.0
      %v1134 = vsel %vm1106, %v1126, 0.0
      %v1135 = vsel %vm1105, %v1127, 0.0
      %v1136 = vsel %vm1106, %v1128, 0.0
      %1137 = vst [vmem:[#allocation4] sm:$0xff] %v1133
      %1138 = vst [vmem:[#allocation4 + $0x8] sm:$0xff] %v1134
      %1139 = vst [vmem:[#allocation4 + $0x10] sm:$0xff] %v1135
      %1140 = vst [vmem:[#allocation4 + $0x18] sm:$0xff] %v1136
      %v1141 = vld [vmem:[#allocation3] sm:$0xff]
      %v1142 = vld [vmem:[#allocation3 + $0x8] sm:$0xff]
      %v1143 = vld [vmem:[#allocation3 + $0x10] sm:$0xff]
      %v1144 = vld [vmem:[#allocation3 + $0x20] sm:$0xff]
      %v1145 = vld [vmem:[#allocation3 + $0x28] sm:$0xff]
      %v1146 = vld [vmem:[#allocation3 + $0x30] sm:$0xff]
      %1153 = vrot.lane.b32.xlu0 %v1141, 16
      %v1154 = vpop.permute.xlu0 %1153
      %1155 = vrot.lane.b32.xlu0 %v1142, 16
      %v1156 = vpop.permute.xlu0 %1155
      %1157 = vrot.lane.b32.xlu0 %v1143, 16
      %v1158 = vpop.permute.xlu0 %1157
      %1159 = vrot.lane.b32.xlu0 %v1144, 16
      %v1160 = vpop.permute.xlu0 %1159
      %1161 = vrot.lane.b32.xlu0 %v1145, 16
      %v1162 = vpop.permute.xlu0 %1161
      %1163 = vrot.lane.b32.xlu0 %v1146, 16
      %v1164 = vpop.permute.xlu0 %1163
      %v1165 = vsel %vm709, %v1154, %v1156
      %v1166 = vsel %vm709, %v1156, %v1158
      %v1167 = vsel %vm709, %v1160, %v1162
      %v1168 = vsel %vm709, %v1162, %v1164
      %1173 = vst [vmem:[#allocation4 + $0x20] sm:$0xff] %v1165
      %1174 = vst [vmem:[#allocation4 + $0x28] sm:$0xff] %v1166
      %1175 = vst [vmem:[#allocation4 + $0x30] sm:$0xff] %v1167
      %1176 = vst [vmem:[#allocation4 + $0x38] sm:$0xff] %v1168
      %v1177 = vld [vmem:[#allocation3] sm:$0xff]
      %v1178 = vld [vmem:[#allocation3 + $0x8] sm:$0xff]
      %v1179 = vld [vmem:[#allocation3 + $0x10] sm:$0xff]
      %v1180 = vld [vmem:[#allocation3 + $0x20] sm:$0xff]
      %v1181 = vld [vmem:[#allocation3 + $0x28] sm:$0xff]
      %v1182 = vld [vmem:[#allocation3 + $0x30] sm:$0xff]
      %v1183 = vsel %vm716, 1, 0
      %v1184 = vsel %vm717, 1, 0
      %vm1185 = vcmp.eq.s32.totalorder %v1183, 1
      %vm1186 = vcmp.eq.s32.totalorder %v1184, 1
      %1193 = vrot.lane.b32.xlu0 %v1177, 15
      %v1194 = vpop.permute.xlu0 %1193
      %1195 = vrot.lane.b32.xlu0 %v1178, 15
      %v1196 = vpop.permute.xlu0 %1195
      %1197 = vrot.lane.b32.xlu0 %v1179, 15
      %v1198 = vpop.permute.xlu0 %1197
      %1199 = vrot.lane.b32.xlu0 %v1180, 15
      %v1200 = vpop.permute.xlu0 %1199
      %1201 = vrot.lane.b32.xlu0 %v1181, 15
      %v1202 = vpop.permute.xlu0 %1201
      %1203 = vrot.lane.b32.xlu0 %v1182, 15
      %v1204 = vpop.permute.xlu0 %1203
      %v1205 = vsel %vm737, %v1194, %v1196
      %v1206 = vsel %vm737, %v1196, %v1198
      %v1207 = vsel %vm737, %v1200, %v1202
      %v1208 = vsel %vm737, %v1202, %v1204
      %v1213 = vsel %vm1185, %v1205, 0.0
      %v1214 = vsel %vm1186, %v1206, 0.0
      %v1215 = vsel %vm1185, %v1207, 0.0
      %v1216 = vsel %vm1186, %v1208, 0.0
      %1217 = vst [vmem:[#allocation4 + $0x40] sm:$0xff] %v1213
      %1218 = vst [vmem:[#allocation4 + $0x48] sm:$0xff] %v1214
      %1219 = vst [vmem:[#allocation4 + $0x50] sm:$0xff] %v1215
      %1220 = vst [vmem:[#allocation4 + $0x58] sm:$0xff] %v1216
      %v1221 = vld [vmem:[#allocation3] sm:$0xff]
      %v1222 = vld [vmem:[#allocation3 + $0x8] sm:$0xff]
      %v1223 = vld [vmem:[#allocation3 + $0x10] sm:$0xff]
      %v1224 = vld [vmem:[#allocation3 + $0x20] sm:$0xff]
      %v1225 = vld [vmem:[#allocation3 + $0x28] sm:$0xff]
      %v1226 = vld [vmem:[#allocation3 + $0x30] sm:$0xff]
      %1233 = vrot.lane.b32.xlu0 %v1221, 1
      %v1234 = vpop.permute.xlu0 %1233
      %1235 = vrot.lane.b32.xlu0 %v1222, 1
      %v1236 = vpop.permute.xlu0 %1235
      %1237 = vrot.lane.b32.xlu0 %v1223, 1
      %v1238 = vpop.permute.xlu0 %1237
      %1239 = vrot.lane.b32.xlu0 %v1224, 1
      %v1240 = vpop.permute.xlu0 %1239
      %1241 = vrot.lane.b32.xlu0 %v1225, 1
      %v1242 = vpop.permute.xlu0 %1241
      %1243 = vrot.lane.b32.xlu0 %v1226, 1
      %v1244 = vpop.permute.xlu0 %1243
      %v1245 = vsel %vm785, %v1234, %v1236
      %v1246 = vsel %vm785, %v1236, %v1238
      %v1247 = vsel %vm785, %v1240, %v1242
      %v1248 = vsel %vm785, %v1242, %v1244
      %v1253 = vsel %vm1105, %v1245, 0.0
      %v1254 = vsel %vm1106, %v1246, 0.0
      %v1255 = vsel %vm1105, %v1247, 0.0
      %v1256 = vsel %vm1106, %v1248, 0.0
      %1257 = vst [vmem:[#allocation4 + $0x60] sm:$0xff] %v1253
      %1258 = vst [vmem:[#allocation4 + $0x68] sm:$0xff] %v1254
      %1259 = vst [vmem:[#allocation4 + $0x70] sm:$0xff] %v1255
      %1260 = vst [vmem:[#allocation4 + $0x78] sm:$0xff] %v1256
      %v1261 = vld [vmem:[#allocation3 + $0x8] sm:$0xff]
      %v1262 = vld [vmem:[#allocation3 + $0x10] sm:$0xff]
      %v1263 = vld [vmem:[#allocation3 + $0x28] sm:$0xff]
      %v1264 = vld [vmem:[#allocation3 + $0x30] sm:$0xff]
      %1265 = vst [vmem:[#allocation4 + $0x80] sm:$0xff] %v1261
      %1266 = vst [vmem:[#allocation4 + $0x88] sm:$0xff] %v1262
      %1267 = vst [vmem:[#allocation4 + $0x90] sm:$0xff] %v1263
      %1268 = vst [vmem:[#allocation4 + $0x98] sm:$0xff] %v1264
      %v1269 = vld [vmem:[#allocation3 + $0x8] sm:$0xff]
      %v1270 = vld [vmem:[#allocation3 + $0x10] sm:$0xff]
      %v1271 = vld [vmem:[#allocation3 + $0x18] sm:$0xff]
      %v1272 = vld [vmem:[#allocation3 + $0x28] sm:$0xff]
      %v1273 = vld [vmem:[#allocation3 + $0x30] sm:$0xff]
      %v1274 = vld [vmem:[#allocation3 + $0x38] sm:$0xff]
      %1281 = vrot.lane.b32.xlu0 %v1269, 127
      %v1282 = vpop.permute.xlu0 %1281
      %1283 = vrot.lane.b32.xlu0 %v1270, 127
      %v1284 = vpop.permute.xlu0 %1283
      %1285 = vrot.lane.b32.xlu0 %v1271, 127
      %v1286 = vpop.permute.xlu0 %1285
      %1287 = vrot.lane.b32.xlu0 %v1272, 127
      %v1288 = vpop.permute.xlu0 %1287
      %1289 = vrot.lane.b32.xlu0 %v1273, 127
      %v1290 = vpop.permute.xlu0 %1289
      %1291 = vrot.lane.b32.xlu0 %v1274, 127
      %v1292 = vpop.permute.xlu0 %1291
      %v1293 = vsel %vm837, %v1282, %v1284
      %v1294 = vsel %vm837, %v1284, %v1286
      %v1295 = vsel %vm837, %v1288, %v1290
      %v1296 = vsel %vm837, %v1290, %v1292
      %v1301 = vsel %vm1185, %v1293, 0.0
      %v1302 = vsel %vm1186, %v1294, 0.0
      %v1303 = vsel %vm1185, %v1295, 0.0
      %v1304 = vsel %vm1186, %v1296, 0.0
      %1305 = vst [vmem:[#allocation4 + $0xa0] sm:$0xff] %v1301
      %1306 = vst [vmem:[#allocation4 + $0xa8] sm:$0xff] %v1302
      %1307 = vst [vmem:[#allocation4 + $0xb0] sm:$0xff] %v1303
      %1308 = vst [vmem:[#allocation4 + $0xb8] sm:$0xff] %v1304
      %v1309 = vld [vmem:[#allocation3 + $0x8] sm:$0xff]
      %v1310 = vld [vmem:[#allocation3 + $0x10] sm:$0xff]
      %v1311 = vld [vmem:[#allocation3 + $0x18] sm:$0xff]
      %v1312 = vld [vmem:[#allocation3 + $0x28] sm:$0xff]
      %v1313 = vld [vmem:[#allocation3 + $0x30] sm:$0xff]
      %v1314 = vld [vmem:[#allocation3 + $0x38] sm:$0xff]
      %1321 = vrot.lane.b32.xlu0 %v1309, 113
      %v1322 = vpop.permute.xlu0 %1321
      %1323 = vrot.lane.b32.xlu0 %v1310, 113
      %v1324 = vpop.permute.xlu0 %1323
      %1325 = vrot.lane.b32.xlu0 %v1311, 113
      %v1326 = vpop.permute.xlu0 %1325
      %1327 = vrot.lane.b32.xlu0 %v1312, 113
      %v1328 = vpop.permute.xlu0 %1327
      %1329 = vrot.lane.b32.xlu0 %v1313, 113
      %v1330 = vpop.permute.xlu0 %1329
      %1331 = vrot.lane.b32.xlu0 %v1314, 113
      %v1332 = vpop.permute.xlu0 %1331
      %v1333 = vsel %vm885, %v1322, %v1324
      %v1334 = vsel %vm885, %v1324, %v1326
      %v1335 = vsel %vm885, %v1328, %v1330
      %v1336 = vsel %vm885, %v1330, %v1332
      %v1341 = vsel %vm1105, %v1333, 0.0
      %v1342 = vsel %vm1106, %v1334, 0.0
      %v1343 = vsel %vm1105, %v1335, 0.0
      %v1344 = vsel %vm1106, %v1336, 0.0
      %1345 = vst [vmem:[#allocation4 + $0xc0] sm:$0xff] %v1341
      %1346 = vst [vmem:[#allocation4 + $0xc8] sm:$0xff] %v1342
      %1347 = vst [vmem:[#allocation4 + $0xd0] sm:$0xff] %v1343
      %1348 = vst [vmem:[#allocation4 + $0xd8] sm:$0xff] %v1344
      %v1349 = vld [vmem:[#allocation3 + $0x8] sm:$0xff]
      %v1350 = vld [vmem:[#allocation3 + $0x10] sm:$0xff]
      %v1351 = vld [vmem:[#allocation3 + $0x18] sm:$0xff]
      %v1352 = vld [vmem:[#allocation3 + $0x28] sm:$0xff]
      %v1353 = vld [vmem:[#allocation3 + $0x30] sm:$0xff]
      %v1354 = vld [vmem:[#allocation3 + $0x38] sm:$0xff]
      %1361 = vrot.lane.b32.xlu0 %v1349, 112
      %v1362 = vpop.permute.xlu0 %1361
      %1363 = vrot.lane.b32.xlu0 %v1350, 112
      %v1364 = vpop.permute.xlu0 %1363
      %1365 = vrot.lane.b32.xlu0 %v1351, 112
      %v1366 = vpop.permute.xlu0 %1365
      %1367 = vrot.lane.b32.xlu0 %v1352, 112
      %v1368 = vpop.permute.xlu0 %1367
      %1369 = vrot.lane.b32.xlu0 %v1353, 112
      %v1370 = vpop.permute.xlu0 %1369
      %1371 = vrot.lane.b32.xlu0 %v1354, 112
      %v1372 = vpop.permute.xlu0 %1371
      %v1373 = vsel %vm918, %v1362, %v1364
      %v1374 = vsel %vm918, %v1364, %v1366
      %v1375 = vsel %vm918, %v1368, %v1370
      %v1376 = vsel %vm918, %v1370, %v1372
      %1381 = vst [vmem:[#allocation4 + $0xe0] sm:$0xff] %v1373
      %1382 = vst [vmem:[#allocation4 + $0xe8] sm:$0xff] %v1374
      %1383 = vst [vmem:[#allocation4 + $0xf0] sm:$0xff] %v1375
      %1384 = vst [vmem:[#allocation4 + $0xf8] sm:$0xff] %v1376
      %v1385 = vld [vmem:[#allocation3 + $0x8] sm:$0xff]
      %v1386 = vld [vmem:[#allocation3 + $0x10] sm:$0xff]
      %v1387 = vld [vmem:[#allocation3 + $0x18] sm:$0xff]
      %v1388 = vld [vmem:[#allocation3 + $0x28] sm:$0xff]
      %v1389 = vld [vmem:[#allocation3 + $0x30] sm:$0xff]
      %v1390 = vld [vmem:[#allocation3 + $0x38] sm:$0xff]
      %1397 = vrot.lane.b32.xlu0 %v1385, 111
      %v1398 = vpop.permute.xlu0 %1397
      %1399 = vrot.lane.b32.xlu0 %v1386, 111
      %v1400 = vpop.permute.xlu0 %1399
      %1401 = vrot.lane.b32.xlu0 %v1387, 111
      %v1402 = vpop.permute.xlu0 %1401
      %1403 = vrot.lane.b32.xlu0 %v1388, 111
      %v1404 = vpop.permute.xlu0 %1403
      %1405 = vrot.lane.b32.xlu0 %v1389, 111
      %v1406 = vpop.permute.xlu0 %1405
      %1407 = vrot.lane.b32.xlu0 %v1390, 111
      %v1408 = vpop.permute.xlu0 %1407
      %v1409 = vsel %vm944, %v1398, %v1400
      %v1410 = vsel %vm944, %v1400, %v1402
      %v1411 = vsel %vm944, %v1404, %v1406
      %v1412 = vsel %vm944, %v1406, %v1408
      %v1417 = vsel %vm1185, %v1409, 0.0
      %v1418 = vsel %vm1186, %v1410, 0.0
      %v1419 = vsel %vm1185, %v1411, 0.0
      %v1420 = vsel %vm1186, %v1412, 0.0
      %1421 = vst [vmem:[#allocation4 + $0x100] sm:$0xff] %v1417
      %1422 = vst [vmem:[#allocation4 + $0x108] sm:$0xff] %v1418
      %1423 = vst [vmem:[#allocation4 + $0x110] sm:$0xff] %v1419
      %1424 = vst [vmem:[#allocation4 + $0x118] sm:$0xff] %v1420
      %v1425 = vld [vmem:[%s2] sm:$0xff]
      %v1426 = vld [vmem:[%s2 + $0x8] sm:$0xff]
      %v1427 = vld [vmem:[%s2 + $0x10] sm:$0xff]
      %v1428 = vld [vmem:[%s2 + $0x18] sm:$0xff]
      %v1429 = vld [vmem:[#allocation4] sm:$0xff]
      %v1430 = vld [vmem:[#allocation4 + $0x8] sm:$0xff]
      %v1431 = vld [vmem:[#allocation4 + $0x10] sm:$0xff]
      %v1432 = vld [vmem:[#allocation4 + $0x18] sm:$0xff]
      %v1433 = vld [vmem:[#allocation4 + $0x20] sm:$0xff]
      %v1434 = vld [vmem:[#allocation4 + $0x28] sm:$0xff]
      %v1435 = vld [vmem:[#allocation4 + $0x30] sm:$0xff]
      %v1436 = vld [vmem:[#allocation4 + $0x38] sm:$0xff]
      %v1437 = vld [vmem:[#allocation4 + $0x40] sm:$0xff]
      %v1438 = vld [vmem:[#allocation4 + $0x48] sm:$0xff]
      %v1439 = vld [vmem:[#allocation4 + $0x50] sm:$0xff]
      %v1440 = vld [vmem:[#allocation4 + $0x58] sm:$0xff]
      %v1441 = vld [vmem:[#allocation4 + $0x60] sm:$0xff]
      %v1442 = vld [vmem:[#allocation4 + $0x68] sm:$0xff]
      %v1443 = vld [vmem:[#allocation4 + $0x70] sm:$0xff]
      %v1444 = vld [vmem:[#allocation4 + $0x78] sm:$0xff]
      %v1445 = vld [vmem:[#allocation4 + $0x80] sm:$0xff]
      %v1446 = vld [vmem:[#allocation4 + $0x88] sm:$0xff]
      %v1447 = vld [vmem:[#allocation4 + $0x90] sm:$0xff]
      %v1448 = vld [vmem:[#allocation4 + $0x98] sm:$0xff]
      %v1449 = vld [vmem:[#allocation4 + $0xa0] sm:$0xff]
      %v1450 = vld [vmem:[#allocation4 + $0xa8] sm:$0xff]
      %v1451 = vld [vmem:[#allocation4 + $0xb0] sm:$0xff]
      %v1452 = vld [vmem:[#allocation4 + $0xb8] sm:$0xff]
      %v1453 = vld [vmem:[#allocation4 + $0xc0] sm:$0xff]
      %v1454 = vld [vmem:[#allocation4 + $0xc8] sm:$0xff]
      %v1455 = vld [vmem:[#allocation4 + $0xd0] sm:$0xff]
      %v1456 = vld [vmem:[#allocation4 + $0xd8] sm:$0xff]
      %v1457 = vld [vmem:[#allocation4 + $0xe0] sm:$0xff]
      %v1458 = vld [vmem:[#allocation4 + $0xe8] sm:$0xff]
      %v1459 = vld [vmem:[#allocation4 + $0xf0] sm:$0xff]
      %v1460 = vld [vmem:[#allocation4 + $0xf8] sm:$0xff]
      %v1461 = vld [vmem:[#allocation4 + $0x100] sm:$0xff]
      %v1462 = vld [vmem:[#allocation4 + $0x108] sm:$0xff]
      %v1463 = vld [vmem:[#allocation4 + $0x110] sm:$0xff]
      %v1464 = vld [vmem:[#allocation4 + $0x118] sm:$0xff]
      %v1465 = vld [vmem:[%s10] sm:$0xff]
      %v1466 = vld [vmem:[%s10 + $0x8] sm:$0xff]
      %1468 = vset.pattern.permute.xlu0 0
      %1469 = vperm.xlu0 %1468, %v1465
      %v1470 = vpop.permute.xlu0 %1469
      %1473 = vset.pattern.permute.xlu0 0
      %1474 = vperm.xlu0 %1473, %v1466
      %v1475 = vpop.permute.xlu0 %1474
      %v1478 = vsel %vm709, %v1426, 0
      %v1481 = vsel %vm709, %v1428, 0
      %1483 = vmatprep.subr.mxu0 %v1430
      %1484 = vmatpush1.msra.mxu0 %v1429
      %1485 = vmatprep.subr.mxu0 %v1432
      %1486 = vmatpush1.msra.mxu0 %v1431
      %1487 = vmatprep.subr.mxu0 %v1434
      %1488 = vmatpush1.msra.mxu0 %v1433
      %1489 = vmatprep.subr.mxu0 %v1436
      %1490 = vmatpush1.msra.mxu0 %v1435
      %1491 = vmatprep.subr.mxu0 %v1438
      %1492 = vmatpush1.msra.mxu0 %v1437
      %1493 = vmatprep.subr.mxu0 %v1440
      %1494 = vmatpush1.msra.mxu0 %v1439
      %1495 = vmatprep.subr.mxu0 %v1442
      %1496 = vmatpush1.msra.mxu0 %v1441
      %1497 = vmatprep.subr.mxu0 %v1444
      %1498 = vmatpush1.msra.mxu0 %v1443
      %1499 = vmatprep.subr.mxu0 %v1446
      %1500 = vmatpush1.msra.mxu0 %v1445
      %1501 = vmatprep.subr.mxu0 %v1448
      %1502 = vmatpush1.msra.mxu0 %v1447
      %1503 = vmatprep.subr.mxu0 %v1450
      %1504 = vmatpush1.msra.mxu0 %v1449
      %1505 = vmatprep.subr.mxu0 %v1452
      %1506 = vmatpush1.msra.mxu0 %v1451
      %1507 = vmatprep.subr.mxu0 %v1454
      %1508 = vmatpush1.msra.mxu0 %v1453
      %1509 = vmatprep.subr.mxu0 %v1456
      %1510 = vmatpush1.msra.mxu0 %v1455
      %1511 = vmatprep.subr.mxu0 %v1458
      %1512 = vmatpush1.msra.mxu0 %v1457
      %1513 = vmatprep.subr.mxu0 %v1460
      %1514 = vmatpush1.msra.mxu0 %v1459
      %1515 = vmatprep.subr.mxu0 %v1462
      %1516 = vmatpush1.msra.mxu0 %v1461
      %1517 = vmatprep.subr.mxu0 %v1464
      %1518 = vmatpush1.msra.mxu0 %v1463
      %1519 = vmatprep.subr.mxu0 0.0
      %1520 = vmatpush1.msra.mxu0 0.0
      %1521 = vmatprep.subr.mxu0 0.0
      %1522 = vmatpush1.msra.mxu0 0.0
      %1523 = vmatprep.subr.mxu0 0.0
      %1524 = vmatpush1.msra.mxu0 0.0
      %1525 = vmatprep.subr.mxu0 0.0
      %1526 = vmatpush1.msra.mxu0 0.0
      %1527 = vmatprep.subr.mxu0 0.0
      %1528 = vmatpush1.msra.mxu0 0.0
      %1529 = vmatprep.subr.mxu0 0.0
      %1530 = vmatpush1.msra.mxu0 0.0
      %1531 = vmatprep.subr.mxu0 0.0
      %1532 = vmatpush1.msra.mxu0 0.0
      %1533 = vmatprep.subr.mxu0 0.0
      %1534 = vmatpush1.msra.mxu0 0.0
      %1535 = vmatprep.subr.mxu0 0.0
      %1536 = vmatpush1.msra.mxu0 0.0
      %1537 = vmatprep.subr.mxu0 0.0
      %1538 = vmatpush1.msra.mxu0 0.0
      %1539 = vmatprep.subr.mxu0 0.0
      %1540 = vmatpush1.msra.mxu0 0.0
      %1541 = vmatprep.subr.mxu0 0.0
      %1542 = vmatpush1.msra.mxu0 0.0
      %1543 = vmatprep.subr.mxu0 0.0
      %1544 = vmatpush1.msra.mxu0 0.0
      %1545 = vmatprep.subr.mxu0 0.0
      %1546 = vmatpush1.msra.mxu0 0.0
      %1547 = vmatprep.mubr.f32.mxu0 %v1478
      %1548 = vmatmul.mubr.f32.gmra.mrb[0].mxu0 %v1425
      %v1549 = vpop.f32.mrb[0].mxu0
      %v1550 = vadd.f32 %v1470, %v1549
      %v1551 = vpop.f32.mrb[0].mxu0
      %v1552 = vadd.f32 %v1470, %v1551
      %1553 = vmatprep.mubr.f32.mxu0 %v1481
      %1554 = vmatmul.mubr.f32.gmra.mrb[0].mxu0 %v1427
      %v1555 = vpop.f32.mrb[0].mxu0
      %v1556 = vadd.f32 %v1475, %v1555
      %v1557 = vpop.f32.mrb[0].mxu0
      %v1558 = vadd.f32 %v1475, %v1557
      %1559 = vdwg.mxu0
      %v1560 = vmax.f32 %v1550, 0.0
      %v1561 = vmax.f32 %v1552, 0.0
      %v1562 = vmax.f32 %v1556, 0.0
      %v1563 = vmax.f32 %v1558, 0.0
      %1564 = vst [vmem:[#allocation2] sm:$0xff] 0.0
      %1565 = vst [vmem:[#allocation2 + $0x8] sm:$0xff] 0.0
      %1566 = vst [vmem:[#allocation2 + $0x10] sm:$0xff] 0.0
      %1567 = vst [vmem:[#allocation2 + $0x18] sm:$0xff] 0.0
      %1568 = vst [vmem:[#allocation2 + $0x20] sm:$0xff] 0.0
      %1569 = vst [vmem:[#allocation2 + $0x28] sm:$0xff] 0.0
      %1570 = vst [vmem:[#allocation2 + $0x30] sm:$0xff] 0.0
      %1571 = vst [vmem:[#allocation2 + $0x38] sm:$0xff] 0.0
      %1572 = vst [vmem:[#allocation2 + $0x8] sm:$0xff] %v1560
      %1573 = vst [vmem:[#allocation2 + $0x10] sm:$0xff] %v1561
      %1574 = vst [vmem:[#allocation2 + $0x28] sm:$0xff] %v1562
      %1575 = vst [vmem:[#allocation2 + $0x30] sm:$0xff] %v1563
      %v1576 = vld [vmem:[#allocation2 + $0x8] sm:$0xff]
      %v1577 = vld [vmem:[#allocation2 + $0x10] sm:$0xff]
      %v1578 = vld [vmem:[#allocation2 + $0x28] sm:$0xff]
      %v1579 = vld [vmem:[#allocation2 + $0x30] sm:$0xff]
      %v1580 = vld [vmem:[%s17] sm:$0xff]
      %v1581 = vld [vmem:[%s17 + $0x8] sm:$0xff]
      %v1582 = vld [vmem:[%s17 + $0x10] sm:$0xff]
      %v1583 = vld [vmem:[%s17 + $0x18] sm:$0xff]
      %v1584 = vld [vmem:[%s17 + $0x20] sm:$0xff]
      %v1585 = vld [vmem:[%s17 + $0x28] sm:$0xff]
      %v1586 = vld [vmem:[%s17 + $0x30] sm:$0xff]
      %v1587 = vld [vmem:[%s17 + $0x38] sm:$0xff]
      %v1588 = vld [vmem:[%s17 + $0x40] sm:$0xff]
      %v1589 = vld [vmem:[%s17 + $0x48] sm:$0xff]
      %v1590 = vld [vmem:[%s17 + $0x50] sm:$0xff]
      %v1591 = vld [vmem:[%s17 + $0x58] sm:$0xff]
      %v1592 = vld [vmem:[%s17 + $0x60] sm:$0xff]
      %v1593 = vld [vmem:[%s17 + $0x68] sm:$0xff]
      %v1594 = vld [vmem:[%s17 + $0x70] sm:$0xff]
      %v1595 = vld [vmem:[%s17 + $0x78] sm:$0xff]
      %v1596 = vld [vmem:[%s17 + $0x80] sm:$0xff]
      %v1597 = vld [vmem:[%s17 + $0x88] sm:$0xff]
      %v1598 = vld [vmem:[%s17 + $0x90] sm:$0xff]
      %v1599 = vld [vmem:[%s17 + $0x98] sm:$0xff]
      %v1600 = vld [vmem:[%s17 + $0xa0] sm:$0xff]
      %v1601 = vld [vmem:[%s17 + $0xa8] sm:$0xff]
      %v1602 = vld [vmem:[%s17 + $0xb0] sm:$0xff]
      %v1603 = vld [vmem:[%s17 + $0xb8] sm:$0xff]
      %v1604 = vld [vmem:[%s17 + $0xc0] sm:$0xff]
      %v1605 = vld [vmem:[%s17 + $0xc8] sm:$0xff]
      %v1606 = vld [vmem:[%s17 + $0xd0] sm:$0xff]
      %v1607 = vld [vmem:[%s17 + $0xd8] sm:$0xff]
      %v1608 = vld [vmem:[%s17 + $0xe0] sm:$0xff]
      %v1609 = vld [vmem:[%s17 + $0xe8] sm:$0xff]
      %v1610 = vld [vmem:[%s17 + $0xf0] sm:$0xff]
      %v1611 = vld [vmem:[%s17 + $0xf8] sm:$0xff]
      %1612 = vmatprep.subr.mxu0 0.0
      %1613 = vmatpush1.msra.mxu0 %v1580
      %1614 = vmatprep.subr.mxu0 0.0
      %1615 = vmatpush1.msra.mxu0 %v1581
      %1616 = vmatprep.subr.mxu0 0.0
      %1617 = vmatpush1.msra.mxu0 %v1582
      %1618 = vmatprep.subr.mxu0 0.0
      %1619 = vmatpush1.msra.mxu0 %v1583
      %1620 = vmatprep.subr.mxu0 0.0
      %1621 = vmatpush1.msra.mxu0 %v1584
      %1622 = vmatprep.subr.mxu0 0.0
      %1623 = vmatpush1.msra.mxu0 %v1585
      %1624 = vmatprep.subr.mxu0 0.0
      %1625 = vmatpush1.msra.mxu0 %v1586
      %1626 = vmatprep.subr.mxu0 0.0
      %1627 = vmatpush1.msra.mxu0 %v1587
      %1628 = vmatprep.subr.mxu0 0.0
      %1629 = vmatpush1.msra.mxu0 %v1588
      %1630 = vmatprep.subr.mxu0 0.0
      %1631 = vmatpush1.msra.mxu0 %v1589
      %1632 = vmatprep.subr.mxu0 0.0
      %1633 = vmatpush1.msra.mxu0 %v1590
      %1634 = vmatprep.subr.mxu0 0.0
      %1635 = vmatpush1.msra.mxu0 %v1591
      %1636 = vmatprep.subr.mxu0 0.0
      %1637 = vmatpush1.msra.mxu0 %v1592
      %1638 = vmatprep.subr.mxu0 0.0
      %1639 = vmatpush1.msra.mxu0 %v1593
      %1640 = vmatprep.subr.mxu0 0.0
      %1641 = vmatpush1.msra.mxu0 %v1594
      %1642 = vmatprep.subr.mxu0 0.0
      %1643 = vmatpush1.msra.mxu0 %v1595
      %1644 = vmatprep.subr.mxu0 0.0
      %1645 = vmatpush1.msra.mxu0 %v1596
      %1646 = vmatprep.subr.mxu0 0.0
      %1647 = vmatpush1.msra.mxu0 %v1597
      %1648 = vmatprep.subr.mxu0 0.0
      %1649 = vmatpush1.msra.mxu0 %v1598
      %1650 = vmatprep.subr.mxu0 0.0
      %1651 = vmatpush1.msra.mxu0 %v1599
      %1652 = vmatprep.subr.mxu0 0.0
      %1653 = vmatpush1.msra.mxu0 %v1600
      %1654 = vmatprep.subr.mxu0 0.0
      %1655 = vmatpush1.msra.mxu0 %v1601
      %1656 = vmatprep.subr.mxu0 0.0
      %1657 = vmatpush1.msra.mxu0 %v1602
      %1658 = vmatprep.subr.mxu0 0.0
      %1659 = vmatpush1.msra.mxu0 %v1603
      %1660 = vmatprep.subr.mxu0 0.0
      %1661 = vmatpush1.msra.mxu0 %v1604
      %1662 = vmatprep.subr.mxu0 0.0
      %1663 = vmatpush1.msra.mxu0 %v1605
      %1664 = vmatprep.subr.mxu0 0.0
      %1665 = vmatpush1.msra.mxu0 %v1606
      %1666 = vmatprep.subr.mxu0 0.0
      %1667 = vmatpush1.msra.mxu0 %v1607
      %1668 = vmatprep.subr.mxu0 0.0
      %1669 = vmatpush1.msra.mxu0 %v1608
      %1670 = vmatprep.subr.mxu0 0.0
      %1671 = vmatpush1.msra.mxu0 %v1609
      %1672 = vmatprep.subr.mxu0 0.0
      %1673 = vmatpush1.msra.mxu0 %v1610
      %1674 = vmatprep.subr.mxu0 0.0
      %1675 = vmatpush1.msra.mxu0 %v1611
      %1676 = vmatprep.mubr.f32.mxu0 %v1577
      %1677 = vmatmul.mubr.f32.gmra.mrb[0].mxu0 %v1576
      %v1678 = vpop.f32.mrb[0].mxu0
      %v1679 = vadd.f32 0.0, %v1678
      %v1680 = vpop.f32.mrb[0].mxu0
      %1681 = vmatprep.mubr.f32.mxu0 %v1579
      %1682 = vmatmul.mubr.f32.gmra.mrb[0].mxu0 %v1578
      %v1683 = vpop.f32.mrb[0].mxu0
      %v1684 = vadd.f32 0.0, %v1683
      %v1685 = vpop.f32.mrb[0].mxu0
      %1686 = vdwg.mxu0
      %vm1687 = vcmask 523264
      %1688 = vst.msk [vmem:[#allocation4] sm:$0xff] %vm1687, %v1679
      %1689 = vst.msk [vmem:[#allocation4 + $0x10] sm:$0xff] %vm1687, %v1684
      %s1690 = scalar_lea.vmem %s17, 256
      %v1691 = vld [vmem:[%s1690] sm:$0xff]
      %v1692 = vld [vmem:[%s1690 + $0x8] sm:$0xff]
      %v1693 = vld [vmem:[%s1690 + $0x10] sm:$0xff]
      %v1694 = vld [vmem:[%s1690 + $0x18] sm:$0xff]
      %v1695 = vld [vmem:[%s1690 + $0x20] sm:$0xff]
      %v1696 = vld [vmem:[%s1690 + $0x28] sm:$0xff]
      %v1697 = vld [vmem:[%s1690 + $0x30] sm:$0xff]
      %v1698 = vld [vmem:[%s1690 + $0x38] sm:$0xff]
      %v1699 = vld [vmem:[%s1690 + $0x40] sm:$0xff]
      %v1700 = vld [vmem:[%s1690 + $0x48] sm:$0xff]
      %v1701 = vld [vmem:[%s1690 + $0x50] sm:$0xff]
      %v1702 = vld [vmem:[%s1690 + $0x58] sm:$0xff]
      %v1703 = vld [vmem:[%s1690 + $0x60] sm:$0xff]
      %v1704 = vld [vmem:[%s1690 + $0x68] sm:$0xff]
      %v1705 = vld [vmem:[%s1690 + $0x70] sm:$0xff]
      %v1706 = vld [vmem:[%s1690 + $0x78] sm:$0xff]
      %v1707 = vld [vmem:[%s1690 + $0x80] sm:$0xff]
      %v1708 = vld [vmem:[%s1690 + $0x88] sm:$0xff]
      %v1709 = vld [vmem:[%s1690 + $0x90] sm:$0xff]
      %v1710 = vld [vmem:[%s1690 + $0x98] sm:$0xff]
      %v1711 = vld [vmem:[%s1690 + $0xa0] sm:$0xff]
      %v1712 = vld [vmem:[%s1690 + $0xa8] sm:$0xff]
      %v1713 = vld [vmem:[%s1690 + $0xb0] sm:$0xff]
      %v1714 = vld [vmem:[%s1690 + $0xb8] sm:$0xff]
      %v1715 = vld [vmem:[%s1690 + $0xc0] sm:$0xff]
      %v1716 = vld [vmem:[%s1690 + $0xc8] sm:$0xff]
      %v1717 = vld [vmem:[%s1690 + $0xd0] sm:$0xff]
      %v1718 = vld [vmem:[%s1690 + $0xd8] sm:$0xff]
      %v1719 = vld [vmem:[%s1690 + $0xe0] sm:$0xff]
      %v1720 = vld [vmem:[%s1690 + $0xe8] sm:$0xff]
      %v1721 = vld [vmem:[%s1690 + $0xf0] sm:$0xff]
      %v1722 = vld [vmem:[%s1690 + $0xf8] sm:$0xff]
      %1723 = vmatprep.subr.mxu0 0.0
      %1724 = vmatpush1.msra.mxu0 %v1691
      %1725 = vmatprep.subr.mxu0 0.0
      %1726 = vmatpush1.msra.mxu0 %v1692
      %1727 = vmatprep.subr.mxu0 0.0
      %1728 = vmatpush1.msra.mxu0 %v1693
      %1729 = vmatprep.subr.mxu0 0.0
      %1730 = vmatpush1.msra.mxu0 %v1694
      %1731 = vmatprep.subr.mxu0 0.0
      %1732 = vmatpush1.msra.mxu0 %v1695
      %1733 = vmatprep.subr.mxu0 0.0
      %1734 = vmatpush1.msra.mxu0 %v1696
      %1735 = vmatprep.subr.mxu0 0.0
      %1736 = vmatpush1.msra.mxu0 %v1697
      %1737 = vmatprep.subr.mxu0 0.0
      %1738 = vmatpush1.msra.mxu0 %v1698
      %1739 = vmatprep.subr.mxu0 0.0
      %1740 = vmatpush1.msra.mxu0 %v1699
      %1741 = vmatprep.subr.mxu0 0.0
      %1742 = vmatpush1.msra.mxu0 %v1700
      %1743 = vmatprep.subr.mxu0 0.0
      %1744 = vmatpush1.msra.mxu0 %v1701
      %1745 = vmatprep.subr.mxu0 0.0
      %1746 = vmatpush1.msra.mxu0 %v1702
      %1747 = vmatprep.subr.mxu0 0.0
      %1748 = vmatpush1.msra.mxu0 %v1703
      %1749 = vmatprep.subr.mxu0 0.0
      %1750 = vmatpush1.msra.mxu0 %v1704
      %1751 = vmatprep.subr.mxu0 0.0
      %1752 = vmatpush1.msra.mxu0 %v1705
      %1753 = vmatprep.subr.mxu0 0.0
      %1754 = vmatpush1.msra.mxu0 %v1706
      %1755 = vmatprep.subr.mxu0 0.0
      %1756 = vmatpush1.msra.mxu0 %v1707
      %1757 = vmatprep.subr.mxu0 0.0
      %1758 = vmatpush1.msra.mxu0 %v1708
      %1759 = vmatprep.subr.mxu0 0.0
      %1760 = vmatpush1.msra.mxu0 %v1709
      %1761 = vmatprep.subr.mxu0 0.0
      %1762 = vmatpush1.msra.mxu0 %v1710
      %1763 = vmatprep.subr.mxu0 0.0
      %1764 = vmatpush1.msra.mxu0 %v1711
      %1765 = vmatprep.subr.mxu0 0.0
      %1766 = vmatpush1.msra.mxu0 %v1712
      %1767 = vmatprep.subr.mxu0 0.0
      %1768 = vmatpush1.msra.mxu0 %v1713
      %1769 = vmatprep.subr.mxu0 0.0
      %1770 = vmatpush1.msra.mxu0 %v1714
      %1771 = vmatprep.subr.mxu0 0.0
      %1772 = vmatpush1.msra.mxu0 %v1715
      %1773 = vmatprep.subr.mxu0 0.0
      %1774 = vmatpush1.msra.mxu0 %v1716
      %1775 = vmatprep.subr.mxu0 0.0
      %1776 = vmatpush1.msra.mxu0 %v1717
      %1777 = vmatprep.subr.mxu0 0.0
      %1778 = vmatpush1.msra.mxu0 %v1718
      %1779 = vmatprep.subr.mxu0 0.0
      %1780 = vmatpush1.msra.mxu0 %v1719
      %1781 = vmatprep.subr.mxu0 0.0
      %1782 = vmatpush1.msra.mxu0 %v1720
      %1783 = vmatprep.subr.mxu0 0.0
      %1784 = vmatpush1.msra.mxu0 %v1721
      %1785 = vmatprep.subr.mxu0 0.0
      %1786 = vmatpush1.msra.mxu0 %v1722
      %1787 = vmatprep.mubr.f32.mxu0 %v1577
      %1788 = vmatmul.mubr.f32.gmra.mrb[0].mxu0 %v1576
      %v1789 = vpop.f32.mrb[0].mxu0
      %v1790 = vadd.f32 0.0, %v1789
      %v1791 = vpop.f32.mrb[0].mxu0
      %1792 = vmatprep.mubr.f32.mxu0 %v1579
      %1793 = vmatmul.mubr.f32.gmra.mrb[0].mxu0 %v1578
      %v1794 = vpop.f32.mrb[0].mxu0
      %v1795 = vadd.f32 0.0, %v1794
      %v1796 = vpop.f32.mrb[0].mxu0
      %1797 = vdwg.mxu0
      %1798 = vst.msk [vmem:[#allocation4 + $0x20] sm:$0xff] %vm1687, %v1790
      %1799 = vst.msk [vmem:[#allocation4 + $0x30] sm:$0xff] %vm1687, %v1795
      %s1800 = scalar_lea.vmem %s17, 512
      %v1801 = vld [vmem:[%s1800] sm:$0xff]
      %v1802 = vld [vmem:[%s1800 + $0x8] sm:$0xff]
      %v1803 = vld [vmem:[%s1800 + $0x10] sm:$0xff]
      %v1804 = vld [vmem:[%s1800 + $0x18] sm:$0xff]
      %v1805 = vld [vmem:[%s1800 + $0x20] sm:$0xff]
      %v1806 = vld [vmem:[%s1800 + $0x28] sm:$0xff]
      %v1807 = vld [vmem:[%s1800 + $0x30] sm:$0xff]
      %v1808 = vld [vmem:[%s1800 + $0x38] sm:$0xff]
      %v1809 = vld [vmem:[%s1800 + $0x40] sm:$0xff]
      %v1810 = vld [vmem:[%s1800 + $0x48] sm:$0xff]
      %v1811 = vld [vmem:[%s1800 + $0x50] sm:$0xff]
      %v1812 = vld [vmem:[%s1800 + $0x58] sm:$0xff]
      %v1813 = vld [vmem:[%s1800 + $0x60] sm:$0xff]
      %v1814 = vld [vmem:[%s1800 + $0x68] sm:$0xff]
      %v1815 = vld [vmem:[%s1800 + $0x70] sm:$0xff]
      %v1816 = vld [vmem:[%s1800 + $0x78] sm:$0xff]
      %v1817 = vld [vmem:[%s1800 + $0x80] sm:$0xff]
      %v1818 = vld [vmem:[%s1800 + $0x88] sm:$0xff]
      %v1819 = vld [vmem:[%s1800 + $0x90] sm:$0xff]
      %v1820 = vld [vmem:[%s1800 + $0x98] sm:$0xff]
      %v1821 = vld [vmem:[%s1800 + $0xa0] sm:$0xff]
      %v1822 = vld [vmem:[%s1800 + $0xa8] sm:$0xff]
      %v1823 = vld [vmem:[%s1800 + $0xb0] sm:$0xff]
      %v1824 = vld [vmem:[%s1800 + $0xb8] sm:$0xff]
      %v1825 = vld [vmem:[%s1800 + $0xc0] sm:$0xff]
      %v1826 = vld [vmem:[%s1800 + $0xc8] sm:$0xff]
      %v1827 = vld [vmem:[%s1800 + $0xd0] sm:$0xff]
      %v1828 = vld [vmem:[%s1800 + $0xd8] sm:$0xff]
      %v1829 = vld [vmem:[%s1800 + $0xe0] sm:$0xff]
      %v1830 = vld [vmem:[%s1800 + $0xe8] sm:$0xff]
      %v1831 = vld [vmem:[%s1800 + $0xf0] sm:$0xff]
      %v1832 = vld [vmem:[%s1800 + $0xf8] sm:$0xff]
      %1833 = vmatprep.subr.mxu0 0.0
      %1834 = vmatpush1.msra.mxu0 %v1801
      %1835 = vmatprep.subr.mxu0 0.0
      %1836 = vmatpush1.msra.mxu0 %v1802
      %1837 = vmatprep.subr.mxu0 0.0
      %1838 = vmatpush1.msra.mxu0 %v1803
      %1839 = vmatprep.subr.mxu0 0.0
      %1840 = vmatpush1.msra.mxu0 %v1804
      %1841 = vmatprep.subr.mxu0 0.0
      %1842 = vmatpush1.msra.mxu0 %v1805
      %1843 = vmatprep.subr.mxu0 0.0
      %1844 = vmatpush1.msra.mxu0 %v1806
      %1845 = vmatprep.subr.mxu0 0.0
      %1846 = vmatpush1.msra.mxu0 %v1807
      %1847 = vmatprep.subr.mxu0 0.0
      %1848 = vmatpush1.msra.mxu0 %v1808
      %1849 = vmatprep.subr.mxu0 0.0
      %1850 = vmatpush1.msra.mxu0 %v1809
      %1851 = vmatprep.subr.mxu0 0.0
      %1852 = vmatpush1.msra.mxu0 %v1810
      %1853 = vmatprep.subr.mxu0 0.0
      %1854 = vmatpush1.msra.mxu0 %v1811
      %1855 = vmatprep.subr.mxu0 0.0
      %1856 = vmatpush1.msra.mxu0 %v1812
      %1857 = vmatprep.subr.mxu0 0.0
      %1858 = vmatpush1.msra.mxu0 %v1813
      %1859 = vmatprep.subr.mxu0 0.0
      %1860 = vmatpush1.msra.mxu0 %v1814
      %1861 = vmatprep.subr.mxu0 0.0
      %1862 = vmatpush1.msra.mxu0 %v1815
      %1863 = vmatprep.subr.mxu0 0.0
      %1864 = vmatpush1.msra.mxu0 %v1816
      %1865 = vmatprep.subr.mxu0 0.0
      %1866 = vmatpush1.msra.mxu0 %v1817
      %1867 = vmatprep.subr.mxu0 0.0
      %1868 = vmatpush1.msra.mxu0 %v1818
      %1869 = vmatprep.subr.mxu0 0.0
      %1870 = vmatpush1.msra.mxu0 %v1819
      %1871 = vmatprep.subr.mxu0 0.0
      %1872 = vmatpush1.msra.mxu0 %v1820
      %1873 = vmatprep.subr.mxu0 0.0
      %1874 = vmatpush1.msra.mxu0 %v1821
      %1875 = vmatprep.subr.mxu0 0.0
      %1876 = vmatpush1.msra.mxu0 %v1822
      %1877 = vmatprep.subr.mxu0 0.0
      %1878 = vmatpush1.msra.mxu0 %v1823
      %1879 = vmatprep.subr.mxu0 0.0
      %1880 = vmatpush1.msra.mxu0 %v1824
      %1881 = vmatprep.subr.mxu0 0.0
      %1882 = vmatpush1.msra.mxu0 %v1825
      %1883 = vmatprep.subr.mxu0 0.0
      %1884 = vmatpush1.msra.mxu0 %v1826
      %1885 = vmatprep.subr.mxu0 0.0
      %1886 = vmatpush1.msra.mxu0 %v1827
      %1887 = vmatprep.subr.mxu0 0.0
      %1888 = vmatpush1.msra.mxu0 %v1828
      %1889 = vmatprep.subr.mxu0 0.0
      %1890 = vmatpush1.msra.mxu0 %v1829
      %1891 = vmatprep.subr.mxu0 0.0
      %1892 = vmatpush1.msra.mxu0 %v1830
      %1893 = vmatprep.subr.mxu0 0.0
      %1894 = vmatpush1.msra.mxu0 %v1831
      %1895 = vmatprep.subr.mxu0 0.0
      %1896 = vmatpush1.msra.mxu0 %v1832
      %1897 = vmatprep.mubr.f32.mxu0 %v1577
      %1898 = vmatmul.mubr.f32.gmra.mrb[0].mxu0 %v1576
      %v1899 = vpop.f32.mrb[0].mxu0
      %v1900 = vadd.f32 0.0, %v1899
      %v1901 = vpop.f32.mrb[0].mxu0
      %1902 = vmatprep.mubr.f32.mxu0 %v1579
      %1903 = vmatmul.mubr.f32.gmra.mrb[0].mxu0 %v1578
      %v1904 = vpop.f32.mrb[0].mxu0
      %v1905 = vadd.f32 0.0, %v1904
      %v1906 = vpop.f32.mrb[0].mxu0
      %1907 = vdwg.mxu0
      %1908 = vst.msk [vmem:[#allocation4 + $0x40] sm:$0xff] %vm1687, %v1900
      %1909 = vst.msk [vmem:[#allocation4 + $0x50] sm:$0xff] %vm1687, %v1905
      %s1910 = scalar_lea.vmem %s17, 768
      %v1911 = vld [vmem:[%s1910] sm:$0xff]
      %v1912 = vld [vmem:[%s1910 + $0x8] sm:$0xff]
      %v1913 = vld [vmem:[%s1910 + $0x10] sm:$0xff]
      %v1914 = vld [vmem:[%s1910 + $0x18] sm:$0xff]
      %v1915 = vld [vmem:[%s1910 + $0x20] sm:$0xff]
      %v1916 = vld [vmem:[%s1910 + $0x28] sm:$0xff]
      %v1917 = vld [vmem:[%s1910 + $0x30] sm:$0xff]
      %v1918 = vld [vmem:[%s1910 + $0x38] sm:$0xff]
      %v1919 = vld [vmem:[%s1910 + $0x40] sm:$0xff]
      %v1920 = vld [vmem:[%s1910 + $0x48] sm:$0xff]
      %v1921 = vld [vmem:[%s1910 + $0x50] sm:$0xff]
      %v1922 = vld [vmem:[%s1910 + $0x58] sm:$0xff]
      %v1923 = vld [vmem:[%s1910 + $0x60] sm:$0xff]
      %v1924 = vld [vmem:[%s1910 + $0x68] sm:$0xff]
      %v1925 = vld [vmem:[%s1910 + $0x70] sm:$0xff]
      %v1926 = vld [vmem:[%s1910 + $0x78] sm:$0xff]
      %v1927 = vld [vmem:[%s1910 + $0x80] sm:$0xff]
      %v1928 = vld [vmem:[%s1910 + $0x88] sm:$0xff]
      %v1929 = vld [vmem:[%s1910 + $0x90] sm:$0xff]
      %v1930 = vld [vmem:[%s1910 + $0x98] sm:$0xff]
      %v1931 = vld [vmem:[%s1910 + $0xa0] sm:$0xff]
      %v1932 = vld [vmem:[%s1910 + $0xa8] sm:$0xff]
      %v1933 = vld [vmem:[%s1910 + $0xb0] sm:$0xff]
      %v1934 = vld [vmem:[%s1910 + $0xb8] sm:$0xff]
      %v1935 = vld [vmem:[%s1910 + $0xc0] sm:$0xff]
      %v1936 = vld [vmem:[%s1910 + $0xc8] sm:$0xff]
      %v1937 = vld [vmem:[%s1910 + $0xd0] sm:$0xff]
      %v1938 = vld [vmem:[%s1910 + $0xd8] sm:$0xff]
      %v1939 = vld [vmem:[%s1910 + $0xe0] sm:$0xff]
      %v1940 = vld [vmem:[%s1910 + $0xe8] sm:$0xff]
      %v1941 = vld [vmem:[%s1910 + $0xf0] sm:$0xff]
      %v1942 = vld [vmem:[%s1910 + $0xf8] sm:$0xff]
      %1943 = vmatprep.subr.mxu0 0.0
      %1944 = vmatpush1.msra.mxu0 %v1911
      %1945 = vmatprep.subr.mxu0 0.0
      %1946 = vmatpush1.msra.mxu0 %v1912
      %1947 = vmatprep.subr.mxu0 0.0
      %1948 = vmatpush1.msra.mxu0 %v1913
      %1949 = vmatprep.subr.mxu0 0.0
      %1950 = vmatpush1.msra.mxu0 %v1914
      %1951 = vmatprep.subr.mxu0 0.0
      %1952 = vmatpush1.msra.mxu0 %v1915
      %1953 = vmatprep.subr.mxu0 0.0
      %1954 = vmatpush1.msra.mxu0 %v1916
      %1955 = vmatprep.subr.mxu0 0.0
      %1956 = vmatpush1.msra.mxu0 %v1917
      %1957 = vmatprep.subr.mxu0 0.0
      %1958 = vmatpush1.msra.mxu0 %v1918
      %1959 = vmatprep.subr.mxu0 0.0
      %1960 = vmatpush1.msra.mxu0 %v1919
      %1961 = vmatprep.subr.mxu0 0.0
      %1962 = vmatpush1.msra.mxu0 %v1920
      %1963 = vmatprep.subr.mxu0 0.0
      %1964 = vmatpush1.msra.mxu0 %v1921
      %1965 = vmatprep.subr.mxu0 0.0
      %1966 = vmatpush1.msra.mxu0 %v1922
      %1967 = vmatprep.subr.mxu0 0.0
      %1968 = vmatpush1.msra.mxu0 %v1923
      %1969 = vmatprep.subr.mxu0 0.0
      %1970 = vmatpush1.msra.mxu0 %v1924
      %1971 = vmatprep.subr.mxu0 0.0
      %1972 = vmatpush1.msra.mxu0 %v1925
      %1973 = vmatprep.subr.mxu0 0.0
      %1974 = vmatpush1.msra.mxu0 %v1926
      %1975 = vmatprep.subr.mxu0 0.0
      %1976 = vmatpush1.msra.mxu0 %v1927
      %1977 = vmatprep.subr.mxu0 0.0
      %1978 = vmatpush1.msra.mxu0 %v1928
      %1979 = vmatprep.subr.mxu0 0.0
      %1980 = vmatpush1.msra.mxu0 %v1929
      %1981 = vmatprep.subr.mxu0 0.0
      %1982 = vmatpush1.msra.mxu0 %v1930
      %1983 = vmatprep.subr.mxu0 0.0
      %1984 = vmatpush1.msra.mxu0 %v1931
      %1985 = vmatprep.subr.mxu0 0.0
      %1986 = vmatpush1.msra.mxu0 %v1932
      %1987 = vmatprep.subr.mxu0 0.0
      %1988 = vmatpush1.msra.mxu0 %v1933
      %1989 = vmatprep.subr.mxu0 0.0
      %1990 = vmatpush1.msra.mxu0 %v1934
      %1991 = vmatprep.subr.mxu0 0.0
      %1992 = vmatpush1.msra.mxu0 %v1935
      %1993 = vmatprep.subr.mxu0 0.0
      %1994 = vmatpush1.msra.mxu0 %v1936
      %1995 = vmatprep.subr.mxu0 0.0
      %1996 = vmatpush1.msra.mxu0 %v1937
      %1997 = vmatprep.subr.mxu0 0.0
      %1998 = vmatpush1.msra.mxu0 %v1938
      %1999 = vmatprep.subr.mxu0 0.0
      %2000 = vmatpush1.msra.mxu0 %v1939
      %2001 = vmatprep.subr.mxu0 0.0
      %2002 = vmatpush1.msra.mxu0 %v1940
      %2003 = vmatprep.subr.mxu0 0.0
      %2004 = vmatpush1.msra.mxu0 %v1941
      %2005 = vmatprep.subr.mxu0 0.0
      %2006 = vmatpush1.msra.mxu0 %v1942
      %2007 = vmatprep.mubr.f32.mxu0 %v1577
      %2008 = vmatmul.mubr.f32.gmra.mrb[0].mxu0 %v1576
      %v2009 = vpop.f32.mrb[0].mxu0
      %v2010 = vadd.f32 0.0, %v2009
      %v2011 = vpop.f32.mrb[0].mxu0
      %2012 = vmatprep.mubr.f32.mxu0 %v1579
      %2013 = vmatmul.mubr.f32.gmra.mrb[0].mxu0 %v1578
      %v2014 = vpop.f32.mrb[0].mxu0
      %v2015 = vadd.f32 0.0, %v2014
      %v2016 = vpop.f32.mrb[0].mxu0
      %2017 = vdwg.mxu0
      %2018 = vst.msk [vmem:[#allocation4 + $0x60] sm:$0xff] %vm1687, %v2010
      %2019 = vst.msk [vmem:[#allocation4 + $0x70] sm:$0xff] %vm1687, %v2015
      %v2020 = vld [vmem:[%s3] sm:$0xff]
      %v2021 = vld [vmem:[%s3 + $0x8] sm:$0xff]
      %v2022 = vld [vmem:[#allocation4] sm:$0xff]
      %v2023 = vld [vmem:[#allocation4 + $0x10] sm:$0xff]
      %v2024 = vld [vmem:[#allocation4 + $0x20] sm:$0xff]
      %v2025 = vld [vmem:[#allocation4 + $0x30] sm:$0xff]
      %v2026 = vld [vmem:[#allocation4 + $0x40] sm:$0xff]
      %v2027 = vld [vmem:[#allocation4 + $0x50] sm:$0xff]
      %v2028 = vld [vmem:[#allocation4 + $0x60] sm:$0xff]
      %v2029 = vld [vmem:[#allocation4 + $0x70] sm:$0xff]
      %v2030 = vld [vmem:[%s11] sm:$0xff]
      %v2031 = vld [vmem:[%s11 + $0x8] sm:$0xff]
      %2033 = vset.pattern.permute.xlu0 0
      %2034 = vperm.xlu0 %2033, %v2030
      %v2035 = vpop.permute.xlu0 %2034
      %2038 = vset.pattern.permute.xlu0 0
      %2039 = vperm.xlu0 %2038, %v2031
      %v2040 = vpop.permute.xlu0 %2039
      %v2043 = vsel %vm1687, %v2020, 0
      %v2046 = vsel %vm1687, %v2021, 0
      %2048 = vmatprep.subr.mxu0 0.0
      %2049 = vmatpush1.msra.mxu0 %v2022
      %2050 = vmatprep.subr.mxu0 0.0
      %2051 = vmatpush1.msra.mxu0 %v2023
      %2052 = vmatprep.subr.mxu0 0.0
      %2053 = vmatpush1.msra.mxu0 %v2024
      %2054 = vmatprep.subr.mxu0 0.0
      %2055 = vmatpush1.msra.mxu0 %v2025
      %2056 = vmatprep.subr.mxu0 0.0
      %2057 = vmatpush1.msra.mxu0 %v2026
      %2058 = vmatprep.subr.mxu0 0.0
      %2059 = vmatpush1.msra.mxu0 %v2027
      %2060 = vmatprep.subr.mxu0 0.0
      %2061 = vmatpush1.msra.mxu0 %v2028
      %2062 = vmatprep.subr.mxu0 0.0
      %2063 = vmatpush1.msra.mxu0 %v2029
      %2064 = vmatprep.subr.mxu0 0.0
      %2065 = vmatpush1.msra.mxu0 0.0
      %2066 = vmatprep.subr.mxu0 0.0
      %2067 = vmatpush1.msra.mxu0 0.0
      %2068 = vmatprep.subr.mxu0 0.0
      %2069 = vmatpush1.msra.mxu0 0.0
      %2070 = vmatprep.subr.mxu0 0.0
      %2071 = vmatpush1.msra.mxu0 0.0
      %2072 = vmatprep.subr.mxu0 0.0
      %2073 = vmatpush1.msra.mxu0 0.0
      %2074 = vmatprep.subr.mxu0 0.0
      %2075 = vmatpush1.msra.mxu0 0.0
      %2076 = vmatprep.subr.mxu0 0.0
      %2077 = vmatpush1.msra.mxu0 0.0
      %2078 = vmatprep.subr.mxu0 0.0
      %2079 = vmatpush1.msra.mxu0 0.0
      %2080 = vmatprep.subr.mxu0 0.0
      %2081 = vmatpush1.msra.mxu0 0.0
      %2082 = vmatprep.subr.mxu0 0.0
      %2083 = vmatpush1.msra.mxu0 0.0
      %2084 = vmatprep.subr.mxu0 0.0
      %2085 = vmatpush1.msra.mxu0 0.0
      %2086 = vmatprep.subr.mxu0 0.0
      %2087 = vmatpush1.msra.mxu0 0.0
      %2088 = vmatprep.subr.mxu0 0.0
      %2089 = vmatpush1.msra.mxu0 0.0
      %2090 = vmatprep.subr.mxu0 0.0
      %2091 = vmatpush1.msra.mxu0 0.0
      %2092 = vmatprep.subr.mxu0 0.0
      %2093 = vmatpush1.msra.mxu0 0.0
      %2094 = vmatprep.subr.mxu0 0.0
      %2095 = vmatpush1.msra.mxu0 0.0
      %2096 = vmatprep.subr.mxu0 0.0
      %2097 = vmatpush1.msra.mxu0 0.0
      %2098 = vmatprep.subr.mxu0 0.0
      %2099 = vmatpush1.msra.mxu0 0.0
      %2100 = vmatprep.subr.mxu0 0.0
      %2101 = vmatpush1.msra.mxu0 0.0
      %2102 = vmatprep.subr.mxu0 0.0
      %2103 = vmatpush1.msra.mxu0 0.0
      %2104 = vmatprep.subr.mxu0 0.0
      %2105 = vmatpush1.msra.mxu0 0.0
      %2106 = vmatprep.subr.mxu0 0.0
      %2107 = vmatpush1.msra.mxu0 0.0
      %2108 = vmatprep.subr.mxu0 0.0
      %2109 = vmatpush1.msra.mxu0 0.0
      %2110 = vmatprep.subr.mxu0 0.0
      %2111 = vmatpush1.msra.mxu0 0.0
      %2112 = vmatprep.mubr.f32.mxu0 0.0
      %2113 = vmatmul.mubr.f32.gmra.mrb[0].mxu0 %v2043
      %v2114 = vpop.f32.mrb[0].mxu0
      %v2115 = vadd.f32 %v2035, %v2114
      %v2116 = vpop.f32.mrb[0].mxu0
      %2117 = vmatprep.mubr.f32.mxu0 0.0
      %2118 = vmatmul.mubr.f32.gmra.mrb[0].mxu0 %v2046
      %v2119 = vpop.f32.mrb[0].mxu0
      %v2120 = vadd.f32 %v2040, %v2119
      %v2121 = vpop.f32.mrb[0].mxu0
      %2122 = vdwg.mxu0
      %v2123 = vmax.f32 %v2115, 0.0
      %v2124 = vmax.f32 %v2120, 0.0
      %2125 = vst [vmem:[#allocation3] sm:$0xff] 0.0
      %2126 = vst [vmem:[#allocation3 + $0x8] sm:$0xff] 0.0
      %2127 = vst [vmem:[#allocation3 + $0x10] sm:$0xff] 0.0
      %2128 = vst [vmem:[#allocation3 + $0x18] sm:$0xff] 0.0
      %2129 = vst [vmem:[#allocation3 + $0x20] sm:$0xff] 0.0
      %2130 = vst [vmem:[#allocation3 + $0x28] sm:$0xff] 0.0
      %2131 = vst [vmem:[#allocation3 + $0x30] sm:$0xff] 0.0
      %2132 = vst [vmem:[#allocation3 + $0x38] sm:$0xff] 0.0
      %2133 = vst.msk [vmem:[#allocation3 + $0x8] sm:$0xff] %vm1687, %v2123
      %2134 = vst.msk [vmem:[#allocation3 + $0x28] sm:$0xff] %vm1687, %v2124
      %v2135 = vld [vmem:[#allocation3] sm:$0xff]
      %v2136 = vld [vmem:[#allocation3 + $0x8] sm:$0xff]
      %v2137 = vld [vmem:[#allocation3 + $0x20] sm:$0xff]
      %v2138 = vld [vmem:[#allocation3 + $0x28] sm:$0xff]
      %vm2139 = vcmp.ge.s32.totalorder %v638, 1
      %v2140 = vsel %vm2139, 1, 0
      %vm2141 = vcmp.eq.s32.totalorder %v2140, 1
      %2146 = vrot.lane.b32.xlu0 %v2135, 9
      %v2147 = vpop.permute.xlu0 %2146
      %2148 = vrot.lane.b32.xlu0 %v2136, 9
      %v2149 = vpop.permute.xlu0 %2148
      %2150 = vrot.lane.b32.xlu0 %v2137, 9
      %v2151 = vpop.permute.xlu0 %2150
      %2152 = vrot.lane.b32.xlu0 %v2138, 9
      %v2153 = vpop.permute.xlu0 %2152
      %v2154 = vsel %vm990, %v2147, %v2149
      %v2155 = vsel %vm990, %v2151, %v2153
      %v2158 = vsel %vm2141, %v2154, 0.0
      %v2159 = vsel %vm2141, %v2155, 0.0
      %2160 = vst.msk [vmem:[#allocation4] sm:$0xff] %vm1687, %v2158
      %2161 = vst.msk [vmem:[#allocation4 + $0x10] sm:$0xff] %vm1687, %v2159
      %v2162 = vld [vmem:[#allocation3] sm:$0xff]
      %v2163 = vld [vmem:[#allocation3 + $0x8] sm:$0xff]
      %v2164 = vld [vmem:[#allocation3 + $0x20] sm:$0xff]
      %v2165 = vld [vmem:[#allocation3 + $0x28] sm:$0xff]
      %2170 = vrot.lane.b32.xlu0 %v2162, 8
      %v2171 = vpop.permute.xlu0 %2170
      %2172 = vrot.lane.b32.xlu0 %v2163, 8
      %v2173 = vpop.permute.xlu0 %2172
      %2174 = vrot.lane.b32.xlu0 %v2164, 8
      %v2175 = vpop.permute.xlu0 %2174
      %2176 = vrot.lane.b32.xlu0 %v2165, 8
      %v2177 = vpop.permute.xlu0 %2176
      %vm2178 = vcmask 64512
      %v2179 = vsel %vm2178, %v2171, %v2173
      %v2180 = vsel %vm2178, %v2175, %v2177
      %2183 = vst.msk [vmem:[#allocation4 + $0x20] sm:$0xff] %vm1687, %v2179
      %2184 = vst.msk [vmem:[#allocation4 + $0x30] sm:$0xff] %vm1687, %v2180
      %v2185 = vld [vmem:[#allocation3] sm:$0xff]
      %v2186 = vld [vmem:[#allocation3 + $0x8] sm:$0xff]
      %v2187 = vld [vmem:[#allocation3 + $0x20] sm:$0xff]
      %v2188 = vld [vmem:[#allocation3 + $0x28] sm:$0xff]
      %vm2189 = vcmp.le.s32.totalorder %v638, 6
      %v2190 = vsel %vm2189, 1, 0
      %vm2191 = vcmp.eq.s32.totalorder %v2190, 1
      %2196 = vrot.lane.b32.xlu0 %v2185, 7
      %v2197 = vpop.permute.xlu0 %2196
      %2198 = vrot.lane.b32.xlu0 %v2186, 7
      %v2199 = vpop.permute.xlu0 %2198
      %2200 = vrot.lane.b32.xlu0 %v2187, 7
      %v2201 = vpop.permute.xlu0 %2200
      %2202 = vrot.lane.b32.xlu0 %v2188, 7
      %v2203 = vpop.permute.xlu0 %2202
      %vm2204 = vcmask 56320
      %v2205 = vsel %vm2204, %v2197, %v2199
      %v2206 = vsel %vm2204, %v2201, %v2203
      %v2209 = vsel %vm2191, %v2205, 0.0
      %v2210 = vsel %vm2191, %v2206, 0.0
      %2211 = vst.msk [vmem:[#allocation4 + $0x40] sm:$0xff] %vm1687, %v2209
      %2212 = vst.msk [vmem:[#allocation4 + $0x50] sm:$0xff] %vm1687, %v2210
      %v2213 = vld [vmem:[#allocation3] sm:$0xff]
      %v2214 = vld [vmem:[#allocation3 + $0x8] sm:$0xff]
      %v2215 = vld [vmem:[#allocation3 + $0x20] sm:$0xff]
      %v2216 = vld [vmem:[#allocation3 + $0x28] sm:$0xff]
      %2221 = vrot.lane.b32.xlu0 %v2213, 1
      %v2222 = vpop.permute.xlu0 %2221
      %2223 = vrot.lane.b32.xlu0 %v2214, 1
      %v2224 = vpop.permute.xlu0 %2223
      %2225 = vrot.lane.b32.xlu0 %v2215, 1
      %v2226 = vpop.permute.xlu0 %2225
      %2227 = vrot.lane.b32.xlu0 %v2216, 1
      %v2228 = vpop.permute.xlu0 %2227
      %v2229 = vsel %vm785, %v2222, %v2224
      %v2230 = vsel %vm785, %v2226, %v2228
      %v2233 = vsel %vm2141, %v2229, 0.0
      %v2234 = vsel %vm2141, %v2230, 0.0
      %2235 = vst.msk [vmem:[#allocation4 + $0x60] sm:$0xff] %vm1687, %v2233
      %2236 = vst.msk [vmem:[#allocation4 + $0x70] sm:$0xff] %vm1687, %v2234
      %v2237 = vld [vmem:[#allocation3 + $0x8] sm:$0xff]
      %v2238 = vld [vmem:[#allocation3 + $0x28] sm:$0xff]
      %2239 = vst.msk [vmem:[#allocation4 + $0x80] sm:$0xff] %vm1687, %v2237
      %2240 = vst.msk [vmem:[#allocation4 + $0x90] sm:$0xff] %vm1687, %v2238
      %v2241 = vld [vmem:[#allocation3 + $0x8] sm:$0xff]
      %v2242 = vld [vmem:[#allocation3 + $0x28] sm:$0xff]
      %2245 = vrot.lane.b32.xlu0 %v2241, 127
      %v2246 = vpop.permute.xlu0 %2245
      %2247 = vrot.lane.b32.xlu0 %v2242, 127
      %v2248 = vpop.permute.xlu0 %2247
      %v2251 = vsel %vm2191, %v2246, 0.0
      %v2252 = vsel %vm2191, %v2248, 0.0
      %2253 = vst.msk [vmem:[#allocation4 + $0xa0] sm:$0xff] %vm1687, %v2251
      %2254 = vst.msk [vmem:[#allocation4 + $0xb0] sm:$0xff] %vm1687, %v2252
      %v2255 = vld [vmem:[#allocation3 + $0x8] sm:$0xff]
      %v2256 = vld [vmem:[#allocation3 + $0x28] sm:$0xff]
      %2259 = vrot.lane.b32.xlu0 %v2255, 121
      %v2260 = vpop.permute.xlu0 %2259
      %2261 = vrot.lane.b32.xlu0 %v2256, 121
      %v2262 = vpop.permute.xlu0 %2261
      %v2265 = vsel %vm2141, %v2260, 0.0
      %v2266 = vsel %vm2141, %v2262, 0.0
      %2267 = vst.msk [vmem:[#allocation4 + $0xc0] sm:$0xff] %vm1687, %v2265
      %2268 = vst.msk [vmem:[#allocation4 + $0xd0] sm:$0xff] %vm1687, %v2266
      %v2269 = vld [vmem:[#allocation3 + $0x8] sm:$0xff]
      %v2270 = vld [vmem:[#allocation3 + $0x28] sm:$0xff]
      %2273 = vrot.lane.b32.xlu0 %v2269, 120
      %v2274 = vpop.permute.xlu0 %2273
      %2275 = vrot.lane.b32.xlu0 %v2270, 120
      %v2276 = vpop.permute.xlu0 %2275
      %2279 = vst.msk [vmem:[#allocation4 + $0xe0] sm:$0xff] %vm1687, %v2274
      %2280 = vst.msk [vmem:[#allocation4 + $0xf0] sm:$0xff] %vm1687, %v2276
      %v2281 = vld [vmem:[#allocation3 + $0x8] sm:$0xff]
      %v2282 = vld [vmem:[#allocation3 + $0x28] sm:$0xff]
      %2285 = vrot.lane.b32.xlu0 %v2281, 119
      %v2286 = vpop.permute.xlu0 %2285
      %2287 = vrot.lane.b32.xlu0 %v2282, 119
      %v2288 = vpop.permute.xlu0 %2287
      %v2291 = vsel %vm2191, %v2286, 0.0
      %v2292 = vsel %vm2191, %v2288, 0.0
      %2293 = vst.msk [vmem:[#allocation4 + $0x100] sm:$0xff] %vm1687, %v2291
      %2294 = vst.msk [vmem:[#allocation4 + $0x110] sm:$0xff] %vm1687, %v2292
      %v2295 = vld [vmem:[%s4] sm:$0xff]
      %v2296 = vld [vmem:[#allocation4] sm:$0xff]
      %v2297 = vld [vmem:[#allocation4 + $0x10] sm:$0xff]
      %v2298 = vld [vmem:[#allocation4 + $0x20] sm:$0xff]
      %v2299 = vld [vmem:[#allocation4 + $0x30] sm:$0xff]
      %v2300 = vld [vmem:[#allocation4 + $0x40] sm:$0xff]
      %v2301 = vld [vmem:[#allocation4 + $0x50] sm:$0xff]
      %v2302 = vld [vmem:[#allocation4 + $0x60] sm:$0xff]
      %v2303 = vld [vmem:[#allocation4 + $0x70] sm:$0xff]
      %v2304 = vld [vmem:[#allocation4 + $0x80] sm:$0xff]
      %v2305 = vld [vmem:[#allocation4 + $0x90] sm:$0xff]
      %v2306 = vld [vmem:[#allocation4 + $0xa0] sm:$0xff]
      %v2307 = vld [vmem:[#allocation4 + $0xb0] sm:$0xff]
      %v2308 = vld [vmem:[#allocation4 + $0xc0] sm:$0xff]
      %v2309 = vld [vmem:[#allocation4 + $0xd0] sm:$0xff]
      %v2310 = vld [vmem:[#allocation4 + $0xe0] sm:$0xff]
      %v2311 = vld [vmem:[#allocation4 + $0xf0] sm:$0xff]
      %v2312 = vld [vmem:[#allocation4 + $0x100] sm:$0xff]
      %v2313 = vld [vmem:[#allocation4 + $0x110] sm:$0xff]
      %v2314 = vld [vmem:[%s12] sm:$0xf]
      %2316 = vset.pattern.permute.xlu0 0
      %2317 = vperm.xlu0 %2316, %v2314
      %v2318 = vpop.permute.xlu0 %2317
      %v2321 = vcombine.high %v2295, %v2295
      %v2322 = vsel %vm709, %v2321, 0
      %2324 = vmatprep.subr.mxu0 0.0
      %2325 = vmatpush1.msra.mxu0 %v2296
      %2326 = vmatprep.subr.mxu0 0.0
      %2327 = vmatpush1.msra.mxu0 %v2297
      %2328 = vmatprep.subr.mxu0 0.0
      %2329 = vmatpush1.msra.mxu0 %v2298
      %2330 = vmatprep.subr.mxu0 0.0
      %2331 = vmatpush1.msra.mxu0 %v2299
      %2332 = vmatprep.subr.mxu0 0.0
      %2333 = vmatpush1.msra.mxu0 %v2300
      %2334 = vmatprep.subr.mxu0 0.0
      %2335 = vmatpush1.msra.mxu0 %v2301
      %2336 = vmatprep.subr.mxu0 0.0
      %2337 = vmatpush1.msra.mxu0 %v2302
      %2338 = vmatprep.subr.mxu0 0.0
      %2339 = vmatpush1.msra.mxu0 %v2303
      %2340 = vmatprep.subr.mxu0 0.0
      %2341 = vmatpush1.msra.mxu0 %v2304
      %2342 = vmatprep.subr.mxu0 0.0
      %2343 = vmatpush1.msra.mxu0 %v2305
      %2344 = vmatprep.subr.mxu0 0.0
      %2345 = vmatpush1.msra.mxu0 %v2306
      %2346 = vmatprep.subr.mxu0 0.0
      %2347 = vmatpush1.msra.mxu0 %v2307
      %2348 = vmatprep.subr.mxu0 0.0
      %2349 = vmatpush1.msra.mxu0 %v2308
      %2350 = vmatprep.subr.mxu0 0.0
      %2351 = vmatpush1.msra.mxu0 %v2309
      %2352 = vmatprep.subr.mxu0 0.0
      %2353 = vmatpush1.msra.mxu0 %v2310
      %2354 = vmatprep.subr.mxu0 0.0
      %2355 = vmatpush1.msra.mxu0 %v2311
      %2356 = vmatprep.subr.mxu0 0.0
      %2357 = vmatpush1.msra.mxu0 %v2312
      %2358 = vmatprep.subr.mxu0 0.0
      %2359 = vmatpush1.msra.mxu0 %v2313
      %2360 = vmatprep.subr.mxu0 0.0
      %2361 = vmatpush1.msra.mxu0 0.0
      %2362 = vmatprep.subr.mxu0 0.0
      %2363 = vmatpush1.msra.mxu0 0.0
      %2364 = vmatprep.subr.mxu0 0.0
      %2365 = vmatpush1.msra.mxu0 0.0
      %2366 = vmatprep.subr.mxu0 0.0
      %2367 = vmatpush1.msra.mxu0 0.0
      %2368 = vmatprep.subr.mxu0 0.0
      %2369 = vmatpush1.msra.mxu0 0.0
      %2370 = vmatprep.subr.mxu0 0.0
      %2371 = vmatpush1.msra.mxu0 0.0
      %2372 = vmatprep.subr.mxu0 0.0
      %2373 = vmatpush1.msra.mxu0 0.0
      %2374 = vmatprep.subr.mxu0 0.0
      %2375 = vmatpush1.msra.mxu0 0.0
      %2376 = vmatprep.subr.mxu0 0.0
      %2377 = vmatpush1.msra.mxu0 0.0
      %2378 = vmatprep.subr.mxu0 0.0
      %2379 = vmatpush1.msra.mxu0 0.0
      %2380 = vmatprep.subr.mxu0 0.0
      %2381 = vmatpush1.msra.mxu0 0.0
      %2382 = vmatprep.subr.mxu0 0.0
      %2383 = vmatpush1.msra.mxu0 0.0
      %2384 = vmatprep.subr.mxu0 0.0
      %2385 = vmatpush1.msra.mxu0 0.0
      %2386 = vmatprep.subr.mxu0 0.0
      %2387 = vmatpush1.msra.mxu0 0.0
      %2388 = vmatprep.mubr.f32.mxu0 %v2322
      %2389 = vmatmul.mubr.f32.gmra.mrb[0].mxu0 %v2295
      %v2390 = vpop.f32.mrb[0].mxu0
      %v2391 = vadd.f32 %v2318, %v2390
      %v2392 = vpop.f32.mrb[0].mxu0
      %2393 = vdwg.mxu0
      %2394 = vst [vmem:[#allocation2] sm:$0xff] 0.0
      %2395 = vst [vmem:[#allocation2 + $0x8] sm:$0xff] 0.0
      %2396 = vst [vmem:[#allocation2 + $0x10] sm:$0xff] 0.0
      %2397 = vst [vmem:[#allocation2 + $0x18] sm:$0xff] 0.0
      %2398 = vst [vmem:[#allocation2 + $0x20] sm:$0xff] 0.0
      %2399 = vst [vmem:[#allocation2 + $0x28] sm:$0xff] 0.0
      %2400 = vst [vmem:[#allocation2 + $0x30] sm:$0xff] 0.0
      %2401 = vst [vmem:[#allocation2 + $0x38] sm:$0xff] 0.0
      %vm2402 = vcmask 519168
      %2403 = vst.msk [vmem:[#allocation2 + $0x8] sm:$0xf] %vm2402, %v2391
      %v2404 = vld [vmem:[#allocation2] sm:$0xf]
      %v2405 = vld [vmem:[#allocation2 + $0x8] sm:$0xf]
      %2408 = vrot.lane.b32.xlu0 %v2404, 9
      %v2409 = vpop.permute.xlu0 %2408
      %2410 = vrot.lane.b32.xlu0 %v2405, 9
      %v2411 = vpop.permute.xlu0 %2410
      %v2412 = vsel %vm990, %v2409, %v2411
      %v2414 = vsel %vm2141, %v2412, 0.0
      %2415 = vst.msk [vmem:[#allocation4] sm:$0xf] %vm2402, %v2414
      %v2416 = vld [vmem:[#allocation2] sm:$0xf]
      %v2417 = vld [vmem:[#allocation2 + $0x8] sm:$0xf]
      %v2420 = vrot.slane %v2416, 4
      %v2421 = vrot.slane %v2417, 4
      %2422 = vrot.lane.b32.xlu0 %v2420, 8
      %v2423 = vpop.permute.xlu0 %2422
      %2424 = vrot.lane.b32.xlu0 %v2421, 8
      %v2425 = vpop.permute.xlu0 %2424
      %v2426 = vsel %vm2178, %v2423, %v2425
      %vm2428 = vcmask 523268
      %2429 = vst.msk [vmem:[#allocation4] sm:$0xf0] %vm2428, %v2426
      %v2430 = vld [vmem:[#allocation2] sm:$0xf]
      %v2431 = vld [vmem:[#allocation2 + $0x8] sm:$0xf]
      %2434 = vrot.lane.b32.xlu0 %v2430, 7
      %v2435 = vpop.permute.xlu0 %2434
      %2436 = vrot.lane.b32.xlu0 %v2431, 7
      %v2437 = vpop.permute.xlu0 %2436
      %v2438 = vsel %vm2204, %v2435, %v2437
      %v2440 = vsel %vm2191, %v2438, 0.0
      %2441 = vst.msk [vmem:[#allocation4 + $0x10] sm:$0xf] %vm2402, %v2440
      %v2442 = vld [vmem:[#allocation2] sm:$0xf]
      %v2443 = vld [vmem:[#allocation2 + $0x8] sm:$0xf]
      %2446 = vrot.lane.b32.xlu0 %v2442, 1
      %v2447 = vpop.permute.xlu0 %2446
      %2448 = vrot.lane.b32.xlu0 %v2443, 1
      %v2449 = vpop.permute.xlu0 %2448
      %v2450 = vsel %vm785, %v2447, %v2449
      %v2452 = vsel %vm2141, %v2450, 0.0
      %v2454 = vrot.slane %v2452, 4
      %2456 = vst.msk [vmem:[#allocation4 + $0x10] sm:$0xf0] %vm2428, %v2454
      %v2457 = vld [vmem:[#allocation2 + $0x8] sm:$0xf]
      %2458 = vst.msk [vmem:[#allocation4 + $0x20] sm:$0xf] %vm2402, %v2457
      %v2459 = vld [vmem:[#allocation2 + $0x8] sm:$0xf]
      %2461 = vrot.lane.b32.xlu0 %v2459, 127
      %v2462 = vpop.permute.xlu0 %2461
      %v2464 = vsel %vm2191, %v2462, 0.0
      %v2466 = vrot.slane %v2464, 4
      %2468 = vst.msk [vmem:[#allocation4 + $0x20] sm:$0xf0] %vm2428, %v2466
      %v2469 = vld [vmem:[#allocation2 + $0x8] sm:$0xf]
      %2471 = vrot.lane.b32.xlu0 %v2469, 121
      %v2472 = vpop.permute.xlu0 %2471
      %v2474 = vsel %vm2141, %v2472, 0.0
      %2475 = vst.msk [vmem:[#allocation4 + $0x30] sm:$0xf] %vm2402, %v2474
      %v2476 = vld [vmem:[#allocation2 + $0x8] sm:$0xf]
      %v2478 = vrot.slane %v2476, 4
      %2479 = vrot.lane.b32.xlu0 %v2478, 120
      %v2480 = vpop.permute.xlu0 %2479
      %2482 = vst.msk [vmem:[#allocation4 + $0x30] sm:$0xf0] %vm2428, %v2480
      %v2483 = vld [vmem:[#allocation2 + $0x8] sm:$0xf]
      %2485 = vrot.lane.b32.xlu0 %v2483, 119
      %v2486 = vpop.permute.xlu0 %2485
      %v2488 = vsel %vm2191, %v2486, 0.0
      %2489 = vst.msk [vmem:[#allocation4 + $0x40] sm:$0xf] %vm2402, %v2488
      %v2490 = vld [vmem:[%s5] sm:$0xff]
      %v2491 = vld [vmem:[%s5 + $0x8] sm:$0xff]
      %v2492 = vld [vmem:[#allocation4] sm:$0xff]
      %v2493 = vld [vmem:[#allocation4 + $0x10] sm:$0xff]
      %v2494 = vld [vmem:[#allocation4 + $0x20] sm:$0xff]
      %v2495 = vld [vmem:[#allocation4 + $0x30] sm:$0xff]
      %v2496 = vld [vmem:[#allocation4 + $0x40] sm:$0xf]
      %v2497 = vld [vmem:[%s13] sm:$0xff]
      %v2498 = vld [vmem:[%s13 + $0x8] sm:$0xff]
      %2500 = vset.pattern.permute.xlu0 0
      %2501 = vperm.xlu0 %2500, %v2497
      %v2502 = vpop.permute.xlu0 %2501
      %2505 = vset.pattern.permute.xlu0 0
      %2506 = vperm.xlu0 %2505, %v2498
      %v2507 = vpop.permute.xlu0 %2506
      %vm2509 = vcmask 293888
      %v2511 = vsel %vm2509, %v2490, 0
      %v2514 = vsel %vm2509, %v2491, 0
      %vm2516 = vcmask 1043456
      %v2518 = vsel %vm2516, %v2496, 0
      %2520 = vmatprep.subr.mxu0 0.0
      %2521 = vmatpush1.msra.mxu0 %v2492
      %2522 = vmatprep.subr.mxu0 0.0
      %2523 = vmatpush1.msra.mxu0 %v2493
      %2524 = vmatprep.subr.mxu0 0.0
      %2525 = vmatpush1.msra.mxu0 %v2494
      %2526 = vmatprep.subr.mxu0 0.0
      %2527 = vmatpush1.msra.mxu0 %v2495
      %2528 = vmatprep.subr.mxu0 0.0
      %2529 = vmatpush1.msra.mxu0 %v2518
      %2530 = vmatprep.subr.mxu0 0.0
      %2531 = vmatpush1.msra.mxu0 0.0
      %2532 = vmatprep.subr.mxu0 0.0
      %2533 = vmatpush1.msra.mxu0 0.0
      %2534 = vmatprep.subr.mxu0 0.0
      %2535 = vmatpush1.msra.mxu0 0.0
      %2536 = vmatprep.subr.mxu0 0.0
      %2537 = vmatpush1.msra.mxu0 0.0
      %2538 = vmatprep.subr.mxu0 0.0
      %2539 = vmatpush1.msra.mxu0 0.0
      %2540 = vmatprep.subr.mxu0 0.0
      %2541 = vmatpush1.msra.mxu0 0.0
      %2542 = vmatprep.subr.mxu0 0.0
      %2543 = vmatpush1.msra.mxu0 0.0
      %2544 = vmatprep.subr.mxu0 0.0
      %2545 = vmatpush1.msra.mxu0 0.0
      %2546 = vmatprep.subr.mxu0 0.0
      %2547 = vmatpush1.msra.mxu0 0.0
      %2548 = vmatprep.subr.mxu0 0.0
      %2549 = vmatpush1.msra.mxu0 0.0
      %2550 = vmatprep.subr.mxu0 0.0
      %2551 = vmatpush1.msra.mxu0 0.0
      %2552 = vmatprep.subr.mxu0 0.0
      %2553 = vmatpush1.msra.mxu0 0.0
      %2554 = vmatprep.subr.mxu0 0.0
      %2555 = vmatpush1.msra.mxu0 0.0
      %2556 = vmatprep.subr.mxu0 0.0
      %2557 = vmatpush1.msra.mxu0 0.0
      %2558 = vmatprep.subr.mxu0 0.0
      %2559 = vmatpush1.msra.mxu0 0.0
      %2560 = vmatprep.subr.mxu0 0.0
      %2561 = vmatpush1.msra.mxu0 0.0
      %2562 = vmatprep.subr.mxu0 0.0
      %2563 = vmatpush1.msra.mxu0 0.0
      %2564 = vmatprep.subr.mxu0 0.0
      %2565 = vmatpush1.msra.mxu0 0.0
      %2566 = vmatprep.subr.mxu0 0.0
      %2567 = vmatpush1.msra.mxu0 0.0
      %2568 = vmatprep.subr.mxu0 0.0
      %2569 = vmatpush1.msra.mxu0 0.0
      %2570 = vmatprep.subr.mxu0 0.0
      %2571 = vmatpush1.msra.mxu0 0.0
      %2572 = vmatprep.subr.mxu0 0.0
      %2573 = vmatpush1.msra.mxu0 0.0
      %2574 = vmatprep.subr.mxu0 0.0
      %2575 = vmatpush1.msra.mxu0 0.0
      %2576 = vmatprep.subr.mxu0 0.0
      %2577 = vmatpush1.msra.mxu0 0.0
      %2578 = vmatprep.subr.mxu0 0.0
      %2579 = vmatpush1.msra.mxu0 0.0
      %2580 = vmatprep.subr.mxu0 0.0
      %2581 = vmatpush1.msra.mxu0 0.0
      %2582 = vmatprep.subr.mxu0 0.0
      %2583 = vmatpush1.msra.mxu0 0.0
      %2584 = vmatprep.mubr.f32.mxu0 0.0
      %2585 = vmatmul.mubr.f32.gmra.mrb[0].mxu0 %v2511
      %v2586 = vpop.f32.mrb[0].mxu0
      %v2587 = vadd.f32 %v2502, %v2586
      %v2588 = vpop.f32.mrb[0].mxu0
      %2589 = vmatprep.mubr.f32.mxu0 0.0
      %2590 = vmatmul.mubr.f32.gmra.mrb[0].mxu0 %v2514
      %v2591 = vpop.f32.mrb[0].mxu0
      %v2592 = vadd.f32 %v2507, %v2591
      %v2593 = vpop.f32.mrb[0].mxu0
      %2594 = vdwg.mxu0
      %v2595 = vmax.f32 %v2587, 0.0
      %v2596 = vmax.f32 %v2592, 0.0
      %2597 = vst [vmem:[#allocation3] sm:$0xff] 0.0
      %2598 = vst [vmem:[#allocation3 + $0x8] sm:$0xff] 0.0
      %2599 = vst [vmem:[#allocation3 + $0x10] sm:$0xff] 0.0
      %2600 = vst [vmem:[#allocation3 + $0x18] sm:$0xff] 0.0
      %2601 = vst [vmem:[#allocation3 + $0x20] sm:$0xff] 0.0
      %2602 = vst [vmem:[#allocation3 + $0x28] sm:$0xff] 0.0
      %2603 = vst [vmem:[#allocation3 + $0x30] sm:$0xff] 0.0
      %2604 = vst [vmem:[#allocation3 + $0x38] sm:$0xff] 0.0
      %2605 = vst.msk [vmem:[#allocation3 + $0x8] sm:$0xff] %vm1687, %v2595
      %2606 = vst.msk [vmem:[#allocation3 + $0x28] sm:$0xff] %vm1687, %v2596
      %v2607 = vld [vmem:[#allocation3 + $0x8] sm:$0xff]
      %v2608 = vld [vmem:[#allocation3 + $0x28] sm:$0xff]
      %v2609 = vld [vmem:[%s18] sm:$0xff]
      %v2610 = vld [vmem:[%s18 + $0x8] sm:$0xff]
      %v2611 = vld [vmem:[%s18 + $0x10] sm:$0xff]
      %v2612 = vld [vmem:[%s18 + $0x18] sm:$0xff]
      %v2613 = vld [vmem:[%s18 + $0x20] sm:$0xff]
      %v2614 = vld [vmem:[%s18 + $0x28] sm:$0xff]
      %v2615 = vld [vmem:[%s18 + $0x30] sm:$0xff]
      %v2616 = vld [vmem:[%s18 + $0x38] sm:$0xff]
      %v2617 = vld [vmem:[%s18 + $0x40] sm:$0xff]
      %v2618 = vld [vmem:[%s18 + $0x48] sm:$0xff]
      %v2619 = vld [vmem:[%s18 + $0x50] sm:$0xff]
      %v2620 = vld [vmem:[%s18 + $0x58] sm:$0xff]
      %v2621 = vld [vmem:[%s18 + $0x60] sm:$0xff]
      %v2622 = vld [vmem:[%s18 + $0x68] sm:$0xff]
      %v2623 = vld [vmem:[%s18 + $0x70] sm:$0xff]
      %v2624 = vld [vmem:[%s18 + $0x78] sm:$0xff]
      %v2626 = vsel %vm1687, %v2607, 0
      %v2629 = vsel %vm1687, %v2608, 0
      %2631 = vmatprep.subr.mxu0 %v2610
      %2632 = vmatpush1.msra.mxu0 %v2609
      %2633 = vmatprep.subr.mxu0 %v2612
      %2634 = vmatpush1.msra.mxu0 %v2611
      %2635 = vmatprep.subr.mxu0 %v2614
      %2636 = vmatpush1.msra.mxu0 %v2613
      %2637 = vmatprep.subr.mxu0 %v2616
      %2638 = vmatpush1.msra.mxu0 %v2615
      %2639 = vmatprep.subr.mxu0 %v2618
      %2640 = vmatpush1.msra.mxu0 %v2617
      %2641 = vmatprep.subr.mxu0 %v2620
      %2642 = vmatpush1.msra.mxu0 %v2619
      %2643 = vmatprep.subr.mxu0 %v2622
      %2644 = vmatpush1.msra.mxu0 %v2621
      %2645 = vmatprep.subr.mxu0 %v2624
      %2646 = vmatpush1.msra.mxu0 %v2623
      %2647 = vmatprep.subr.mxu0 0.0
      %2648 = vmatpush1.msra.mxu0 0.0
      %2649 = vmatprep.subr.mxu0 0.0
      %2650 = vmatpush1.msra.mxu0 0.0
      %2651 = vmatprep.subr.mxu0 0.0
      %2652 = vmatpush1.msra.mxu0 0.0
      %2653 = vmatprep.subr.mxu0 0.0
      %2654 = vmatpush1.msra.mxu0 0.0
      %2655 = vmatprep.subr.mxu0 0.0
      %2656 = vmatpush1.msra.mxu0 0.0
      %2657 = vmatprep.subr.mxu0 0.0
      %2658 = vmatpush1.msra.mxu0 0.0
      %2659 = vmatprep.subr.mxu0 0.0
      %2660 = vmatpush1.msra.mxu0 0.0
      %2661 = vmatprep.subr.mxu0 0.0
      %2662 = vmatpush1.msra.mxu0 0.0
      %2663 = vmatprep.subr.mxu0 0.0
      %2664 = vmatpush1.msra.mxu0 0.0
      %2665 = vmatprep.subr.mxu0 0.0
      %2666 = vmatpush1.msra.mxu0 0.0
      %2667 = vmatprep.subr.mxu0 0.0
      %2668 = vmatpush1.msra.mxu0 0.0
      %2669 = vmatprep.subr.mxu0 0.0
      %2670 = vmatpush1.msra.mxu0 0.0
      %2671 = vmatprep.subr.mxu0 0.0
      %2672 = vmatpush1.msra.mxu0 0.0
      %2673 = vmatprep.subr.mxu0 0.0
      %2674 = vmatpush1.msra.mxu0 0.0
      %2675 = vmatprep.subr.mxu0 0.0
      %2676 = vmatpush1.msra.mxu0 0.0
      %2677 = vmatprep.subr.mxu0 0.0
      %2678 = vmatpush1.msra.mxu0 0.0
      %2679 = vmatprep.subr.mxu0 0.0
      %2680 = vmatpush1.msra.mxu0 0.0
      %2681 = vmatprep.subr.mxu0 0.0
      %2682 = vmatpush1.msra.mxu0 0.0
      %2683 = vmatprep.subr.mxu0 0.0
      %2684 = vmatpush1.msra.mxu0 0.0
      %2685 = vmatprep.subr.mxu0 0.0
      %2686 = vmatpush1.msra.mxu0 0.0
      %2687 = vmatprep.subr.mxu0 0.0
      %2688 = vmatpush1.msra.mxu0 0.0
      %2689 = vmatprep.subr.mxu0 0.0
      %2690 = vmatpush1.msra.mxu0 0.0
      %2691 = vmatprep.subr.mxu0 0.0
      %2692 = vmatpush1.msra.mxu0 0.0
      %2693 = vmatprep.subr.mxu0 0.0
      %2694 = vmatpush1.msra.mxu0 0.0
      %2695 = vmatprep.mubr.f32.mxu0 0.0
      %2696 = vmatmul.mubr.f32.gmra.mrb[0].mxu0 %v2626
      %v2697 = vpop.f32.mrb[0].mxu0
      %v2698 = vadd.f32 0.0, %v2697
      %v2699 = vpop.f32.mrb[0].mxu0
      %v2700 = vadd.f32 0.0, %v2699
      %2701 = vmatprep.mubr.f32.mxu0 0.0
      %2702 = vmatmul.mubr.f32.gmra.mrb[0].mxu0 %v2629
      %v2703 = vpop.f32.mrb[0].mxu0
      %v2704 = vadd.f32 0.0, %v2703
      %v2705 = vpop.f32.mrb[0].mxu0
      %v2706 = vadd.f32 0.0, %v2705
      %2707 = vdwg.mxu0
      %2708 = vst [vmem:[#allocation4] sm:$0xff] %v2698
      %2709 = vst [vmem:[#allocation4 + $0x8] sm:$0xff] %v2700
      %2710 = vst [vmem:[#allocation4 + $0x10] sm:$0xff] %v2704
      %2711 = vst [vmem:[#allocation4 + $0x18] sm:$0xff] %v2706
      %s2712 = scalar_lea.vmem %s18, 128
      %v2713 = vld [vmem:[%s2712] sm:$0xff]
      %v2714 = vld [vmem:[%s2712 + $0x8] sm:$0xff]
      %v2715 = vld [vmem:[%s2712 + $0x10] sm:$0xff]
      %v2716 = vld [vmem:[%s2712 + $0x18] sm:$0xff]
      %v2717 = vld [vmem:[%s2712 + $0x20] sm:$0xff]
      %v2718 = vld [vmem:[%s2712 + $0x28] sm:$0xff]
      %v2719 = vld [vmem:[%s2712 + $0x30] sm:$0xff]
      %v2720 = vld [vmem:[%s2712 + $0x38] sm:$0xff]
      %v2721 = vld [vmem:[%s2712 + $0x40] sm:$0xff]
      %v2722 = vld [vmem:[%s2712 + $0x48] sm:$0xff]
      %v2723 = vld [vmem:[%s2712 + $0x50] sm:$0xff]
      %v2724 = vld [vmem:[%s2712 + $0x58] sm:$0xff]
      %v2725 = vld [vmem:[%s2712 + $0x60] sm:$0xff]
      %v2726 = vld [vmem:[%s2712 + $0x68] sm:$0xff]
      %v2727 = vld [vmem:[%s2712 + $0x70] sm:$0xff]
      %v2728 = vld [vmem:[%s2712 + $0x78] sm:$0xff]
      %2729 = vmatprep.subr.mxu0 %v2714
      %2730 = vmatpush1.msra.mxu0 %v2713
      %2731 = vmatprep.subr.mxu0 %v2716
      %2732 = vmatpush1.msra.mxu0 %v2715
      %2733 = vmatprep.subr.mxu0 %v2718
      %2734 = vmatpush1.msra.mxu0 %v2717
      %2735 = vmatprep.subr.mxu0 %v2720
      %2736 = vmatpush1.msra.mxu0 %v2719
      %2737 = vmatprep.subr.mxu0 %v2722
      %2738 = vmatpush1.msra.mxu0 %v2721
      %2739 = vmatprep.subr.mxu0 %v2724
      %2740 = vmatpush1.msra.mxu0 %v2723
      %2741 = vmatprep.subr.mxu0 %v2726
      %2742 = vmatpush1.msra.mxu0 %v2725
      %2743 = vmatprep.subr.mxu0 %v2728
      %2744 = vmatpush1.msra.mxu0 %v2727
      %2745 = vmatprep.subr.mxu0 0.0
      %2746 = vmatpush1.msra.mxu0 0.0
      %2747 = vmatprep.subr.mxu0 0.0
      %2748 = vmatpush1.msra.mxu0 0.0
      %2749 = vmatprep.subr.mxu0 0.0
      %2750 = vmatpush1.msra.mxu0 0.0
      %2751 = vmatprep.subr.mxu0 0.0
      %2752 = vmatpush1.msra.mxu0 0.0
      %2753 = vmatprep.subr.mxu0 0.0
      %2754 = vmatpush1.msra.mxu0 0.0
      %2755 = vmatprep.subr.mxu0 0.0
      %2756 = vmatpush1.msra.mxu0 0.0
      %2757 = vmatprep.subr.mxu0 0.0
      %2758 = vmatpush1.msra.mxu0 0.0
      %2759 = vmatprep.subr.mxu0 0.0
      %2760 = vmatpush1.msra.mxu0 0.0
      %2761 = vmatprep.subr.mxu0 0.0
      %2762 = vmatpush1.msra.mxu0 0.0
      %2763 = vmatprep.subr.mxu0 0.0
      %2764 = vmatpush1.msra.mxu0 0.0
      %2765 = vmatprep.subr.mxu0 0.0
      %2766 = vmatpush1.msra.mxu0 0.0
      %2767 = vmatprep.subr.mxu0 0.0
      %2768 = vmatpush1.msra.mxu0 0.0
      %2769 = vmatprep.subr.mxu0 0.0
      %2770 = vmatpush1.msra.mxu0 0.0
      %2771 = vmatprep.subr.mxu0 0.0
      %2772 = vmatpush1.msra.mxu0 0.0
      %2773 = vmatprep.subr.mxu0 0.0
      %2774 = vmatpush1.msra.mxu0 0.0
      %2775 = vmatprep.subr.mxu0 0.0
      %2776 = vmatpush1.msra.mxu0 0.0
      %2777 = vmatprep.subr.mxu0 0.0
      %2778 = vmatpush1.msra.mxu0 0.0
      %2779 = vmatprep.subr.mxu0 0.0
      %2780 = vmatpush1.msra.mxu0 0.0
      %2781 = vmatprep.subr.mxu0 0.0
      %2782 = vmatpush1.msra.mxu0 0.0
      %2783 = vmatprep.subr.mxu0 0.0
      %2784 = vmatpush1.msra.mxu0 0.0
      %2785 = vmatprep.subr.mxu0 0.0
      %2786 = vmatpush1.msra.mxu0 0.0
      %2787 = vmatprep.subr.mxu0 0.0
      %2788 = vmatpush1.msra.mxu0 0.0
      %2789 = vmatprep.subr.mxu0 0.0
      %2790 = vmatpush1.msra.mxu0 0.0
      %2791 = vmatprep.subr.mxu0 0.0
      %2792 = vmatpush1.msra.mxu0 0.0
      %2793 = vmatprep.mubr.f32.mxu0 0.0
      %2794 = vmatmul.mubr.f32.gmra.mrb[0].mxu0 %v2626
      %v2795 = vpop.f32.mrb[0].mxu0
      %v2796 = vadd.f32 0.0, %v2795
      %v2797 = vpop.f32.mrb[0].mxu0
      %v2798 = vadd.f32 0.0, %v2797
      %2799 = vmatprep.mubr.f32.mxu0 0.0
      %2800 = vmatmul.mubr.f32.gmra.mrb[0].mxu0 %v2629
      %v2801 = vpop.f32.mrb[0].mxu0
      %v2802 = vadd.f32 0.0, %v2801
      %v2803 = vpop.f32.mrb[0].mxu0
      %v2804 = vadd.f32 0.0, %v2803
      %2805 = vdwg.mxu0
      %2806 = vst [vmem:[#allocation4 + $0x20] sm:$0xff] %v2796
      %2807 = vst [vmem:[#allocation4 + $0x28] sm:$0xff] %v2798
      %2808 = vst [vmem:[#allocation4 + $0x30] sm:$0xff] %v2802
      %2809 = vst [vmem:[#allocation4 + $0x38] sm:$0xff] %v2804
      %s2810 = scalar_lea.vmem %s18, 256
      %v2811 = vld [vmem:[%s2810] sm:$0xff]
      %v2812 = vld [vmem:[%s2810 + $0x8] sm:$0xff]
      %v2813 = vld [vmem:[%s2810 + $0x10] sm:$0xff]
      %v2814 = vld [vmem:[%s2810 + $0x18] sm:$0xff]
      %v2815 = vld [vmem:[%s2810 + $0x20] sm:$0xff]
      %v2816 = vld [vmem:[%s2810 + $0x28] sm:$0xff]
      %v2817 = vld [vmem:[%s2810 + $0x30] sm:$0xff]
      %v2818 = vld [vmem:[%s2810 + $0x38] sm:$0xff]
      %v2819 = vld [vmem:[%s2810 + $0x40] sm:$0xff]
      %v2820 = vld [vmem:[%s2810 + $0x48] sm:$0xff]
      %v2821 = vld [vmem:[%s2810 + $0x50] sm:$0xff]
      %v2822 = vld [vmem:[%s2810 + $0x58] sm:$0xff]
      %v2823 = vld [vmem:[%s2810 + $0x60] sm:$0xff]
      %v2824 = vld [vmem:[%s2810 + $0x68] sm:$0xff]
      %v2825 = vld [vmem:[%s2810 + $0x70] sm:$0xff]
      %v2826 = vld [vmem:[%s2810 + $0x78] sm:$0xff]
      %2827 = vmatprep.subr.mxu0 %v2812
      %2828 = vmatpush1.msra.mxu0 %v2811
      %2829 = vmatprep.subr.mxu0 %v2814
      %2830 = vmatpush1.msra.mxu0 %v2813
      %2831 = vmatprep.subr.mxu0 %v2816
      %2832 = vmatpush1.msra.mxu0 %v2815
      %2833 = vmatprep.subr.mxu0 %v2818
      %2834 = vmatpush1.msra.mxu0 %v2817
      %2835 = vmatprep.subr.mxu0 %v2820
      %2836 = vmatpush1.msra.mxu0 %v2819
      %2837 = vmatprep.subr.mxu0 %v2822
      %2838 = vmatpush1.msra.mxu0 %v2821
      %2839 = vmatprep.subr.mxu0 %v2824
      %2840 = vmatpush1.msra.mxu0 %v2823
      %2841 = vmatprep.subr.mxu0 %v2826
      %2842 = vmatpush1.msra.mxu0 %v2825
      %2843 = vmatprep.subr.mxu0 0.0
      %2844 = vmatpush1.msra.mxu0 0.0
      %2845 = vmatprep.subr.mxu0 0.0
      %2846 = vmatpush1.msra.mxu0 0.0
      %2847 = vmatprep.subr.mxu0 0.0
      %2848 = vmatpush1.msra.mxu0 0.0
      %2849 = vmatprep.subr.mxu0 0.0
      %2850 = vmatpush1.msra.mxu0 0.0
      %2851 = vmatprep.subr.mxu0 0.0
      %2852 = vmatpush1.msra.mxu0 0.0
      %2853 = vmatprep.subr.mxu0 0.0
      %2854 = vmatpush1.msra.mxu0 0.0
      %2855 = vmatprep.subr.mxu0 0.0
      %2856 = vmatpush1.msra.mxu0 0.0
      %2857 = vmatprep.subr.mxu0 0.0
      %2858 = vmatpush1.msra.mxu0 0.0
      %2859 = vmatprep.subr.mxu0 0.0
      %2860 = vmatpush1.msra.mxu0 0.0
      %2861 = vmatprep.subr.mxu0 0.0
      %2862 = vmatpush1.msra.mxu0 0.0
      %2863 = vmatprep.subr.mxu0 0.0
      %2864 = vmatpush1.msra.mxu0 0.0
      %2865 = vmatprep.subr.mxu0 0.0
      %2866 = vmatpush1.msra.mxu0 0.0
      %2867 = vmatprep.subr.mxu0 0.0
      %2868 = vmatpush1.msra.mxu0 0.0
      %2869 = vmatprep.subr.mxu0 0.0
      %2870 = vmatpush1.msra.mxu0 0.0
      %2871 = vmatprep.subr.mxu0 0.0
      %2872 = vmatpush1.msra.mxu0 0.0
      %2873 = vmatprep.subr.mxu0 0.0
      %2874 = vmatpush1.msra.mxu0 0.0
      %2875 = vmatprep.subr.mxu0 0.0
      %2876 = vmatpush1.msra.mxu0 0.0
      %2877 = vmatprep.subr.mxu0 0.0
      %2878 = vmatpush1.msra.mxu0 0.0
      %2879 = vmatprep.subr.mxu0 0.0
      %2880 = vmatpush1.msra.mxu0 0.0
      %2881 = vmatprep.subr.mxu0 0.0
      %2882 = vmatpush1.msra.mxu0 0.0
      %2883 = vmatprep.subr.mxu0 0.0
      %2884 = vmatpush1.msra.mxu0 0.0
      %2885 = vmatprep.subr.mxu0 0.0
      %2886 = vmatpush1.msra.mxu0 0.0
      %2887 = vmatprep.subr.mxu0 0.0
      %2888 = vmatpush1.msra.mxu0 0.0
      %2889 = vmatprep.subr.mxu0 0.0
      %2890 = vmatpush1.msra.mxu0 0.0
      %2891 = vmatprep.mubr.f32.mxu0 0.0
      %2892 = vmatmul.mubr.f32.gmra.mrb[0].mxu0 %v2626
      %v2893 = vpop.f32.mrb[0].mxu0
      %v2894 = vadd.f32 0.0, %v2893
      %v2895 = vpop.f32.mrb[0].mxu0
      %v2896 = vadd.f32 0.0, %v2895
      %2897 = vmatprep.mubr.f32.mxu0 0.0
      %2898 = vmatmul.mubr.f32.gmra.mrb[0].mxu0 %v2629
      %v2899 = vpop.f32.mrb[0].mxu0
      %v2900 = vadd.f32 0.0, %v2899
      %v2901 = vpop.f32.mrb[0].mxu0
      %v2902 = vadd.f32 0.0, %v2901
      %2903 = vdwg.mxu0
      %2904 = vst [vmem:[#allocation4 + $0x40] sm:$0xff] %v2894
      %2905 = vst [vmem:[#allocation4 + $0x48] sm:$0xff] %v2896
      %2906 = vst [vmem:[#allocation4 + $0x50] sm:$0xff] %v2900
      %2907 = vst [vmem:[#allocation4 + $0x58] sm:$0xff] %v2902
      %s2908 = scalar_lea.vmem %s18, 384
      %v2909 = vld [vmem:[%s2908] sm:$0xff]
      %v2910 = vld [vmem:[%s2908 + $0x8] sm:$0xff]
      %v2911 = vld [vmem:[%s2908 + $0x10] sm:$0xff]
      %v2912 = vld [vmem:[%s2908 + $0x18] sm:$0xff]
      %v2913 = vld [vmem:[%s2908 + $0x20] sm:$0xff]
      %v2914 = vld [vmem:[%s2908 + $0x28] sm:$0xff]
      %v2915 = vld [vmem:[%s2908 + $0x30] sm:$0xff]
      %v2916 = vld [vmem:[%s2908 + $0x38] sm:$0xff]
      %v2917 = vld [vmem:[%s2908 + $0x40] sm:$0xff]
      %v2918 = vld [vmem:[%s2908 + $0x48] sm:$0xff]
      %v2919 = vld [vmem:[%s2908 + $0x50] sm:$0xff]
      %v2920 = vld [vmem:[%s2908 + $0x58] sm:$0xff]
      %v2921 = vld [vmem:[%s2908 + $0x60] sm:$0xff]
      %v2922 = vld [vmem:[%s2908 + $0x68] sm:$0xff]
      %v2923 = vld [vmem:[%s2908 + $0x70] sm:$0xff]
      %v2924 = vld [vmem:[%s2908 + $0x78] sm:$0xff]
      %2925 = vmatprep.subr.mxu0 %v2910
      %2926 = vmatpush1.msra.mxu0 %v2909
      %2927 = vmatprep.subr.mxu0 %v2912
      %2928 = vmatpush1.msra.mxu0 %v2911
      %2929 = vmatprep.subr.mxu0 %v2914
      %2930 = vmatpush1.msra.mxu0 %v2913
      %2931 = vmatprep.subr.mxu0 %v2916
      %2932 = vmatpush1.msra.mxu0 %v2915
      %2933 = vmatprep.subr.mxu0 %v2918
      %2934 = vmatpush1.msra.mxu0 %v2917
      %2935 = vmatprep.subr.mxu0 %v2920
      %2936 = vmatpush1.msra.mxu0 %v2919
      %2937 = vmatprep.subr.mxu0 %v2922
      %2938 = vmatpush1.msra.mxu0 %v2921
      %2939 = vmatprep.subr.mxu0 %v2924
      %2940 = vmatpush1.msra.mxu0 %v2923
      %2941 = vmatprep.subr.mxu0 0.0
      %2942 = vmatpush1.msra.mxu0 0.0
      %2943 = vmatprep.subr.mxu0 0.0
      %2944 = vmatpush1.msra.mxu0 0.0
      %2945 = vmatprep.subr.mxu0 0.0
      %2946 = vmatpush1.msra.mxu0 0.0
      %2947 = vmatprep.subr.mxu0 0.0
      %2948 = vmatpush1.msra.mxu0 0.0
      %2949 = vmatprep.subr.mxu0 0.0
      %2950 = vmatpush1.msra.mxu0 0.0
      %2951 = vmatprep.subr.mxu0 0.0
      %2952 = vmatpush1.msra.mxu0 0.0
      %2953 = vmatprep.subr.mxu0 0.0
      %2954 = vmatpush1.msra.mxu0 0.0
      %2955 = vmatprep.subr.mxu0 0.0
      %2956 = vmatpush1.msra.mxu0 0.0
      %2957 = vmatprep.subr.mxu0 0.0
      %2958 = vmatpush1.msra.mxu0 0.0
      %2959 = vmatprep.subr.mxu0 0.0
      %2960 = vmatpush1.msra.mxu0 0.0
      %2961 = vmatprep.subr.mxu0 0.0
      %2962 = vmatpush1.msra.mxu0 0.0
      %2963 = vmatprep.subr.mxu0 0.0
      %2964 = vmatpush1.msra.mxu0 0.0
      %2965 = vmatprep.subr.mxu0 0.0
      %2966 = vmatpush1.msra.mxu0 0.0
      %2967 = vmatprep.subr.mxu0 0.0
      %2968 = vmatpush1.msra.mxu0 0.0
      %2969 = vmatprep.subr.mxu0 0.0
      %2970 = vmatpush1.msra.mxu0 0.0
      %2971 = vmatprep.subr.mxu0 0.0
      %2972 = vmatpush1.msra.mxu0 0.0
      %2973 = vmatprep.subr.mxu0 0.0
      %2974 = vmatpush1.msra.mxu0 0.0
      %2975 = vmatprep.subr.mxu0 0.0
      %2976 = vmatpush1.msra.mxu0 0.0
      %2977 = vmatprep.subr.mxu0 0.0
      %2978 = vmatpush1.msra.mxu0 0.0
      %2979 = vmatprep.subr.mxu0 0.0
      %2980 = vmatpush1.msra.mxu0 0.0
      %2981 = vmatprep.subr.mxu0 0.0
      %2982 = vmatpush1.msra.mxu0 0.0
      %2983 = vmatprep.subr.mxu0 0.0
      %2984 = vmatpush1.msra.mxu0 0.0
      %2985 = vmatprep.subr.mxu0 0.0
      %2986 = vmatpush1.msra.mxu0 0.0
      %2987 = vmatprep.subr.mxu0 0.0
      %2988 = vmatpush1.msra.mxu0 0.0
      %2989 = vmatprep.mubr.f32.mxu0 0.0
      %2990 = vmatmul.mubr.f32.gmra.mrb[0].mxu0 %v2626
      %v2991 = vpop.f32.mrb[0].mxu0
      %v2992 = vadd.f32 0.0, %v2991
      %v2993 = vpop.f32.mrb[0].mxu0
      %v2994 = vadd.f32 0.0, %v2993
      %2995 = vmatprep.mubr.f32.mxu0 0.0
      %2996 = vmatmul.mubr.f32.gmra.mrb[0].mxu0 %v2629
      %v2997 = vpop.f32.mrb[0].mxu0
      %v2998 = vadd.f32 0.0, %v2997
      %v2999 = vpop.f32.mrb[0].mxu0
      %v3000 = vadd.f32 0.0, %v2999
      %3001 = vdwg.mxu0
      %3002 = vst [vmem:[#allocation4 + $0x60] sm:$0xff] %v2992
      %3003 = vst [vmem:[#allocation4 + $0x68] sm:$0xff] %v2994
      %3004 = vst [vmem:[#allocation4 + $0x70] sm:$0xff] %v2998
      %3005 = vst [vmem:[#allocation4 + $0x78] sm:$0xff] %v3000
      %v3006 = vld [vmem:[%s6] sm:$0xff]
      %v3007 = vld [vmem:[%s6 + $0x8] sm:$0xff]
      %v3008 = vld [vmem:[#allocation4] sm:$0xff]
      %v3009 = vld [vmem:[#allocation4 + $0x8] sm:$0xff]
      %v3010 = vld [vmem:[#allocation4 + $0x10] sm:$0xff]
      %v3011 = vld [vmem:[#allocation4 + $0x18] sm:$0xff]
      %v3012 = vld [vmem:[#allocation4 + $0x20] sm:$0xff]
      %v3013 = vld [vmem:[#allocation4 + $0x28] sm:$0xff]
      %v3014 = vld [vmem:[#allocation4 + $0x30] sm:$0xff]
      %v3015 = vld [vmem:[#allocation4 + $0x38] sm:$0xff]
      %v3016 = vld [vmem:[#allocation4 + $0x40] sm:$0xff]
      %v3017 = vld [vmem:[#allocation4 + $0x48] sm:$0xff]
      %v3018 = vld [vmem:[#allocation4 + $0x50] sm:$0xff]
      %v3019 = vld [vmem:[#allocation4 + $0x58] sm:$0xff]
      %v3020 = vld [vmem:[#allocation4 + $0x60] sm:$0xff]
      %v3021 = vld [vmem:[#allocation4 + $0x68] sm:$0xff]
      %v3022 = vld [vmem:[#allocation4 + $0x70] sm:$0xff]
      %v3023 = vld [vmem:[#allocation4 + $0x78] sm:$0xff]
      %v3024 = vld [vmem:[%s14] sm:$0xff]
      %v3025 = vld [vmem:[%s14 + $0x8] sm:$0xff]
      %3027 = vset.pattern.permute.xlu0 0
      %3028 = vperm.xlu0 %3027, %v3024
      %v3029 = vpop.permute.xlu0 %3028
      %3032 = vset.pattern.permute.xlu0 0
      %3033 = vperm.xlu0 %3032, %v3025
      %v3034 = vpop.permute.xlu0 %3033
      %v3037 = vsel %vm1687, %v3006, 0
      %v3040 = vsel %vm1687, %v3007, 0
      %3042 = vmatprep.subr.mxu0 %v3009
      %3043 = vmatpush1.msra.mxu0 %v3008
      %3044 = vmatprep.subr.mxu0 %v3011
      %3045 = vmatpush1.msra.mxu0 %v3010
      %3046 = vmatprep.subr.mxu0 %v3013
      %3047 = vmatpush1.msra.mxu0 %v3012
      %3048 = vmatprep.subr.mxu0 %v3015
      %3049 = vmatpush1.msra.mxu0 %v3014
      %3050 = vmatprep.subr.mxu0 %v3017
      %3051 = vmatpush1.msra.mxu0 %v3016
      %3052 = vmatprep.subr.mxu0 %v3019
      %3053 = vmatpush1.msra.mxu0 %v3018
      %3054 = vmatprep.subr.mxu0 %v3021
      %3055 = vmatpush1.msra.mxu0 %v3020
      %3056 = vmatprep.subr.mxu0 %v3023
      %3057 = vmatpush1.msra.mxu0 %v3022
      %3058 = vmatprep.subr.mxu0 0.0
      %3059 = vmatpush1.msra.mxu0 0.0
      %3060 = vmatprep.subr.mxu0 0.0
      %3061 = vmatpush1.msra.mxu0 0.0
      %3062 = vmatprep.subr.mxu0 0.0
      %3063 = vmatpush1.msra.mxu0 0.0
      %3064 = vmatprep.subr.mxu0 0.0
      %3065 = vmatpush1.msra.mxu0 0.0
      %3066 = vmatprep.subr.mxu0 0.0
      %3067 = vmatpush1.msra.mxu0 0.0
      %3068 = vmatprep.subr.mxu0 0.0
      %3069 = vmatpush1.msra.mxu0 0.0
      %3070 = vmatprep.subr.mxu0 0.0
      %3071 = vmatpush1.msra.mxu0 0.0
      %3072 = vmatprep.subr.mxu0 0.0
      %3073 = vmatpush1.msra.mxu0 0.0
      %3074 = vmatprep.subr.mxu0 0.0
      %3075 = vmatpush1.msra.mxu0 0.0
      %3076 = vmatprep.subr.mxu0 0.0
      %3077 = vmatpush1.msra.mxu0 0.0
      %3078 = vmatprep.subr.mxu0 0.0
      %3079 = vmatpush1.msra.mxu0 0.0
      %3080 = vmatprep.subr.mxu0 0.0
      %3081 = vmatpush1.msra.mxu0 0.0
      %3082 = vmatprep.subr.mxu0 0.0
      %3083 = vmatpush1.msra.mxu0 0.0
      %3084 = vmatprep.subr.mxu0 0.0
      %3085 = vmatpush1.msra.mxu0 0.0
      %3086 = vmatprep.subr.mxu0 0.0
      %3087 = vmatpush1.msra.mxu0 0.0
      %3088 = vmatprep.subr.mxu0 0.0
      %3089 = vmatpush1.msra.mxu0 0.0
      %3090 = vmatprep.subr.mxu0 0.0
      %3091 = vmatpush1.msra.mxu0 0.0
      %3092 = vmatprep.subr.mxu0 0.0
      %3093 = vmatpush1.msra.mxu0 0.0
      %3094 = vmatprep.subr.mxu0 0.0
      %3095 = vmatpush1.msra.mxu0 0.0
      %3096 = vmatprep.subr.mxu0 0.0
      %3097 = vmatpush1.msra.mxu0 0.0
      %3098 = vmatprep.subr.mxu0 0.0
      %3099 = vmatpush1.msra.mxu0 0.0
      %3100 = vmatprep.subr.mxu0 0.0
      %3101 = vmatpush1.msra.mxu0 0.0
      %3102 = vmatprep.subr.mxu0 0.0
      %3103 = vmatpush1.msra.mxu0 0.0
      %3104 = vmatprep.subr.mxu0 0.0
      %3105 = vmatpush1.msra.mxu0 0.0
      %3106 = vmatprep.mubr.f32.mxu0 0.0
      %3107 = vmatmul.mubr.f32.gmra.mrb[0].mxu0 %v3037
      %v3108 = vpop.f32.mrb[0].mxu0
      %v3109 = vadd.f32 %v3029, %v3108
      %v3110 = vpop.f32.mrb[0].mxu0
      %v3111 = vadd.f32 %v3029, %v3110
      %3112 = vmatprep.mubr.f32.mxu0 0.0
      %3113 = vmatmul.mubr.f32.gmra.mrb[0].mxu0 %v3040
      %v3114 = vpop.f32.mrb[0].mxu0
      %v3115 = vadd.f32 %v3034, %v3114
      %v3116 = vpop.f32.mrb[0].mxu0
      %v3117 = vadd.f32 %v3034, %v3116
      %3118 = vdwg.mxu0
      %v3119 = vmax.f32 %v3109, 0.0
      %v3120 = vmax.f32 %v3111, 0.0
      %v3121 = vmax.f32 %v3115, 0.0
      %v3122 = vmax.f32 %v3117, 0.0
      %3123 = vst [vmem:[#allocation2] sm:$0xff] 0.0
      %3124 = vst [vmem:[#allocation2 + $0x8] sm:$0xff] 0.0
      %3125 = vst [vmem:[#allocation2 + $0x10] sm:$0xff] 0.0
      %3126 = vst [vmem:[#allocation2 + $0x18] sm:$0xff] 0.0
      %3127 = vst [vmem:[#allocation2 + $0x20] sm:$0xff] 0.0
      %3128 = vst [vmem:[#allocation2 + $0x28] sm:$0xff] 0.0
      %3129 = vst [vmem:[#allocation2 + $0x30] sm:$0xff] 0.0
      %3130 = vst [vmem:[#allocation2 + $0x38] sm:$0xff] 0.0
      %3131 = vst [vmem:[#allocation2 + $0x8] sm:$0xff] %v3119
      %3132 = vst [vmem:[#allocation2 + $0x10] sm:$0xff] %v3120
      %3133 = vst [vmem:[#allocation2 + $0x28] sm:$0xff] %v3121
      %3134 = vst [vmem:[#allocation2 + $0x30] sm:$0xff] %v3122
      %v3135 = vld [vmem:[#allocation2] sm:$0xff]
      %v3136 = vld [vmem:[#allocation2 + $0x8] sm:$0xff]
      %v3137 = vld [vmem:[#allocation2 + $0x10] sm:$0xff]
      %v3138 = vld [vmem:[#allocation2 + $0x20] sm:$0xff]
      %v3139 = vld [vmem:[#allocation2 + $0x28] sm:$0xff]
      %v3140 = vld [vmem:[#allocation2 + $0x30] sm:$0xff]
      %3147 = vrot.lane.b32.xlu0 %v3135, 17
      %v3148 = vpop.permute.xlu0 %3147
      %3149 = vrot.lane.b32.xlu0 %v3136, 17
      %v3150 = vpop.permute.xlu0 %3149
      %3151 = vrot.lane.b32.xlu0 %v3137, 17
      %v3152 = vpop.permute.xlu0 %3151
      %3153 = vrot.lane.b32.xlu0 %v3138, 17
      %v3154 = vpop.permute.xlu0 %3153
      %3155 = vrot.lane.b32.xlu0 %v3139, 17
      %v3156 = vpop.permute.xlu0 %3155
      %3157 = vrot.lane.b32.xlu0 %v3140, 17
      %v3158 = vpop.permute.xlu0 %3157
      %v3159 = vsel %vm677, %v3148, %v3150
      %v3160 = vsel %vm677, %v3150, %v3152
      %v3161 = vsel %vm677, %v3154, %v3156
      %v3162 = vsel %vm677, %v3156, %v3158
      %v3167 = vsel %vm1105, %v3159, 0.0
      %v3168 = vsel %vm1106, %v3160, 0.0
      %v3169 = vsel %vm1105, %v3161, 0.0
      %v3170 = vsel %vm1106, %v3162, 0.0
      %3171 = vst [vmem:[#allocation4] sm:$0xff] %v3167
      %3172 = vst [vmem:[#allocation4 + $0x8] sm:$0xff] %v3168
      %3173 = vst [vmem:[#allocation4 + $0x10] sm:$0xff] %v3169
      %3174 = vst [vmem:[#allocation4 + $0x18] sm:$0xff] %v3170
      %v3175 = vld [vmem:[#allocation2] sm:$0xff]
      %v3176 = vld [vmem:[#allocation2 + $0x8] sm:$0xff]
      %v3177 = vld [vmem:[#allocation2 + $0x10] sm:$0xff]
      %v3178 = vld [vmem:[#allocation2 + $0x20] sm:$0xff]
      %v3179 = vld [vmem:[#allocation2 + $0x28] sm:$0xff]
      %v3180 = vld [vmem:[#allocation2 + $0x30] sm:$0xff]
      %3187 = vrot.lane.b32.xlu0 %v3175, 16
      %v3188 = vpop.permute.xlu0 %3187
      %3189 = vrot.lane.b32.xlu0 %v3176, 16
      %v3190 = vpop.permute.xlu0 %3189
      %3191 = vrot.lane.b32.xlu0 %v3177, 16
      %v3192 = vpop.permute.xlu0 %3191
      %3193 = vrot.lane.b32.xlu0 %v3178, 16
      %v3194 = vpop.permute.xlu0 %3193
      %3195 = vrot.lane.b32.xlu0 %v3179, 16
      %v3196 = vpop.permute.xlu0 %3195
      %3197 = vrot.lane.b32.xlu0 %v3180, 16
      %v3198 = vpop.permute.xlu0 %3197
      %v3199 = vsel %vm709, %v3188, %v3190
      %v3200 = vsel %vm709, %v3190, %v3192
      %v3201 = vsel %vm709, %v3194, %v3196
      %v3202 = vsel %vm709, %v3196, %v3198
      %3207 = vst [vmem:[#allocation4 + $0x20] sm:$0xff] %v3199
      %3208 = vst [vmem:[#allocation4 + $0x28] sm:$0xff] %v3200
      %3209 = vst [vmem:[#allocation4 + $0x30] sm:$0xff] %v3201
      %3210 = vst [vmem:[#allocation4 + $0x38] sm:$0xff] %v3202
      %v3211 = vld [vmem:[#allocation2] sm:$0xff]
      %v3212 = vld [vmem:[#allocation2 + $0x8] sm:$0xff]
      %v3213 = vld [vmem:[#allocation2 + $0x10] sm:$0xff]
      %v3214 = vld [vmem:[#allocation2 + $0x20] sm:$0xff]
      %v3215 = vld [vmem:[#allocation2 + $0x28] sm:$0xff]
      %v3216 = vld [vmem:[#allocation2 + $0x30] sm:$0xff]
      %3223 = vrot.lane.b32.xlu0 %v3211, 15
      %v3224 = vpop.permute.xlu0 %3223
      %3225 = vrot.lane.b32.xlu0 %v3212, 15
      %v3226 = vpop.permute.xlu0 %3225
      %3227 = vrot.lane.b32.xlu0 %v3213, 15
      %v3228 = vpop.permute.xlu0 %3227
      %3229 = vrot.lane.b32.xlu0 %v3214, 15
      %v3230 = vpop.permute.xlu0 %3229
      %3231 = vrot.lane.b32.xlu0 %v3215, 15
      %v3232 = vpop.permute.xlu0 %3231
      %3233 = vrot.lane.b32.xlu0 %v3216, 15
      %v3234 = vpop.permute.xlu0 %3233
      %v3235 = vsel %vm737, %v3224, %v3226
      %v3236 = vsel %vm737, %v3226, %v3228
      %v3237 = vsel %vm737, %v3230, %v3232
      %v3238 = vsel %vm737, %v3232, %v3234
      %v3243 = vsel %vm1185, %v3235, 0.0
      %v3244 = vsel %vm1186, %v3236, 0.0
      %v3245 = vsel %vm1185, %v3237, 0.0
      %v3246 = vsel %vm1186, %v3238, 0.0
      %3247 = vst [vmem:[#allocation4 + $0x40] sm:$0xff] %v3243
      %3248 = vst [vmem:[#allocation4 + $0x48] sm:$0xff] %v3244
      %3249 = vst [vmem:[#allocation4 + $0x50] sm:$0xff] %v3245
      %3250 = vst [vmem:[#allocation4 + $0x58] sm:$0xff] %v3246
      %v3251 = vld [vmem:[#allocation2] sm:$0xff]
      %v3252 = vld [vmem:[#allocation2 + $0x8] sm:$0xff]
      %v3253 = vld [vmem:[#allocation2 + $0x10] sm:$0xff]
      %v3254 = vld [vmem:[#allocation2 + $0x20] sm:$0xff]
      %v3255 = vld [vmem:[#allocation2 + $0x28] sm:$0xff]
      %v3256 = vld [vmem:[#allocation2 + $0x30] sm:$0xff]
      %3263 = vrot.lane.b32.xlu0 %v3251, 1
      %v3264 = vpop.permute.xlu0 %3263
      %3265 = vrot.lane.b32.xlu0 %v3252, 1
      %v3266 = vpop.permute.xlu0 %3265
      %3267 = vrot.lane.b32.xlu0 %v3253, 1
      %v3268 = vpop.permute.xlu0 %3267
      %3269 = vrot.lane.b32.xlu0 %v3254, 1
      %v3270 = vpop.permute.xlu0 %3269
      %3271 = vrot.lane.b32.xlu0 %v3255, 1
      %v3272 = vpop.permute.xlu0 %3271
      %3273 = vrot.lane.b32.xlu0 %v3256, 1
      %v3274 = vpop.permute.xlu0 %3273
      %v3275 = vsel %vm785, %v3264, %v3266
      %v3276 = vsel %vm785, %v3266, %v3268
      %v3277 = vsel %vm785, %v3270, %v3272
      %v3278 = vsel %vm785, %v3272, %v3274
      %v3283 = vsel %vm1105, %v3275, 0.0
      %v3284 = vsel %vm1106, %v3276, 0.0
      %v3285 = vsel %vm1105, %v3277, 0.0
      %v3286 = vsel %vm1106, %v3278, 0.0
      %3287 = vst [vmem:[#allocation4 + $0x60] sm:$0xff] %v3283
      %3288 = vst [vmem:[#allocation4 + $0x68] sm:$0xff] %v3284
      %3289 = vst [vmem:[#allocation4 + $0x70] sm:$0xff] %v3285
      %3290 = vst [vmem:[#allocation4 + $0x78] sm:$0xff] %v3286
      %v3291 = vld [vmem:[#allocation2 + $0x8] sm:$0xff]
      %v3292 = vld [vmem:[#allocation2 + $0x10] sm:$0xff]
      %v3293 = vld [vmem:[#allocation2 + $0x28] sm:$0xff]
      %v3294 = vld [vmem:[#allocation2 + $0x30] sm:$0xff]
      %3295 = vst [vmem:[#allocation4 + $0x80] sm:$0xff] %v3291
      %3296 = vst [vmem:[#allocation4 + $0x88] sm:$0xff] %v3292
      %3297 = vst [vmem:[#allocation4 + $0x90] sm:$0xff] %v3293
      %3298 = vst [vmem:[#allocation4 + $0x98] sm:$0xff] %v3294
      %v3299 = vld [vmem:[#allocation2 + $0x8] sm:$0xff]
      %v3300 = vld [vmem:[#allocation2 + $0x10] sm:$0xff]
      %v3301 = vld [vmem:[#allocation2 + $0x18] sm:$0xff]
      %v3302 = vld [vmem:[#allocation2 + $0x28] sm:$0xff]
      %v3303 = vld [vmem:[#allocation2 + $0x30] sm:$0xff]
      %v3304 = vld [vmem:[#allocation2 + $0x38] sm:$0xff]
      %3311 = vrot.lane.b32.xlu0 %v3299, 127
      %v3312 = vpop.permute.xlu0 %3311
      %3313 = vrot.lane.b32.xlu0 %v3300, 127
      %v3314 = vpop.permute.xlu0 %3313
      %3315 = vrot.lane.b32.xlu0 %v3301, 127
      %v3316 = vpop.permute.xlu0 %3315
      %3317 = vrot.lane.b32.xlu0 %v3302, 127
      %v3318 = vpop.permute.xlu0 %3317
      %3319 = vrot.lane.b32.xlu0 %v3303, 127
      %v3320 = vpop.permute.xlu0 %3319
      %3321 = vrot.lane.b32.xlu0 %v3304, 127
      %v3322 = vpop.permute.xlu0 %3321
      %v3323 = vsel %vm837, %v3312, %v3314
      %v3324 = vsel %vm837, %v3314, %v3316
      %v3325 = vsel %vm837, %v3318, %v3320
      %v3326 = vsel %vm837, %v3320, %v3322
      %v3331 = vsel %vm1185, %v3323, 0.0
      %v3332 = vsel %vm1186, %v3324, 0.0
      %v3333 = vsel %vm1185, %v3325, 0.0
      %v3334 = vsel %vm1186, %v3326, 0.0
      %3335 = vst [vmem:[#allocation4 + $0xa0] sm:$0xff] %v3331
      %3336 = vst [vmem:[#allocation4 + $0xa8] sm:$0xff] %v3332
      %3337 = vst [vmem:[#allocation4 + $0xb0] sm:$0xff] %v3333
      %3338 = vst [vmem:[#allocation4 + $0xb8] sm:$0xff] %v3334
      %v3339 = vld [vmem:[#allocation2 + $0x8] sm:$0xff]
      %v3340 = vld [vmem:[#allocation2 + $0x10] sm:$0xff]
      %v3341 = vld [vmem:[#allocation2 + $0x18] sm:$0xff]
      %v3342 = vld [vmem:[#allocation2 + $0x28] sm:$0xff]
      %v3343 = vld [vmem:[#allocation2 + $0x30] sm:$0xff]
      %v3344 = vld [vmem:[#allocation2 + $0x38] sm:$0xff]
      %3351 = vrot.lane.b32.xlu0 %v3339, 113
      %v3352 = vpop.permute.xlu0 %3351
      %3353 = vrot.lane.b32.xlu0 %v3340, 113
      %v3354 = vpop.permute.xlu0 %3353
      %3355 = vrot.lane.b32.xlu0 %v3341, 113
      %v3356 = vpop.permute.xlu0 %3355
      %3357 = vrot.lane.b32.xlu0 %v3342, 113
      %v3358 = vpop.permute.xlu0 %3357
      %3359 = vrot.lane.b32.xlu0 %v3343, 113
      %v3360 = vpop.permute.xlu0 %3359
      %3361 = vrot.lane.b32.xlu0 %v3344, 113
      %v3362 = vpop.permute.xlu0 %3361
      %v3363 = vsel %vm885, %v3352, %v3354
      %v3364 = vsel %vm885, %v3354, %v3356
      %v3365 = vsel %vm885, %v3358, %v3360
      %v3366 = vsel %vm885, %v3360, %v3362
      %v3371 = vsel %vm1105, %v3363, 0.0
      %v3372 = vsel %vm1106, %v3364, 0.0
      %v3373 = vsel %vm1105, %v3365, 0.0
      %v3374 = vsel %vm1106, %v3366, 0.0
      %3375 = vst [vmem:[#allocation4 + $0xc0] sm:$0xff] %v3371
      %3376 = vst [vmem:[#allocation4 + $0xc8] sm:$0xff] %v3372
      %3377 = vst [vmem:[#allocation4 + $0xd0] sm:$0xff] %v3373
      %3378 = vst [vmem:[#allocation4 + $0xd8] sm:$0xff] %v3374
      %v3379 = vld [vmem:[#allocation2 + $0x8] sm:$0xff]
      %v3380 = vld [vmem:[#allocation2 + $0x10] sm:$0xff]
      %v3381 = vld [vmem:[#allocation2 + $0x18] sm:$0xff]
      %v3382 = vld [vmem:[#allocation2 + $0x28] sm:$0xff]
      %v3383 = vld [vmem:[#allocation2 + $0x30] sm:$0xff]
      %v3384 = vld [vmem:[#allocation2 + $0x38] sm:$0xff]
      %3391 = vrot.lane.b32.xlu0 %v3379, 112
      %v3392 = vpop.permute.xlu0 %3391
      %3393 = vrot.lane.b32.xlu0 %v3380, 112
      %v3394 = vpop.permute.xlu0 %3393
      %3395 = vrot.lane.b32.xlu0 %v3381, 112
      %v3396 = vpop.permute.xlu0 %3395
      %3397 = vrot.lane.b32.xlu0 %v3382, 112
      %v3398 = vpop.permute.xlu0 %3397
      %3399 = vrot.lane.b32.xlu0 %v3383, 112
      %v3400 = vpop.permute.xlu0 %3399
      %3401 = vrot.lane.b32.xlu0 %v3384, 112
      %v3402 = vpop.permute.xlu0 %3401
      %v3403 = vsel %vm918, %v3392, %v3394
      %v3404 = vsel %vm918, %v3394, %v3396
      %v3405 = vsel %vm918, %v3398, %v3400
      %v3406 = vsel %vm918, %v3400, %v3402
      %3411 = vst [vmem:[#allocation4 + $0xe0] sm:$0xff] %v3403
      %3412 = vst [vmem:[#allocation4 + $0xe8] sm:$0xff] %v3404
      %3413 = vst [vmem:[#allocation4 + $0xf0] sm:$0xff] %v3405
      %3414 = vst [vmem:[#allocation4 + $0xf8] sm:$0xff] %v3406
      %v3415 = vld [vmem:[#allocation2 + $0x8] sm:$0xff]
      %v3416 = vld [vmem:[#allocation2 + $0x10] sm:$0xff]
      %v3417 = vld [vmem:[#allocation2 + $0x18] sm:$0xff]
      %v3418 = vld [vmem:[#allocation2 + $0x28] sm:$0xff]
      %v3419 = vld [vmem:[#allocation2 + $0x30] sm:$0xff]
      %v3420 = vld [vmem:[#allocation2 + $0x38] sm:$0xff]
      %3427 = vrot.lane.b32.xlu0 %v3415, 111
      %v3428 = vpop.permute.xlu0 %3427
      %3429 = vrot.lane.b32.xlu0 %v3416, 111
      %v3430 = vpop.permute.xlu0 %3429
      %3431 = vrot.lane.b32.xlu0 %v3417, 111
      %v3432 = vpop.permute.xlu0 %3431
      %3433 = vrot.lane.b32.xlu0 %v3418, 111
      %v3434 = vpop.permute.xlu0 %3433
      %3435 = vrot.lane.b32.xlu0 %v3419, 111
      %v3436 = vpop.permute.xlu0 %3435
      %3437 = vrot.lane.b32.xlu0 %v3420, 111
      %v3438 = vpop.permute.xlu0 %3437
      %v3439 = vsel %vm944, %v3428, %v3430
      %v3440 = vsel %vm944, %v3430, %v3432
      %v3441 = vsel %vm944, %v3434, %v3436
      %v3442 = vsel %vm944, %v3436, %v3438
      %v3447 = vsel %vm1185, %v3439, 0.0
      %v3448 = vsel %vm1186, %v3440, 0.0
      %v3449 = vsel %vm1185, %v3441, 0.0
      %v3450 = vsel %vm1186, %v3442, 0.0
      %3451 = vst [vmem:[#allocation4 + $0x100] sm:$0xff] %v3447
      %3452 = vst [vmem:[#allocation4 + $0x108] sm:$0xff] %v3448
      %3453 = vst [vmem:[#allocation4 + $0x110] sm:$0xff] %v3449
      %3454 = vst [vmem:[#allocation4 + $0x118] sm:$0xff] %v3450
      %v3455 = vld [vmem:[%s7] sm:$0xff]
      %v3456 = vld [vmem:[%s7 + $0x8] sm:$0xff]
      %v3457 = vld [vmem:[%s7 + $0x10] sm:$0xff]
      %v3458 = vld [vmem:[%s7 + $0x18] sm:$0xff]
      %v3459 = vld [vmem:[#allocation4] sm:$0xff]
      %v3460 = vld [vmem:[#allocation4 + $0x8] sm:$0xff]
      %v3461 = vld [vmem:[#allocation4 + $0x10] sm:$0xff]
      %v3462 = vld [vmem:[#allocation4 + $0x18] sm:$0xff]
      %v3463 = vld [vmem:[#allocation4 + $0x20] sm:$0xff]
      %v3464 = vld [vmem:[#allocation4 + $0x28] sm:$0xff]
      %v3465 = vld [vmem:[#allocation4 + $0x30] sm:$0xff]
      %v3466 = vld [vmem:[#allocation4 + $0x38] sm:$0xff]
      %v3467 = vld [vmem:[#allocation4 + $0x40] sm:$0xff]
      %v3468 = vld [vmem:[#allocation4 + $0x48] sm:$0xff]
      %v3469 = vld [vmem:[#allocation4 + $0x50] sm:$0xff]
      %v3470 = vld [vmem:[#allocation4 + $0x58] sm:$0xff]
      %v3471 = vld [vmem:[#allocation4 + $0x60] sm:$0xff]
      %v3472 = vld [vmem:[#allocation4 + $0x68] sm:$0xff]
      %v3473 = vld [vmem:[#allocation4 + $0x70] sm:$0xff]
      %v3474 = vld [vmem:[#allocation4 + $0x78] sm:$0xff]
      %v3475 = vld [vmem:[#allocation4 + $0x80] sm:$0xff]
      %v3476 = vld [vmem:[#allocation4 + $0x88] sm:$0xff]
      %v3477 = vld [vmem:[#allocation4 + $0x90] sm:$0xff]
      %v3478 = vld [vmem:[#allocation4 + $0x98] sm:$0xff]
      %v3479 = vld [vmem:[#allocation4 + $0xa0] sm:$0xff]
      %v3480 = vld [vmem:[#allocation4 + $0xa8] sm:$0xff]
      %v3481 = vld [vmem:[#allocation4 + $0xb0] sm:$0xff]
      %v3482 = vld [vmem:[#allocation4 + $0xb8] sm:$0xff]
      %v3483 = vld [vmem:[#allocation4 + $0xc0] sm:$0xff]
      %v3484 = vld [vmem:[#allocation4 + $0xc8] sm:$0xff]
      %v3485 = vld [vmem:[#allocation4 + $0xd0] sm:$0xff]
      %v3486 = vld [vmem:[#allocation4 + $0xd8] sm:$0xff]
      %v3487 = vld [vmem:[#allocation4 + $0xe0] sm:$0xff]
      %v3488 = vld [vmem:[#allocation4 + $0xe8] sm:$0xff]
      %v3489 = vld [vmem:[#allocation4 + $0xf0] sm:$0xff]
      %v3490 = vld [vmem:[#allocation4 + $0xf8] sm:$0xff]
      %v3491 = vld [vmem:[#allocation4 + $0x100] sm:$0xff]
      %v3492 = vld [vmem:[#allocation4 + $0x108] sm:$0xff]
      %v3493 = vld [vmem:[#allocation4 + $0x110] sm:$0xff]
      %v3494 = vld [vmem:[#allocation4 + $0x118] sm:$0xff]
      %v3495 = vld [vmem:[%s15] sm:$0xff]
      %v3496 = vld [vmem:[%s15 + $0x8] sm:$0xff]
      %3498 = vset.pattern.permute.xlu0 0
      %3499 = vperm.xlu0 %3498, %v3495
      %v3500 = vpop.permute.xlu0 %3499
      %3503 = vset.pattern.permute.xlu0 0
      %3504 = vperm.xlu0 %3503, %v3496
      %v3505 = vpop.permute.xlu0 %3504
      %v3508 = vsel %vm709, %v3456, 0
      %v3511 = vsel %vm709, %v3458, 0
      %3513 = vmatprep.subr.mxu0 %v3460
      %3514 = vmatpush1.msra.mxu0 %v3459
      %3515 = vmatprep.subr.mxu0 %v3462
      %3516 = vmatpush1.msra.mxu0 %v3461
      %3517 = vmatprep.subr.mxu0 %v3464
      %3518 = vmatpush1.msra.mxu0 %v3463
      %3519 = vmatprep.subr.mxu0 %v3466
      %3520 = vmatpush1.msra.mxu0 %v3465
      %3521 = vmatprep.subr.mxu0 %v3468
      %3522 = vmatpush1.msra.mxu0 %v3467
      %3523 = vmatprep.subr.mxu0 %v3470
      %3524 = vmatpush1.msra.mxu0 %v3469
      %3525 = vmatprep.subr.mxu0 %v3472
      %3526 = vmatpush1.msra.mxu0 %v3471
      %3527 = vmatprep.subr.mxu0 %v3474
      %3528 = vmatpush1.msra.mxu0 %v3473
      %3529 = vmatprep.subr.mxu0 %v3476
      %3530 = vmatpush1.msra.mxu0 %v3475
      %3531 = vmatprep.subr.mxu0 %v3478
      %3532 = vmatpush1.msra.mxu0 %v3477
      %3533 = vmatprep.subr.mxu0 %v3480
      %3534 = vmatpush1.msra.mxu0 %v3479
      %3535 = vmatprep.subr.mxu0 %v3482
      %3536 = vmatpush1.msra.mxu0 %v3481
      %3537 = vmatprep.subr.mxu0 %v3484
      %3538 = vmatpush1.msra.mxu0 %v3483
      %3539 = vmatprep.subr.mxu0 %v3486
      %3540 = vmatpush1.msra.mxu0 %v3485
      %3541 = vmatprep.subr.mxu0 %v3488
      %3542 = vmatpush1.msra.mxu0 %v3487
      %3543 = vmatprep.subr.mxu0 %v3490
      %3544 = vmatpush1.msra.mxu0 %v3489
      %3545 = vmatprep.subr.mxu0 %v3492
      %3546 = vmatpush1.msra.mxu0 %v3491
      %3547 = vmatprep.subr.mxu0 %v3494
      %3548 = vmatpush1.msra.mxu0 %v3493
      %3549 = vmatprep.subr.mxu0 0.0
      %3550 = vmatpush1.msra.mxu0 0.0
      %3551 = vmatprep.subr.mxu0 0.0
      %3552 = vmatpush1.msra.mxu0 0.0
      %3553 = vmatprep.subr.mxu0 0.0
      %3554 = vmatpush1.msra.mxu0 0.0
      %3555 = vmatprep.subr.mxu0 0.0
      %3556 = vmatpush1.msra.mxu0 0.0
      %3557 = vmatprep.subr.mxu0 0.0
      %3558 = vmatpush1.msra.mxu0 0.0
      %3559 = vmatprep.subr.mxu0 0.0
      %3560 = vmatpush1.msra.mxu0 0.0
      %3561 = vmatprep.subr.mxu0 0.0
      %3562 = vmatpush1.msra.mxu0 0.0
      %3563 = vmatprep.subr.mxu0 0.0
      %3564 = vmatpush1.msra.mxu0 0.0
      %3565 = vmatprep.subr.mxu0 0.0
      %3566 = vmatpush1.msra.mxu0 0.0
      %3567 = vmatprep.subr.mxu0 0.0
      %3568 = vmatpush1.msra.mxu0 0.0
      %3569 = vmatprep.subr.mxu0 0.0
      %3570 = vmatpush1.msra.mxu0 0.0
      %3571 = vmatprep.subr.mxu0 0.0
      %3572 = vmatpush1.msra.mxu0 0.0
      %3573 = vmatprep.subr.mxu0 0.0
      %3574 = vmatpush1.msra.mxu0 0.0
      %3575 = vmatprep.subr.mxu0 0.0
      %3576 = vmatpush1.msra.mxu0 0.0
      %3577 = vmatprep.mubr.f32.mxu0 %v3508
      %3578 = vmatmul.mubr.f32.gmra.mrb[0].mxu0 %v3455
      %v3579 = vpop.f32.mrb[0].mxu0
      %v3580 = vadd.f32 %v3500, %v3579
      %v3581 = vpop.f32.mrb[0].mxu0
      %v3582 = vadd.f32 %v3500, %v3581
      %3583 = vmatprep.mubr.f32.mxu0 %v3511
      %3584 = vmatmul.mubr.f32.gmra.mrb[0].mxu0 %v3457
      %v3585 = vpop.f32.mrb[0].mxu0
      %v3586 = vadd.f32 %v3505, %v3585
      %v3587 = vpop.f32.mrb[0].mxu0
      %v3588 = vadd.f32 %v3505, %v3587
      %3589 = vdwg.mxu0
      %v3590 = vmax.f32 %v3580, 0.0
      %v3591 = vmax.f32 %v3582, 0.0
      %v3592 = vmax.f32 %v3586, 0.0
      %v3593 = vmax.f32 %v3588, 0.0
      %3594 = vst [vmem:[#allocation3] sm:$0xff] 0.0
      %3595 = vst [vmem:[#allocation3 + $0x8] sm:$0xff] 0.0
      %3596 = vst [vmem:[#allocation3 + $0x10] sm:$0xff] 0.0
      %3597 = vst [vmem:[#allocation3 + $0x18] sm:$0xff] 0.0
      %3598 = vst [vmem:[#allocation3 + $0x20] sm:$0xff] 0.0
      %3599 = vst [vmem:[#allocation3 + $0x28] sm:$0xff] 0.0
      %3600 = vst [vmem:[#allocation3 + $0x30] sm:$0xff] 0.0
      %3601 = vst [vmem:[#allocation3 + $0x38] sm:$0xff] 0.0
      %3602 = vst [vmem:[#allocation3 + $0x8] sm:$0xff] %v3590
      %3603 = vst [vmem:[#allocation3 + $0x10] sm:$0xff] %v3591
      %3604 = vst [vmem:[#allocation3 + $0x28] sm:$0xff] %v3592
      %3605 = vst [vmem:[#allocation3 + $0x30] sm:$0xff] %v3593
      %v3606 = vld [vmem:[#allocation3] sm:$0xff]
      %v3607 = vld [vmem:[#allocation3 + $0x8] sm:$0xff]
      %v3608 = vld [vmem:[#allocation3 + $0x10] sm:$0xff]
      %v3609 = vld [vmem:[#allocation3 + $0x20] sm:$0xff]
      %v3610 = vld [vmem:[#allocation3 + $0x28] sm:$0xff]
      %v3611 = vld [vmem:[#allocation3 + $0x30] sm:$0xff]
      %3618 = vrot.lane.b32.xlu0 %v3606, 17
      %v3619 = vpop.permute.xlu0 %3618
      %3620 = vrot.lane.b32.xlu0 %v3607, 17
      %v3621 = vpop.permute.xlu0 %3620
      %3622 = vrot.lane.b32.xlu0 %v3608, 17
      %v3623 = vpop.permute.xlu0 %3622
      %3624 = vrot.lane.b32.xlu0 %v3609, 17
      %v3625 = vpop.permute.xlu0 %3624
      %3626 = vrot.lane.b32.xlu0 %v3610, 17
      %v3627 = vpop.permute.xlu0 %3626
      %3628 = vrot.lane.b32.xlu0 %v3611, 17
      %v3629 = vpop.permute.xlu0 %3628
      %v3630 = vsel %vm677, %v3619, %v3621
      %v3631 = vsel %vm677, %v3621, %v3623
      %v3632 = vsel %vm677, %v3625, %v3627
      %v3633 = vsel %vm677, %v3627, %v3629
      %v3638 = vsel %vm1105, %v3630, 0.0
      %v3639 = vsel %vm1106, %v3631, 0.0
      %v3640 = vsel %vm1105, %v3632, 0.0
      %v3641 = vsel %vm1106, %v3633, 0.0
      %3642 = vst [vmem:[#allocation4] sm:$0xff] %v3638
      %3643 = vst [vmem:[#allocation4 + $0x8] sm:$0xff] %v3639
      %3644 = vst [vmem:[#allocation4 + $0x10] sm:$0xff] %v3640
      %3645 = vst [vmem:[#allocation4 + $0x18] sm:$0xff] %v3641
      %v3646 = vld [vmem:[#allocation3] sm:$0xff]
      %v3647 = vld [vmem:[#allocation3 + $0x8] sm:$0xff]
      %v3648 = vld [vmem:[#allocation3 + $0x10] sm:$0xff]
      %v3649 = vld [vmem:[#allocation3 + $0x20] sm:$0xff]
      %v3650 = vld [vmem:[#allocation3 + $0x28] sm:$0xff]
      %v3651 = vld [vmem:[#allocation3 + $0x30] sm:$0xff]
      %3658 = vrot.lane.b32.xlu0 %v3646, 16
      %v3659 = vpop.permute.xlu0 %3658
      %3660 = vrot.lane.b32.xlu0 %v3647, 16
      %v3661 = vpop.permute.xlu0 %3660
      %3662 = vrot.lane.b32.xlu0 %v3648, 16
      %v3663 = vpop.permute.xlu0 %3662
      %3664 = vrot.lane.b32.xlu0 %v3649, 16
      %v3665 = vpop.permute.xlu0 %3664
      %3666 = vrot.lane.b32.xlu0 %v3650, 16
      %v3667 = vpop.permute.xlu0 %3666
      %3668 = vrot.lane.b32.xlu0 %v3651, 16
      %v3669 = vpop.permute.xlu0 %3668
      %v3670 = vsel %vm709, %v3659, %v3661
      %v3671 = vsel %vm709, %v3661, %v3663
      %v3672 = vsel %vm709, %v3665, %v3667
      %v3673 = vsel %vm709, %v3667, %v3669
      %3678 = vst [vmem:[#allocation4 + $0x20] sm:$0xff] %v3670
      %3679 = vst [vmem:[#allocation4 + $0x28] sm:$0xff] %v3671
      %3680 = vst [vmem:[#allocation4 + $0x30] sm:$0xff] %v3672
      %3681 = vst [vmem:[#allocation4 + $0x38] sm:$0xff] %v3673
      %v3682 = vld [vmem:[#allocation3] sm:$0xff]
      %v3683 = vld [vmem:[#allocation3 + $0x8] sm:$0xff]
      %v3684 = vld [vmem:[#allocation3 + $0x10] sm:$0xff]
      %v3685 = vld [vmem:[#allocation3 + $0x20] sm:$0xff]
      %v3686 = vld [vmem:[#allocation3 + $0x28] sm:$0xff]
      %v3687 = vld [vmem:[#allocation3 + $0x30] sm:$0xff]
      %3694 = vrot.lane.b32.xlu0 %v3682, 15
      %v3695 = vpop.permute.xlu0 %3694
      %3696 = vrot.lane.b32.xlu0 %v3683, 15
      %v3697 = vpop.permute.xlu0 %3696
      %3698 = vrot.lane.b32.xlu0 %v3684, 15
      %v3699 = vpop.permute.xlu0 %3698
      %3700 = vrot.lane.b32.xlu0 %v3685, 15
      %v3701 = vpop.permute.xlu0 %3700
      %3702 = vrot.lane.b32.xlu0 %v3686, 15
      %v3703 = vpop.permute.xlu0 %3702
      %3704 = vrot.lane.b32.xlu0 %v3687, 15
      %v3705 = vpop.permute.xlu0 %3704
      %v3706 = vsel %vm737, %v3695, %v3697
      %v3707 = vsel %vm737, %v3697, %v3699
      %v3708 = vsel %vm737, %v3701, %v3703
      %v3709 = vsel %vm737, %v3703, %v3705
      %v3714 = vsel %vm1185, %v3706, 0.0
      %v3715 = vsel %vm1186, %v3707, 0.0
      %v3716 = vsel %vm1185, %v3708, 0.0
      %v3717 = vsel %vm1186, %v3709, 0.0
      %3718 = vst [vmem:[#allocation4 + $0x40] sm:$0xff] %v3714
      %3719 = vst [vmem:[#allocation4 + $0x48] sm:$0xff] %v3715
      %3720 = vst [vmem:[#allocation4 + $0x50] sm:$0xff] %v3716
      %3721 = vst [vmem:[#allocation4 + $0x58] sm:$0xff] %v3717
      %v3722 = vld [vmem:[#allocation3] sm:$0xff]
      %v3723 = vld [vmem:[#allocation3 + $0x8] sm:$0xff]
      %v3724 = vld [vmem:[#allocation3 + $0x10] sm:$0xff]
      %v3725 = vld [vmem:[#allocation3 + $0x20] sm:$0xff]
      %v3726 = vld [vmem:[#allocation3 + $0x28] sm:$0xff]
      %v3727 = vld [vmem:[#allocation3 + $0x30] sm:$0xff]
      %3734 = vrot.lane.b32.xlu0 %v3722, 1
      %v3735 = vpop.permute.xlu0 %3734
      %3736 = vrot.lane.b32.xlu0 %v3723, 1
      %v3737 = vpop.permute.xlu0 %3736
      %3738 = vrot.lane.b32.xlu0 %v3724, 1
      %v3739 = vpop.permute.xlu0 %3738
      %3740 = vrot.lane.b32.xlu0 %v3725, 1
      %v3741 = vpop.permute.xlu0 %3740
      %3742 = vrot.lane.b32.xlu0 %v3726, 1
      %v3743 = vpop.permute.xlu0 %3742
      %3744 = vrot.lane.b32.xlu0 %v3727, 1
      %v3745 = vpop.permute.xlu0 %3744
      %v3746 = vsel %vm785, %v3735, %v3737
      %v3747 = vsel %vm785, %v3737, %v3739
      %v3748 = vsel %vm785, %v3741, %v3743
      %v3749 = vsel %vm785, %v3743, %v3745
      %v3754 = vsel %vm1105, %v3746, 0.0
      %v3755 = vsel %vm1106, %v3747, 0.0
      %v3756 = vsel %vm1105, %v3748, 0.0
      %v3757 = vsel %vm1106, %v3749, 0.0
      %3758 = vst [vmem:[#allocation4 + $0x60] sm:$0xff] %v3754
      %3759 = vst [vmem:[#allocation4 + $0x68] sm:$0xff] %v3755
      %3760 = vst [vmem:[#allocation4 + $0x70] sm:$0xff] %v3756
      %3761 = vst [vmem:[#allocation4 + $0x78] sm:$0xff] %v3757
      %v3762 = vld [vmem:[#allocation3 + $0x8] sm:$0xff]
      %v3763 = vld [vmem:[#allocation3 + $0x10] sm:$0xff]
      %v3764 = vld [vmem:[#allocation3 + $0x28] sm:$0xff]
      %v3765 = vld [vmem:[#allocation3 + $0x30] sm:$0xff]
      %3766 = vst [vmem:[#allocation4 + $0x80] sm:$0xff] %v3762
      %3767 = vst [vmem:[#allocation4 + $0x88] sm:$0xff] %v3763
      %3768 = vst [vmem:[#allocation4 + $0x90] sm:$0xff] %v3764
      %3769 = vst [vmem:[#allocation4 + $0x98] sm:$0xff] %v3765
      %v3770 = vld [vmem:[#allocation3 + $0x8] sm:$0xff]
      %v3771 = vld [vmem:[#allocation3 + $0x10] sm:$0xff]
      %v3772 = vld [vmem:[#allocation3 + $0x18] sm:$0xff]
      %v3773 = vld [vmem:[#allocation3 + $0x28] sm:$0xff]
      %v3774 = vld [vmem:[#allocation3 + $0x30] sm:$0xff]
      %v3775 = vld [vmem:[#allocation3 + $0x38] sm:$0xff]
      %3782 = vrot.lane.b32.xlu0 %v3770, 127
      %v3783 = vpop.permute.xlu0 %3782
      %3784 = vrot.lane.b32.xlu0 %v3771, 127
      %v3785 = vpop.permute.xlu0 %3784
      %3786 = vrot.lane.b32.xlu0 %v3772, 127
      %v3787 = vpop.permute.xlu0 %3786
      %3788 = vrot.lane.b32.xlu0 %v3773, 127
      %v3789 = vpop.permute.xlu0 %3788
      %3790 = vrot.lane.b32.xlu0 %v3774, 127
      %v3791 = vpop.permute.xlu0 %3790
      %3792 = vrot.lane.b32.xlu0 %v3775, 127
      %v3793 = vpop.permute.xlu0 %3792
      %v3794 = vsel %vm837, %v3783, %v3785
      %v3795 = vsel %vm837, %v3785, %v3787
      %v3796 = vsel %vm837, %v3789, %v3791
      %v3797 = vsel %vm837, %v3791, %v3793
      %v3802 = vsel %vm1185, %v3794, 0.0
      %v3803 = vsel %vm1186, %v3795, 0.0
      %v3804 = vsel %vm1185, %v3796, 0.0
      %v3805 = vsel %vm1186, %v3797, 0.0
      %3806 = vst [vmem:[#allocation4 + $0xa0] sm:$0xff] %v3802
      %3807 = vst [vmem:[#allocation4 + $0xa8] sm:$0xff] %v3803
      %3808 = vst [vmem:[#allocation4 + $0xb0] sm:$0xff] %v3804
      %3809 = vst [vmem:[#allocation4 + $0xb8] sm:$0xff] %v3805
      %v3810 = vld [vmem:[#allocation3 + $0x8] sm:$0xff]
      %v3811 = vld [vmem:[#allocation3 + $0x10] sm:$0xff]
      %v3812 = vld [vmem:[#allocation3 + $0x18] sm:$0xff]
      %v3813 = vld [vmem:[#allocation3 + $0x28] sm:$0xff]
      %v3814 = vld [vmem:[#allocation3 + $0x30] sm:$0xff]
      %v3815 = vld [vmem:[#allocation3 + $0x38] sm:$0xff]
      %3822 = vrot.lane.b32.xlu0 %v3810, 113
      %v3823 = vpop.permute.xlu0 %3822
      %3824 = vrot.lane.b32.xlu0 %v3811, 113
      %v3825 = vpop.permute.xlu0 %3824
      %3826 = vrot.lane.b32.xlu0 %v3812, 113
      %v3827 = vpop.permute.xlu0 %3826
      %3828 = vrot.lane.b32.xlu0 %v3813, 113
      %v3829 = vpop.permute.xlu0 %3828
      %3830 = vrot.lane.b32.xlu0 %v3814, 113
      %v3831 = vpop.permute.xlu0 %3830
      %3832 = vrot.lane.b32.xlu0 %v3815, 113
      %v3833 = vpop.permute.xlu0 %3832
      %v3834 = vsel %vm885, %v3823, %v3825
      %v3835 = vsel %vm885, %v3825, %v3827
      %v3836 = vsel %vm885, %v3829, %v3831
      %v3837 = vsel %vm885, %v3831, %v3833
      %v3842 = vsel %vm1105, %v3834, 0.0
      %v3843 = vsel %vm1106, %v3835, 0.0
      %v3844 = vsel %vm1105, %v3836, 0.0
      %v3845 = vsel %vm1106, %v3837, 0.0
      %3846 = vst [vmem:[#allocation4 + $0xc0] sm:$0xff] %v3842
      %3847 = vst [vmem:[#allocation4 + $0xc8] sm:$0xff] %v3843
      %3848 = vst [vmem:[#allocation4 + $0xd0] sm:$0xff] %v3844
      %3849 = vst [vmem:[#allocation4 + $0xd8] sm:$0xff] %v3845
      %v3850 = vld [vmem:[#allocation3 + $0x8] sm:$0xff]
      %v3851 = vld [vmem:[#allocation3 + $0x10] sm:$0xff]
      %v3852 = vld [vmem:[#allocation3 + $0x18] sm:$0xff]
      %v3853 = vld [vmem:[#allocation3 + $0x28] sm:$0xff]
      %v3854 = vld [vmem:[#allocation3 + $0x30] sm:$0xff]
      %v3855 = vld [vmem:[#allocation3 + $0x38] sm:$0xff]
      %3862 = vrot.lane.b32.xlu0 %v3850, 112
      %v3863 = vpop.permute.xlu0 %3862
      %3864 = vrot.lane.b32.xlu0 %v3851, 112
      %v3865 = vpop.permute.xlu0 %3864
      %3866 = vrot.lane.b32.xlu0 %v3852, 112
      %v3867 = vpop.permute.xlu0 %3866
      %3868 = vrot.lane.b32.xlu0 %v3853, 112
      %v3869 = vpop.permute.xlu0 %3868
      %3870 = vrot.lane.b32.xlu0 %v3854, 112
      %v3871 = vpop.permute.xlu0 %3870
      %3872 = vrot.lane.b32.xlu0 %v3855, 112
      %v3873 = vpop.permute.xlu0 %3872
      %v3874 = vsel %vm918, %v3863, %v3865
      %v3875 = vsel %vm918, %v3865, %v3867
      %v3876 = vsel %vm918, %v3869, %v3871
      %v3877 = vsel %vm918, %v3871, %v3873
      %3882 = vst [vmem:[#allocation4 + $0xe0] sm:$0xff] %v3874
      %3883 = vst [vmem:[#allocation4 + $0xe8] sm:$0xff] %v3875
      %3884 = vst [vmem:[#allocation4 + $0xf0] sm:$0xff] %v3876
      %3885 = vst [vmem:[#allocation4 + $0xf8] sm:$0xff] %v3877
      %v3886 = vld [vmem:[#allocation3 + $0x8] sm:$0xff]
      %v3887 = vld [vmem:[#allocation3 + $0x10] sm:$0xff]
      %v3888 = vld [vmem:[#allocation3 + $0x18] sm:$0xff]
      %v3889 = vld [vmem:[#allocation3 + $0x28] sm:$0xff]
      %v3890 = vld [vmem:[#allocation3 + $0x30] sm:$0xff]
      %v3891 = vld [vmem:[#allocation3 + $0x38] sm:$0xff]
      %3898 = vrot.lane.b32.xlu0 %v3886, 111
      %v3899 = vpop.permute.xlu0 %3898
      %3900 = vrot.lane.b32.xlu0 %v3887, 111
      %v3901 = vpop.permute.xlu0 %3900
      %3902 = vrot.lane.b32.xlu0 %v3888, 111
      %v3903 = vpop.permute.xlu0 %3902
      %3904 = vrot.lane.b32.xlu0 %v3889, 111
      %v3905 = vpop.permute.xlu0 %3904
      %3906 = vrot.lane.b32.xlu0 %v3890, 111
      %v3907 = vpop.permute.xlu0 %3906
      %3908 = vrot.lane.b32.xlu0 %v3891, 111
      %v3909 = vpop.permute.xlu0 %3908
      %v3910 = vsel %vm944, %v3899, %v3901
      %v3911 = vsel %vm944, %v3901, %v3903
      %v3912 = vsel %vm944, %v3905, %v3907
      %v3913 = vsel %vm944, %v3907, %v3909
      %v3918 = vsel %vm1185, %v3910, 0.0
      %v3919 = vsel %vm1186, %v3911, 0.0
      %v3920 = vsel %vm1185, %v3912, 0.0
      %v3921 = vsel %vm1186, %v3913, 0.0
      %3922 = vst [vmem:[#allocation4 + $0x100] sm:$0xff] %v3918
      %3923 = vst [vmem:[#allocation4 + $0x108] sm:$0xff] %v3919
      %3924 = vst [vmem:[#allocation4 + $0x110] sm:$0xff] %v3920
      %3925 = vst [vmem:[#allocation4 + $0x118] sm:$0xff] %v3921
      %v3926 = vld [vmem:[%s8] sm:$0x3]
      %v3927 = vld [vmem:[#allocation4] sm:$0xff]
      %v3928 = vld [vmem:[#allocation4 + $0x8] sm:$0xff]
      %v3929 = vld [vmem:[#allocation4 + $0x10] sm:$0xff]
      %v3930 = vld [vmem:[#allocation4 + $0x18] sm:$0xff]
      %v3931 = vld [vmem:[#allocation4 + $0x20] sm:$0xff]
      %v3932 = vld [vmem:[#allocation4 + $0x28] sm:$0xff]
      %v3933 = vld [vmem:[#allocation4 + $0x30] sm:$0xff]
      %v3934 = vld [vmem:[#allocation4 + $0x38] sm:$0xff]
      %v3935 = vld [vmem:[#allocation4 + $0x40] sm:$0xff]
      %v3936 = vld [vmem:[#allocation4 + $0x48] sm:$0xff]
      %v3937 = vld [vmem:[#allocation4 + $0x50] sm:$0xff]
      %v3938 = vld [vmem:[#allocation4 + $0x58] sm:$0xff]
      %v3939 = vld [vmem:[#allocation4 + $0x60] sm:$0xff]
      %v3940 = vld [vmem:[#allocation4 + $0x68] sm:$0xff]
      %v3941 = vld [vmem:[#allocation4 + $0x70] sm:$0xff]
      %v3942 = vld [vmem:[#allocation4 + $0x78] sm:$0xff]
      %v3943 = vld [vmem:[#allocation4 + $0x80] sm:$0xff]
      %v3944 = vld [vmem:[#allocation4 + $0x88] sm:$0xff]
      %v3945 = vld [vmem:[#allocation4 + $0x90] sm:$0xff]
      %v3946 = vld [vmem:[#allocation4 + $0x98] sm:$0xff]
      %v3947 = vld [vmem:[#allocation4 + $0xa0] sm:$0xff]
      %v3948 = vld [vmem:[#allocation4 + $0xa8] sm:$0xff]
      %v3949 = vld [vmem:[#allocation4 + $0xb0] sm:$0xff]
      %v3950 = vld [vmem:[#allocation4 + $0xb8] sm:$0xff]
      %v3951 = vld [vmem:[#allocation4 + $0xc0] sm:$0xff]
      %v3952 = vld [vmem:[#allocation4 + $0xc8] sm:$0xff]
      %v3953 = vld [vmem:[#allocation4 + $0xd0] sm:$0xff]
      %v3954 = vld [vmem:[#allocation4 + $0xd8] sm:$0xff]
      %v3955 = vld [vmem:[#allocation4 + $0xe0] sm:$0xff]
      %v3956 = vld [vmem:[#allocation4 + $0xe8] sm:$0xff]
      %v3957 = vld [vmem:[#allocation4 + $0xf0] sm:$0xff]
      %v3958 = vld [vmem:[#allocation4 + $0xf8] sm:$0xff]
      %v3959 = vld [vmem:[#allocation4 + $0x100] sm:$0xff]
      %v3960 = vld [vmem:[#allocation4 + $0x108] sm:$0xff]
      %v3961 = vld [vmem:[#allocation4 + $0x110] sm:$0xff]
      %v3962 = vld [vmem:[#allocation4 + $0x118] sm:$0xff]
      %v3963 = vld [vmem:[#allocation5] sm:$0x1]
      %3965 = vset.pattern.permute.xlu0 0
      %3966 = vperm.xlu0 %3965, %v3963
      %v3967 = vpop.permute.xlu0 %3966
      %v3969 = vlaneseq
      %v3970 = vshrl.u32 %v3969, 7
      %v3971 = vsub.s32 0, %v3970
      %v3972 = vrot.slane %v3967, %v3971
      %v3974 = vlaneseq
      %v3975 = vshrl.u32 %v3974, 7
      %v3976 = vsub.s32 0, %v3975
      %v3977 = vrot.slane %v3926, %v3976
      %v3978 = vlaneseq
      %v3979 = vshrl.u32 %v3978, 7
      %v3980 = vsub.s32 1, %v3979
      %v3981 = vrot.slane %v3926, %v3980
      %v3983 = vsel %vm709, %v3981, 0
      %3985 = vmatprep.subr.mxu0 %v3928
      %3986 = vmatpush1.msra.mxu0 %v3927
      %3987 = vmatprep.subr.mxu0 %v3930
      %3988 = vmatpush1.msra.mxu0 %v3929
      %3989 = vmatprep.subr.mxu0 %v3932
      %3990 = vmatpush1.msra.mxu0 %v3931
      %3991 = vmatprep.subr.mxu0 %v3934
      %3992 = vmatpush1.msra.mxu0 %v3933
      %3993 = vmatprep.subr.mxu0 %v3936
      %3994 = vmatpush1.msra.mxu0 %v3935
      %3995 = vmatprep.subr.mxu0 %v3938
      %3996 = vmatpush1.msra.mxu0 %v3937
      %3997 = vmatprep.subr.mxu0 %v3940
      %3998 = vmatpush1.msra.mxu0 %v3939
      %3999 = vmatprep.subr.mxu0 %v3942
      %4000 = vmatpush1.msra.mxu0 %v3941
      %4001 = vmatprep.subr.mxu0 %v3944
      %4002 = vmatpush1.msra.mxu0 %v3943
      %4003 = vmatprep.subr.mxu0 %v3946
      %4004 = vmatpush1.msra.mxu0 %v3945
      %4005 = vmatprep.subr.mxu0 %v3948
      %4006 = vmatpush1.msra.mxu0 %v3947
      %4007 = vmatprep.subr.mxu0 %v3950
      %4008 = vmatpush1.msra.mxu0 %v3949
      %4009 = vmatprep.subr.mxu0 %v3952
      %4010 = vmatpush1.msra.mxu0 %v3951
      %4011 = vmatprep.subr.mxu0 %v3954
      %4012 = vmatpush1.msra.mxu0 %v3953
      %4013 = vmatprep.subr.mxu0 %v3956
      %4014 = vmatpush1.msra.mxu0 %v3955
      %4015 = vmatprep.subr.mxu0 %v3958
      %4016 = vmatpush1.msra.mxu0 %v3957
      %4017 = vmatprep.subr.mxu0 %v3960
      %4018 = vmatpush1.msra.mxu0 %v3959
      %4019 = vmatprep.subr.mxu0 %v3962
      %4020 = vmatpush1.msra.mxu0 %v3961
      %4021 = vmatprep.subr.mxu0 0.0
      %4022 = vmatpush1.msra.mxu0 0.0
      %4023 = vmatprep.subr.mxu0 0.0
      %4024 = vmatpush1.msra.mxu0 0.0
      %4025 = vmatprep.subr.mxu0 0.0
      %4026 = vmatpush1.msra.mxu0 0.0
      %4027 = vmatprep.subr.mxu0 0.0
      %4028 = vmatpush1.msra.mxu0 0.0
      %4029 = vmatprep.subr.mxu0 0.0
      %4030 = vmatpush1.msra.mxu0 0.0
      %4031 = vmatprep.subr.mxu0 0.0
      %4032 = vmatpush1.msra.mxu0 0.0
      %4033 = vmatprep.subr.mxu0 0.0
      %4034 = vmatpush1.msra.mxu0 0.0
      %4035 = vmatprep.subr.mxu0 0.0
      %4036 = vmatpush1.msra.mxu0 0.0
      %4037 = vmatprep.subr.mxu0 0.0
      %4038 = vmatpush1.msra.mxu0 0.0
      %4039 = vmatprep.subr.mxu0 0.0
      %4040 = vmatpush1.msra.mxu0 0.0
      %4041 = vmatprep.subr.mxu0 0.0
      %4042 = vmatpush1.msra.mxu0 0.0
      %4043 = vmatprep.subr.mxu0 0.0
      %4044 = vmatpush1.msra.mxu0 0.0
      %4045 = vmatprep.subr.mxu0 0.0
      %4046 = vmatpush1.msra.mxu0 0.0
      %4047 = vmatprep.subr.mxu0 0.0
      %4048 = vmatpush1.msra.mxu0 0.0
      %4049 = vmatprep.mubr.f32.mxu0 %v3983
      %4050 = vmatmul.mubr.f32.gmra.mrb[0].mxu0 %v3977
      %v4051 = vpop.f32.mrb[0].mxu0
      %v4052 = vadd.f32 %v3972, %v4051
      %v4053 = vpop.f32.mrb[0].mxu0
      %v4054 = vadd.f32 %v3972, %v4053
      %4055 = vdwg.mxu0
      %v4056 = vsub.f32 0.0, %v4052
      %v4057 = vsub.f32 0.0, %v4054
      %v4058 = vmul.f32 %v4056, 1.442695
      %v4059 = vpow.pop %v4058
      %v4060 = vmul.f32 %v4057, 1.442695
      %v4061 = vpow.pop %v4060
      %v4062 = vadd.f32 %v4059, 1.0
      %v4063 = vadd.f32 %v4061, 1.0
      %v4064 = vrcp.pop %v4062
      %v4065 = vmul.f32 1.0, %v4064
      %v4066 = vrcp.pop %v4063
      %v4067 = vmul.f32 1.0, %v4066
      %v4070 = vcombine.low %v4065, %v4067
      %v4072 = vunpack.c.l.s4 1966171168
      %v4073 = vunpack.c.0.s8 %v4072
      %v4074 = vlaneseq
      %v4075 = vshrl.u32 %v4074, 7
      %v4076 = vsub.s32 %v4073, %v4075
      %v4077 = vrot.slane %v4070, %v4076
      %v4079 = vunpack.c.l.s4 1966171168
      %v4080 = vunpack.c.0.s8 %v4079
      %v4081 = vlaneseq
      %v4082 = vshrl.u32 %v4081, 7
      %v4083 = vsub.s32 %v4080, %v4082
      %v4084 = vrot.slane %v4077, %v4083
      %4086 = vst.msk [vmem:[%s599] sm:$0x3] %vm651, %v4084
      %p4087 = scmp.lt.s32.totalorder %s32, 1
      %s4088 = scalar_select %p4087, %s32, 1
      %s4089 = smul.addr %s4088, 2
      %s4090 = scalar_lea.vmem %s19, %s4089
      // Predicated region
      $region97: #{forward.1} parent=95 // pred_check
        %p4091 = pneg %p454
      $region98: #{forward.1} parent=95 // pred_check_branch
        %4093 = sbr.rel (%p4091) target = $region100
      $region99: #{forward.1} parent=95 // pred_region
        _
      $region100: #{forward.1} parent=95 // pred_fallthru
        _
    $region96: #{forward.1} parent=5 // pred_fallthru
      _
    %p4094 = scmp.le.s32.totalorder 2, %s27
    // Predicated region
    $region101: #{forward.1} parent=5 // pred_check
      %p4095 = pneg %p4094
    $region102: #{forward.1} parent=5 // pred_check_branch
      %4097 = sbr.rel (%p4095) target = $region104
    $region103: #{forward.1} parent=5 // pred_region
      %s4098 = ssub.s32 %s27, 2
      // Predicated region
      $region105: #{forward.1} parent=103 // pred_check
        %p4099 = pneg %p460
      $region106: #{forward.1} parent=103 // pred_check_branch
        %4101 = sbr.rel (%p4099) target = $region108
      $region107: #{forward.1} parent=103 // pred_region
        %p4102 = scmp.lt.s32.totalorder %s33, 1
        %s4103 = scalar_select %p4102, %s33, 1
        %s4104 = smul.addr %s4103, 2
        %s4105 = scalar_lea.vmem %s19, %s4104
      $region108: #{forward.1} parent=103 // pred_fallthru
        _
    $region104: #{forward.1} parent=5 // pred_fallthru
      _
  $region6: #{forward.1} parent=0 // loop_footer
    %s31 = sadd.s32 1, %s27
  $region7: #{forward.1} parent=0 // loop_footer_branch
    %26 = sbr.rel target = $region3
  $region8: #{forward.1} parent=0 // loop_exit
    _

</llo_original>
